<compile_context>
chip_gen: v7x
topology: tpu7x:2x2x1
jax: 0.10.0
libtpu: 0.0.40
codegen_flags: <defaults>
</compile_context>

<pallas_src>
import functools

import jax
import jax.numpy as jnp
from jax import lax
from jax.experimental import pallas as pl
from jax.experimental.pallas import tpu as pltpu  # noqa: F401  (TPU backend assumed)


# ------------------------------ configuration -------------------------------

class Config:
    vocab_size = 64
    vocab_pad = 128          # pad LM-head output to a lane-dense 128
    n_positions = 16
    d_model = 32
    n_head = 2
    n_layer = 2


# ------------------------------ kernel helpers ------------------------------

def _gelu_new(x):
    # GPT-2 "gelu_new" (tanh approximation), matching HF transformers.
    return 0.5 * x * (1.0 + jnp.tanh(
        0.7978845608028654 * (x + 0.044715 * x * x * x)))


def _layer_norm(x, g, b, eps=1e-5):
    mu = jnp.mean(x, axis=-1, keepdims=True)
    xc = x - mu
    var = jnp.mean(xc * xc, axis=-1, keepdims=True)
    return xc * lax.rsqrt(var + eps) * g + b


# ------------------------------ fused kernel --------------------------------

def _gpt2_fused_kernel(x_ref, mask_ref, wte_ref,
                       ln1_g_ref, ln1_b_ref, w_qkv_ref, b_qkv_ref,
                       w_proj_ref, b_proj_ref, ln2_g_ref, ln2_b_ref,
                       w_fc_ref, b_fc_ref, w_out_ref, b_out_ref,
                       ln_f_g_ref, ln_f_b_ref, logits_ref,
                       *, n_layer, n_head):
    B, T = mask_ref.shape
    M, D = x_ref.shape
    hd = D // n_head
    scale = 1.0 / float(hd) ** 0.5

    x = x_ref[...].astype(jnp.float32)                        # [M, D] residual stream

    # ---- causal + left-padding additive bias, computed once, shared by all
    #      layers and heads ----
    row = lax.broadcasted_iota(jnp.int32, (B, T, T), 1)
    col = lax.broadcasted_iota(jnp.int32, (B, T, T), 2)
    pad_ok = lax.broadcast_in_dim(mask_ref[...] > 0.5, (B, T, T), (0, 2))
    keep = jnp.logical_and(row >= col, pad_ok)                # [B, T, T]
    bias = jnp.where(keep, 0.0, -1e9).astype(jnp.float32)     # additive mask

    for l in range(n_layer):
        # ----------------- attention block (LN fused with QKV matmul) -------
        h = _layer_norm(x, ln1_g_ref[pl.ds(l, 1), :], ln1_b_ref[pl.ds(l, 1), :])
        qkv = jnp.dot(h, w_qkv_ref[l], preferred_element_type=jnp.float32)
        qkv = qkv + b_qkv_ref[pl.ds(l, 1), :]                 # [M, 3D]

        head_outs = []
        for hi in range(n_head):
            q = qkv[:, hi * hd:(hi + 1) * hd].reshape(B, T, hd)
            k = qkv[:, D + hi * hd:D + (hi + 1) * hd].reshape(B, T, hd)
            v = qkv[:, 2 * D + hi * hd:2 * D + (hi + 1) * hd].reshape(B, T, hd)
            # contract last dims directly -> no in-kernel transpose of k
            s = jnp.einsum('bqd,bkd->bqk', q, k,
                           preferred_element_type=jnp.float32) * scale
            s = s + bias
            m = jnp.max(s, axis=-1, keepdims=True)
            p = jnp.exp(s - m)
            denom = jnp.sum(p, axis=-1, keepdims=True)
            p = p * pl.reciprocal(denom, approx=True)          # EUP, ~free
            o = jnp.einsum('bqk,bkd->bqd', p, v,
                           preferred_element_type=jnp.float32)
            head_outs.append(o.reshape(M, hd))
        attn = jnp.concatenate(head_outs, axis=-1)             # [M, D]

        proj = jnp.dot(attn, w_proj_ref[l], preferred_element_type=jnp.float32)
        proj = proj + b_proj_ref[pl.ds(l, 1), :]
        x = x + proj

        # ----------------- MLP block (LN fused with FC matmul) --------------
        h2 = _layer_norm(x, ln2_g_ref[pl.ds(l, 1), :], ln2_b_ref[pl.ds(l, 1), :])
        m1 = jnp.dot(h2, w_fc_ref[l], preferred_element_type=jnp.float32)
        m1 = _gelu_new(m1 + b_fc_ref[pl.ds(l, 1), :])
        m2 = jnp.dot(m1, w_out_ref[l], preferred_element_type=jnp.float32)
        m2 = m2 + b_out_ref[pl.ds(l, 1), :]
        x = x + m2

    # ----------------- final LN + tied LM head -------------------------------
    xf = _layer_norm(x, ln_f_g_ref[...], ln_f_b_ref[...])
    # contract on wte's hidden axis: no materialized transpose, no zero bias;
    # Vpad=128 columns -> lane-dense unmasked store of the only kernel output.
    logits = lax.dot_general(xf, wte_ref[...], (((1,), (1,)), ((), ())),
                             preferred_element_type=jnp.float32)  # [M, Vpad]
    logits_ref[...] = logits.astype(logits_ref.dtype)


# ------------------------------ model glue -----------------------------------

def init_params(key, cfg):
    def nrm(k, shape, scale=0.02):
        return scale * jax.random.normal(k, shape, dtype=jnp.float32)

    D, L = cfg.d_model, cfg.n_layer
    keys = jax.random.split(key, 2 + 4 * L)

    wte = nrm(keys[0], (cfg.vocab_size, D))
    # pad vocab rows to 128 so the LM-head output store is lane-dense;
    # padded rows are zero -> their (discarded) logits are exactly 0.
    wte_pad = jnp.zeros((cfg.vocab_pad, D), jnp.float32).at[:cfg.vocab_size, :].set(wte)

    w_qkv, w_proj, w_fc, w_out = [], [], [], []
    for i in range(L):
        lk = keys[2 + 4 * i: 2 + 4 * (i + 1)]
        w_qkv.append(nrm(lk[0], (D, 3 * D)))
        w_proj.append(nrm(lk[1], (D, D)))
        w_fc.append(nrm(lk[2], (D, 4 * D)))
        w_out.append(nrm(lk[3], (4 * D, D)))

    return {
        "wte": wte_pad,
        "wpe": nrm(keys[1], (cfg.n_positions, D)),
        "ln1_g": jnp.ones((L, D), jnp.float32), "ln1_b": jnp.zeros((L, D), jnp.float32),
        "ln2_g": jnp.ones((L, D), jnp.float32), "ln2_b": jnp.zeros((L, D), jnp.float32),
        "ln_f_g": jnp.ones((1, D), jnp.float32), "ln_f_b": jnp.zeros((1, D), jnp.float32),
        "w_qkv": jnp.stack(w_qkv), "b_qkv": jnp.zeros((L, 3 * D), jnp.float32),
        "w_proj": jnp.stack(w_proj), "b_proj": jnp.zeros((L, D), jnp.float32),
        "w_fc": jnp.stack(w_fc), "b_fc": jnp.zeros((L, 4 * D), jnp.float32),
        "w_out": jnp.stack(w_out), "b_out": jnp.zeros((L, D), jnp.float32),
    }


def gpt2_forward(params, input_ids, attention_mask, cfg):
    """Returns logits [B, T, vocab] — the `.logits` of the wrapped GPT-2 model."""
    B, T = input_ids.shape
    D = cfg.d_model
    M = B * T

    # Token-embedding gather + position add stays in XLA (single gather, glue).
    x = (params["wte"][input_ids]
         + params["wpe"][:T][None, :, :]).reshape(M, D).astype(jnp.float32)
    mask_f = attention_mask.astype(jnp.float32)

    kernel = functools.partial(_gpt2_fused_kernel,
                               n_layer=cfg.n_layer, n_head=cfg.n_head)

    logits_pad = pl.pallas_call(
        kernel,
        out_shape=jax.ShapeDtypeStruct((M, cfg.vocab_pad), jnp.float32),
    )(x, mask_f, params["wte"],
      params["ln1_g"], params["ln1_b"], params["w_qkv"], params["b_qkv"],
      params["w_proj"], params["b_proj"], params["ln2_g"], params["ln2_b"],
      params["w_fc"], params["b_fc"], params["w_out"], params["b_out"],
      params["ln_f_g"], params["ln_f_b"])

    return logits_pad.reshape(B, T, cfg.vocab_pad)[:, :, :cfg.vocab_size]


# ---------------------------------- main -------------------------------------

if __name__ == "__main__":
    cfg = Config()
    B, T = 2, 8

    key = jax.random.PRNGKey(0)
    pkey, ikey = jax.random.split(key)
    params = init_params(pkey, cfg)

    input_ids = jax.random.randint(ikey, (B, T), 0, cfg.vocab_size, dtype=jnp.int32)
    # left-padded attention mask (PADDING = 'left' in the reference script)
    attention_mask = jnp.concatenate(
        [jnp.zeros((B, 2), jnp.int32), jnp.ones((B, T - 2), jnp.int32)], axis=1)

    fwd = jax.jit(functools.partial(gpt2_forward, cfg=cfg))
    logits = fwd(params, input_ids, attention_mask)
    jax.block_until_ready(logits)

    assert logits.shape == (B, T, cfg.vocab_size)
    assert bool(jnp.all(jnp.isfinite(logits)))
    print("KERNEL_OK")
</pallas_src>

<mosaic_0001>
module attributes {stable_mosaic.version = 11 : i64} {
  func.func @_gpt2_fused_kernel(%arg0: memref<16x32xf32, #tpu.memory_space<vmem>>, %arg1: memref<2x8xf32, #tpu.memory_space<vmem>>, %arg2: memref<128x32xf32, #tpu.memory_space<vmem>>, %arg3: memref<2x32xf32, #tpu.memory_space<vmem>>, %arg4: memref<2x32xf32, #tpu.memory_space<vmem>>, %arg5: memref<2x32x96xf32, #tpu.memory_space<vmem>>, %arg6: memref<2x96xf32, #tpu.memory_space<vmem>>, %arg7: memref<2x32x32xf32, #tpu.memory_space<vmem>>, %arg8: memref<2x32xf32, #tpu.memory_space<vmem>>, %arg9: memref<2x32xf32, #tpu.memory_space<vmem>>, %arg10: memref<2x32xf32, #tpu.memory_space<vmem>>, %arg11: memref<2x32x128xf32, #tpu.memory_space<vmem>>, %arg12: memref<2x128xf32, #tpu.memory_space<vmem>>, %arg13: memref<2x128x32xf32, #tpu.memory_space<vmem>>, %arg14: memref<2x32xf32, #tpu.memory_space<vmem>>, %arg15: memref<1x32xf32, #tpu.memory_space<vmem>>, %arg16: memref<1x32xf32, #tpu.memory_space<vmem>>, %arg17: memref<16x128xf32, #tpu.memory_space<vmem>>) attributes {dimension_semantics = [], scalar_prefetch = 0 : i64, scratch_operands = 0 : i64, tpu.core_type = #tpu.core_type<tc>} {
    %c0 = arith.constant 0 : index
    %c0_0 = arith.constant 0 : index
    %0 = vector.load %arg0[%c0, %c0_0] : memref<16x32xf32, #tpu.memory_space<vmem>>, vector<16x32xf32>
    %1 = tpu.iota {dimensions = array<i32: 1>} : vector<2x8x8xi32>
    %2 = tpu.iota {dimensions = array<i32: 2>} : vector<2x8x8xi32>
    %c0_1 = arith.constant 0 : index
    %c0_2 = arith.constant 0 : index
    %3 = vector.load %arg1[%c0_1, %c0_2] : memref<2x8xf32, #tpu.memory_space<vmem>>, vector<2x8xf32>
    %cst = arith.constant 5.000000e-01 : f32
    %4 = vector.broadcast %cst : f32 to vector<2x8xf32>
    %5 = arith.cmpf ogt, %3, %4 : vector<2x8xf32>
    %6 = vector.shape_cast %5 : vector<2x8xi1> to vector<2x1x8xi1>
    %7 = vector.broadcast %6 : vector<2x1x8xi1> to vector<2x8x8xi1>
    %8 = arith.cmpi sge, %1, %2 : vector<2x8x8xi32>
    %9 = arith.andi %8, %7 : vector<2x8x8xi1>
    %cst_3 = arith.constant 0.000000e+00 : f32
    %cst_4 = arith.constant -1.000000e+09 : f32
    %10 = vector.broadcast %cst_3 : f32 to vector<2x8x8xf32>
    %11 = vector.broadcast %cst_4 : f32 to vector<2x8x8xf32>
    %12 = arith.select %9, %10, %11 : vector<2x8x8xi1>, vector<2x8x8xf32>
    %c0_5 = arith.constant 0 : index
    %c0_6 = arith.constant 0 : index
    %13 = vector.load %arg3[%c0_5, %c0_6] : memref<2x32xf32, #tpu.memory_space<vmem>>, vector<1x32xf32>
    %c0_7 = arith.constant 0 : index
    %c0_8 = arith.constant 0 : index
    %14 = vector.load %arg4[%c0_7, %c0_8] : memref<2x32xf32, #tpu.memory_space<vmem>>, vector<1x32xf32>
    %cst_9 = arith.constant dense<0.000000e+00> : vector<16xf32>
    %15 = vector.multi_reduction <add>, %0, %cst_9 [1] : vector<16x32xf32> to vector<16xf32>
    %16 = vector.shape_cast %15 : vector<16xf32> to vector<16x1xf32>
    %cst_10 = arith.constant 3.200000e+01 : f32
    %17 = vector.broadcast %cst_10 : f32 to vector<16x1xf32>
    %18 = arith.divf %16, %17 : vector<16x1xf32>
    %19 = vector.broadcast %18 : vector<16x1xf32> to vector<16x32xf32>
    %20 = arith.subf %0, %19 : vector<16x32xf32>
    %21 = arith.mulf %20, %20 : vector<16x32xf32>
    %cst_11 = arith.constant dense<0.000000e+00> : vector<16xf32>
    %22 = vector.multi_reduction <add>, %21, %cst_11 [1] : vector<16x32xf32> to vector<16xf32>
    %23 = vector.shape_cast %22 : vector<16xf32> to vector<16x1xf32>
    %cst_12 = arith.constant 3.200000e+01 : f32
    %24 = vector.broadcast %cst_12 : f32 to vector<16x1xf32>
    %25 = arith.divf %23, %24 : vector<16x1xf32>
    %cst_13 = arith.constant 9.99999974E-6 : f32
    %26 = vector.broadcast %cst_13 : f32 to vector<16x1xf32>
    %27 = arith.addf %25, %26 : vector<16x1xf32>
    %28 = math.rsqrt %27 : vector<16x1xf32>
    %29 = vector.broadcast %28 : vector<16x1xf32> to vector<16x32xf32>
    %30 = arith.mulf %20, %29 : vector<16x32xf32>
    %31 = vector.broadcast %13 : vector<1x32xf32> to vector<16x32xf32>
    %32 = arith.mulf %30, %31 : vector<16x32xf32>
    %33 = vector.broadcast %14 : vector<1x32xf32> to vector<16x32xf32>
    %34 = arith.addf %32, %33 : vector<16x32xf32>
    %c0_14 = arith.constant 0 : index
    %c0_15 = arith.constant 0 : index
    %c0_16 = arith.constant 0 : index
    %35 = vector.load %arg5[%c0_14, %c0_15, %c0_16] : memref<2x32x96xf32, #tpu.memory_space<vmem>>, vector<1x32x96xf32>
    %36 = vector.shape_cast %35 : vector<1x32x96xf32> to vector<32x96xf32>
    %cst_17 = arith.constant dense<0.000000e+00> : vector<16x96xf32>
    %37 = tpu.matmul %34, %36, %cst_17 {dimension_numbers = #tpu.dot_dimension_numbers<[1], [0], [0], [1], [0, 0, 1, 1], [], []>} : vector<16x32xf32>, vector<32x96xf32>, vector<16x96xf32> -> vector<16x96xf32>
    %c0_18 = arith.constant 0 : index
    %c0_19 = arith.constant 0 : index
    %38 = vector.load %arg6[%c0_18, %c0_19] : memref<2x96xf32, #tpu.memory_space<vmem>>, vector<1x96xf32>
    %39 = vector.broadcast %38 : vector<1x96xf32> to vector<16x96xf32>
    %40 = arith.addf %37, %39 : vector<16x96xf32>
    %41 = vector.extract_strided_slice %40 {offsets = [0, 0], sizes = [16, 16], strides = [1, 1]} : vector<16x96xf32> to vector<16x16xf32>
    %42 = vector.shape_cast %41 : vector<16x16xf32> to vector<2x8x16xf32>
    %43 = vector.extract_strided_slice %40 {offsets = [0, 32], sizes = [16, 16], strides = [1, 1]} : vector<16x96xf32> to vector<16x16xf32>
    %44 = vector.shape_cast %43 : vector<16x16xf32> to vector<2x8x16xf32>
    %45 = vector.extract_strided_slice %40 {offsets = [0, 64], sizes = [16, 16], strides = [1, 1]} : vector<16x96xf32> to vector<16x16xf32>
    %46 = vector.shape_cast %45 : vector<16x16xf32> to vector<2x8x16xf32>
    "tpu.trace_start"() <{level = 10 : i32, message = "bqd,bkd->bqk"}> : () -> ()
    %cst_20 = arith.constant dense<0.000000e+00> : vector<2x8x8xf32>
    %47 = tpu.matmul %42, %44, %cst_20 {dimension_numbers = #tpu.dot_dimension_numbers<[2], [2], [1], [1], [0, 0, 0, 1, 1, 1], [0], [0]>} : vector<2x8x16xf32>, vector<2x8x16xf32>, vector<2x8x8xf32> -> vector<2x8x8xf32>
    "tpu.trace_stop"() : () -> ()
    %cst_21 = arith.constant 2.500000e-01 : f32
    %48 = vector.broadcast %cst_21 : f32 to vector<2x8x8xf32>
    %49 = arith.mulf %47, %48 : vector<2x8x8xf32>
    %50 = arith.addf %49, %12 : vector<2x8x8xf32>
    %cst_22 = arith.constant dense<0xFF800000> : vector<2x8xf32>
    %51 = vector.multi_reduction <maximumf>, %50, %cst_22 [2] : vector<2x8x8xf32> to vector<2x8xf32>
    %52 = vector.shape_cast %51 : vector<2x8xf32> to vector<2x8x1xf32>
    %53 = vector.broadcast %52 : vector<2x8x1xf32> to vector<2x8x8xf32>
    %54 = arith.subf %50, %53 : vector<2x8x8xf32>
    %55 = math.exp %54 : vector<2x8x8xf32>
    %cst_23 = arith.constant dense<0.000000e+00> : vector<2x8xf32>
    %56 = vector.multi_reduction <add>, %55, %cst_23 [2] : vector<2x8x8xf32> to vector<2x8xf32>
    %57 = vector.shape_cast %56 : vector<2x8xf32> to vector<2x8x1xf32>
    %58 = tpu.reciprocal %57 {approx = true} : vector<2x8x1xf32> -> vector<2x8x1xf32>
    %59 = vector.broadcast %58 : vector<2x8x1xf32> to vector<2x8x8xf32>
    %60 = arith.mulf %55, %59 : vector<2x8x8xf32>
    "tpu.trace_start"() <{level = 10 : i32, message = "bqk,bkd->bqd"}> : () -> ()
    %cst_24 = arith.constant dense<0.000000e+00> : vector<2x8x16xf32>
    %61 = tpu.matmul %60, %46, %cst_24 {dimension_numbers = #tpu.dot_dimension_numbers<[2], [1], [1], [2], [0, 0, 0, 1, 1, 2], [0], [0]>} : vector<2x8x8xf32>, vector<2x8x16xf32>, vector<2x8x16xf32> -> vector<2x8x16xf32>
    "tpu.trace_stop"() : () -> ()
    %62 = vector.shape_cast %61 : vector<2x8x16xf32> to vector<16x16xf32>
    %63 = vector.extract_strided_slice %40 {offsets = [0, 16], sizes = [16, 16], strides = [1, 1]} : vector<16x96xf32> to vector<16x16xf32>
    %64 = vector.shape_cast %63 : vector<16x16xf32> to vector<2x8x16xf32>
    %65 = vector.extract_strided_slice %40 {offsets = [0, 48], sizes = [16, 16], strides = [1, 1]} : vector<16x96xf32> to vector<16x16xf32>
    %66 = vector.shape_cast %65 : vector<16x16xf32> to vector<2x8x16xf32>
    %67 = vector.extract_strided_slice %40 {offsets = [0, 80], sizes = [16, 16], strides = [1, 1]} : vector<16x96xf32> to vector<16x16xf32>
    %68 = vector.shape_cast %67 : vector<16x16xf32> to vector<2x8x16xf32>
    "tpu.trace_start"() <{level = 10 : i32, message = "bqd,bkd->bqk"}> : () -> ()
    %cst_25 = arith.constant dense<0.000000e+00> : vector<2x8x8xf32>
    %69 = tpu.matmul %64, %66, %cst_25 {dimension_numbers = #tpu.dot_dimension_numbers<[2], [2], [1], [1], [0, 0, 0, 1, 1, 1], [0], [0]>} : vector<2x8x16xf32>, vector<2x8x16xf32>, vector<2x8x8xf32> -> vector<2x8x8xf32>
    "tpu.trace_stop"() : () -> ()
    %cst_26 = arith.constant 2.500000e-01 : f32
    %70 = vector.broadcast %cst_26 : f32 to vector<2x8x8xf32>
    %71 = arith.mulf %69, %70 : vector<2x8x8xf32>
    %72 = arith.addf %71, %12 : vector<2x8x8xf32>
    %cst_27 = arith.constant dense<0xFF800000> : vector<2x8xf32>
    %73 = vector.multi_reduction <maximumf>, %72, %cst_27 [2] : vector<2x8x8xf32> to vector<2x8xf32>
    %74 = vector.shape_cast %73 : vector<2x8xf32> to vector<2x8x1xf32>
    %75 = vector.broadcast %74 : vector<2x8x1xf32> to vector<2x8x8xf32>
    %76 = arith.subf %72, %75 : vector<2x8x8xf32>
    %77 = math.exp %76 : vector<2x8x8xf32>
    %cst_28 = arith.constant dense<0.000000e+00> : vector<2x8xf32>
    %78 = vector.multi_reduction <add>, %77, %cst_28 [2] : vector<2x8x8xf32> to vector<2x8xf32>
    %79 = vector.shape_cast %78 : vector<2x8xf32> to vector<2x8x1xf32>
    %80 = tpu.reciprocal %79 {approx = true} : vector<2x8x1xf32> -> vector<2x8x1xf32>
    %81 = vector.broadcast %80 : vector<2x8x1xf32> to vector<2x8x8xf32>
    %82 = arith.mulf %77, %81 : vector<2x8x8xf32>
    "tpu.trace_start"() <{level = 10 : i32, message = "bqk,bkd->bqd"}> : () -> ()
    %cst_29 = arith.constant dense<0.000000e+00> : vector<2x8x16xf32>
    %83 = tpu.matmul %82, %68, %cst_29 {dimension_numbers = #tpu.dot_dimension_numbers<[2], [1], [1], [2], [0, 0, 0, 1, 1, 2], [0], [0]>} : vector<2x8x8xf32>, vector<2x8x16xf32>, vector<2x8x16xf32> -> vector<2x8x16xf32>
    "tpu.trace_stop"() : () -> ()
    %84 = vector.shape_cast %83 : vector<2x8x16xf32> to vector<16x16xf32>
    %85 = tpu.concatenate %62, %84 in 1 : vector<16x16xf32>, vector<16x16xf32> -> vector<16x32xf32>
    %c0_30 = arith.constant 0 : index
    %c0_31 = arith.constant 0 : index
    %c0_32 = arith.constant 0 : index
    %86 = vector.load %arg7[%c0_30, %c0_31, %c0_32] : memref<2x32x32xf32, #tpu.memory_space<vmem>>, vector<1x32x32xf32>
    %87 = vector.shape_cast %86 : vector<1x32x32xf32> to vector<32x32xf32>
    %cst_33 = arith.constant dense<0.000000e+00> : vector<16x32xf32>
    %88 = tpu.matmul %85, %87, %cst_33 {dimension_numbers = #tpu.dot_dimension_numbers<[1], [0], [0], [1], [0, 0, 1, 1], [], []>} : vector<16x32xf32>, vector<32x32xf32>, vector<16x32xf32> -> vector<16x32xf32>
    %c0_34 = arith.constant 0 : index
    %c0_35 = arith.constant 0 : index
    %89 = vector.load %arg8[%c0_34, %c0_35] : memref<2x32xf32, #tpu.memory_space<vmem>>, vector<1x32xf32>
    %90 = vector.broadcast %89 : vector<1x32xf32> to vector<16x32xf32>
    %91 = arith.addf %88, %90 : vector<16x32xf32>
    %92 = arith.addf %0, %91 : vector<16x32xf32>
    %c0_36 = arith.constant 0 : index
    %c0_37 = arith.constant 0 : index
    %93 = vector.load %arg9[%c0_36, %c0_37] : memref<2x32xf32, #tpu.memory_space<vmem>>, vector<1x32xf32>
    %c0_38 = arith.constant 0 : index
    %c0_39 = arith.constant 0 : index
    %94 = vector.load %arg10[%c0_38, %c0_39] : memref<2x32xf32, #tpu.memory_space<vmem>>, vector<1x32xf32>
    %cst_40 = arith.constant dense<0.000000e+00> : vector<16xf32>
    %95 = vector.multi_reduction <add>, %92, %cst_40 [1] : vector<16x32xf32> to vector<16xf32>
    %96 = vector.shape_cast %95 : vector<16xf32> to vector<16x1xf32>
    %cst_41 = arith.constant 3.200000e+01 : f32
    %97 = vector.broadcast %cst_41 : f32 to vector<16x1xf32>
    %98 = arith.divf %96, %97 : vector<16x1xf32>
    %99 = vector.broadcast %98 : vector<16x1xf32> to vector<16x32xf32>
    %100 = arith.subf %92, %99 : vector<16x32xf32>
    %101 = arith.mulf %100, %100 : vector<16x32xf32>
    %cst_42 = arith.constant dense<0.000000e+00> : vector<16xf32>
    %102 = vector.multi_reduction <add>, %101, %cst_42 [1] : vector<16x32xf32> to vector<16xf32>
    %103 = vector.shape_cast %102 : vector<16xf32> to vector<16x1xf32>
    %cst_43 = arith.constant 3.200000e+01 : f32
    %104 = vector.broadcast %cst_43 : f32 to vector<16x1xf32>
    %105 = arith.divf %103, %104 : vector<16x1xf32>
    %cst_44 = arith.constant 9.99999974E-6 : f32
    %106 = vector.broadcast %cst_44 : f32 to vector<16x1xf32>
    %107 = arith.addf %105, %106 : vector<16x1xf32>
    %108 = math.rsqrt %107 : vector<16x1xf32>
    %109 = vector.broadcast %108 : vector<16x1xf32> to vector<16x32xf32>
    %110 = arith.mulf %100, %109 : vector<16x32xf32>
    %111 = vector.broadcast %93 : vector<1x32xf32> to vector<16x32xf32>
    %112 = arith.mulf %110, %111 : vector<16x32xf32>
    %113 = vector.broadcast %94 : vector<1x32xf32> to vector<16x32xf32>
    %114 = arith.addf %112, %113 : vector<16x32xf32>
    %c0_45 = arith.constant 0 : index
    %c0_46 = arith.constant 0 : index
    %c0_47 = arith.constant 0 : index
    %115 = vector.load %arg11[%c0_45, %c0_46, %c0_47] : memref<2x32x128xf32, #tpu.memory_space<vmem>>, vector<1x32x128xf32>
    %116 = vector.shape_cast %115 : vector<1x32x128xf32> to vector<32x128xf32>
    %cst_48 = arith.constant dense<0.000000e+00> : vector<16x128xf32>
    %117 = tpu.matmul %114, %116, %cst_48 {dimension_numbers = #tpu.dot_dimension_numbers<[1], [0], [0], [1], [0, 0, 1, 1], [], []>} : vector<16x32xf32>, vector<32x128xf32>, vector<16x128xf32> -> vector<16x128xf32>
    %c0_49 = arith.constant 0 : index
    %c0_50 = arith.constant 0 : index
    %118 = vector.load %arg12[%c0_49, %c0_50] : memref<2x128xf32, #tpu.memory_space<vmem>>, vector<1x128xf32>
    %119 = vector.broadcast %118 : vector<1x128xf32> to vector<16x128xf32>
    %120 = arith.addf %117, %119 : vector<16x128xf32>
    %cst_51 = arith.constant 5.000000e-01 : f32
    %121 = vector.broadcast %cst_51 : f32 to vector<16x128xf32>
    %122 = arith.mulf %121, %120 : vector<16x128xf32>
    %cst_52 = arith.constant 4.471500e-02 : f32
    %123 = vector.broadcast %cst_52 : f32 to vector<16x128xf32>
    %124 = arith.mulf %123, %120 : vector<16x128xf32>
    %125 = arith.mulf %124, %120 : vector<16x128xf32>
    %126 = arith.mulf %125, %120 : vector<16x128xf32>
    %127 = arith.addf %120, %126 : vector<16x128xf32>
    %cst_53 = arith.constant 0.797884583 : f32
    %128 = vector.broadcast %cst_53 : f32 to vector<16x128xf32>
    %129 = arith.mulf %128, %127 : vector<16x128xf32>
    %130 = math.tanh %129 : vector<16x128xf32>
    %cst_54 = arith.constant 1.000000e+00 : f32
    %131 = vector.broadcast %cst_54 : f32 to vector<16x128xf32>
    %132 = arith.addf %131, %130 : vector<16x128xf32>
    %133 = arith.mulf %122, %132 : vector<16x128xf32>
    %c0_55 = arith.constant 0 : index
    %c0_56 = arith.constant 0 : index
    %c0_57 = arith.constant 0 : index
    %134 = vector.load %arg13[%c0_55, %c0_56, %c0_57] : memref<2x128x32xf32, #tpu.memory_space<vmem>>, vector<1x128x32xf32>
    %135 = vector.shape_cast %134 : vector<1x128x32xf32> to vector<128x32xf32>
    %cst_58 = arith.constant dense<0.000000e+00> : vector<16x32xf32>
    %136 = tpu.matmul %133, %135, %cst_58 {dimension_numbers = #tpu.dot_dimension_numbers<[1], [0], [0], [1], [0, 0, 1, 1], [], []>} : vector<16x128xf32>, vector<128x32xf32>, vector<16x32xf32> -> vector<16x32xf32>
    %c0_59 = arith.constant 0 : index
    %c0_60 = arith.constant 0 : index
    %137 = vector.load %arg14[%c0_59, %c0_60] : memref<2x32xf32, #tpu.memory_space<vmem>>, vector<1x32xf32>
    %138 = vector.broadcast %137 : vector<1x32xf32> to vector<16x32xf32>
    %139 = arith.addf %136, %138 : vector<16x32xf32>
    %140 = arith.addf %92, %139 : vector<16x32xf32>
    %c1 = arith.constant 1 : index
    %c0_61 = arith.constant 0 : index
    %141 = vector.load %arg3[%c1, %c0_61] : memref<2x32xf32, #tpu.memory_space<vmem>>, vector<1x32xf32>
    %c1_62 = arith.constant 1 : index
    %c0_63 = arith.constant 0 : index
    %142 = vector.load %arg4[%c1_62, %c0_63] : memref<2x32xf32, #tpu.memory_space<vmem>>, vector<1x32xf32>
    %cst_64 = arith.constant dense<0.000000e+00> : vector<16xf32>
    %143 = vector.multi_reduction <add>, %140, %cst_64 [1] : vector<16x32xf32> to vector<16xf32>
    %144 = vector.shape_cast %143 : vector<16xf32> to vector<16x1xf32>
    %cst_65 = arith.constant 3.200000e+01 : f32
    %145 = vector.broadcast %cst_65 : f32 to vector<16x1xf32>
    %146 = arith.divf %144, %145 : vector<16x1xf32>
    %147 = vector.broadcast %146 : vector<16x1xf32> to vector<16x32xf32>
    %148 = arith.subf %140, %147 : vector<16x32xf32>
    %149 = arith.mulf %148, %148 : vector<16x32xf32>
    %cst_66 = arith.constant dense<0.000000e+00> : vector<16xf32>
    %150 = vector.multi_reduction <add>, %149, %cst_66 [1] : vector<16x32xf32> to vector<16xf32>
    %151 = vector.shape_cast %150 : vector<16xf32> to vector<16x1xf32>
    %cst_67 = arith.constant 3.200000e+01 : f32
    %152 = vector.broadcast %cst_67 : f32 to vector<16x1xf32>
    %153 = arith.divf %151, %152 : vector<16x1xf32>
    %cst_68 = arith.constant 9.99999974E-6 : f32
    %154 = vector.broadcast %cst_68 : f32 to vector<16x1xf32>
    %155 = arith.addf %153, %154 : vector<16x1xf32>
    %156 = math.rsqrt %155 : vector<16x1xf32>
    %157 = vector.broadcast %156 : vector<16x1xf32> to vector<16x32xf32>
    %158 = arith.mulf %148, %157 : vector<16x32xf32>
    %159 = vector.broadcast %141 : vector<1x32xf32> to vector<16x32xf32>
    %160 = arith.mulf %158, %159 : vector<16x32xf32>
    %161 = vector.broadcast %142 : vector<1x32xf32> to vector<16x32xf32>
    %162 = arith.addf %160, %161 : vector<16x32xf32>
    %c1_69 = arith.constant 1 : index
    %c0_70 = arith.constant 0 : index
    %c0_71 = arith.constant 0 : index
    %163 = vector.load %arg5[%c1_69, %c0_70, %c0_71] : memref<2x32x96xf32, #tpu.memory_space<vmem>>, vector<1x32x96xf32>
    %164 = vector.shape_cast %163 : vector<1x32x96xf32> to vector<32x96xf32>
    %cst_72 = arith.constant dense<0.000000e+00> : vector<16x96xf32>
    %165 = tpu.matmul %162, %164, %cst_72 {dimension_numbers = #tpu.dot_dimension_numbers<[1], [0], [0], [1], [0, 0, 1, 1], [], []>} : vector<16x32xf32>, vector<32x96xf32>, vector<16x96xf32> -> vector<16x96xf32>
    %c1_73 = arith.constant 1 : index
    %c0_74 = arith.constant 0 : index
    %166 = vector.load %arg6[%c1_73, %c0_74] : memref<2x96xf32, #tpu.memory_space<vmem>>, vector<1x96xf32>
    %167 = vector.broadcast %166 : vector<1x96xf32> to vector<16x96xf32>
    %168 = arith.addf %165, %167 : vector<16x96xf32>
    %169 = vector.extract_strided_slice %168 {offsets = [0, 0], sizes = [16, 16], strides = [1, 1]} : vector<16x96xf32> to vector<16x16xf32>
    %170 = vector.shape_cast %169 : vector<16x16xf32> to vector<2x8x16xf32>
    %171 = vector.extract_strided_slice %168 {offsets = [0, 32], sizes = [16, 16], strides = [1, 1]} : vector<16x96xf32> to vector<16x16xf32>
    %172 = vector.shape_cast %171 : vector<16x16xf32> to vector<2x8x16xf32>
    %173 = vector.extract_strided_slice %168 {offsets = [0, 64], sizes = [16, 16], strides = [1, 1]} : vector<16x96xf32> to vector<16x16xf32>
    %174 = vector.shape_cast %173 : vector<16x16xf32> to vector<2x8x16xf32>
    "tpu.trace_start"() <{level = 10 : i32, message = "bqd,bkd->bqk"}> : () -> ()
    %cst_75 = arith.constant dense<0.000000e+00> : vector<2x8x8xf32>
    %175 = tpu.matmul %170, %172, %cst_75 {dimension_numbers = #tpu.dot_dimension_numbers<[2], [2], [1], [1], [0, 0, 0, 1, 1, 1], [0], [0]>} : vector<2x8x16xf32>, vector<2x8x16xf32>, vector<2x8x8xf32> -> vector<2x8x8xf32>
    "tpu.trace_stop"() : () -> ()
    %cst_76 = arith.constant 2.500000e-01 : f32
    %176 = vector.broadcast %cst_76 : f32 to vector<2x8x8xf32>
    %177 = arith.mulf %175, %176 : vector<2x8x8xf32>
    %178 = arith.addf %177, %12 : vector<2x8x8xf32>
    %cst_77 = arith.constant dense<0xFF800000> : vector<2x8xf32>
    %179 = vector.multi_reduction <maximumf>, %178, %cst_77 [2] : vector<2x8x8xf32> to vector<2x8xf32>
    %180 = vector.shape_cast %179 : vector<2x8xf32> to vector<2x8x1xf32>
    %181 = vector.broadcast %180 : vector<2x8x1xf32> to vector<2x8x8xf32>
    %182 = arith.subf %178, %181 : vector<2x8x8xf32>
    %183 = math.exp %182 : vector<2x8x8xf32>
    %cst_78 = arith.constant dense<0.000000e+00> : vector<2x8xf32>
    %184 = vector.multi_reduction <add>, %183, %cst_78 [2] : vector<2x8x8xf32> to vector<2x8xf32>
    %185 = vector.shape_cast %184 : vector<2x8xf32> to vector<2x8x1xf32>
    %186 = tpu.reciprocal %185 {approx = true} : vector<2x8x1xf32> -> vector<2x8x1xf32>
    %187 = vector.broadcast %186 : vector<2x8x1xf32> to vector<2x8x8xf32>
    %188 = arith.mulf %183, %187 : vector<2x8x8xf32>
    "tpu.trace_start"() <{level = 10 : i32, message = "bqk,bkd->bqd"}> : () -> ()
    %cst_79 = arith.constant dense<0.000000e+00> : vector<2x8x16xf32>
    %189 = tpu.matmul %188, %174, %cst_79 {dimension_numbers = #tpu.dot_dimension_numbers<[2], [1], [1], [2], [0, 0, 0, 1, 1, 2], [0], [0]>} : vector<2x8x8xf32>, vector<2x8x16xf32>, vector<2x8x16xf32> -> vector<2x8x16xf32>
    "tpu.trace_stop"() : () -> ()
    %190 = vector.shape_cast %189 : vector<2x8x16xf32> to vector<16x16xf32>
    %191 = vector.extract_strided_slice %168 {offsets = [0, 16], sizes = [16, 16], strides = [1, 1]} : vector<16x96xf32> to vector<16x16xf32>
    %192 = vector.shape_cast %191 : vector<16x16xf32> to vector<2x8x16xf32>
    %193 = vector.extract_strided_slice %168 {offsets = [0, 48], sizes = [16, 16], strides = [1, 1]} : vector<16x96xf32> to vector<16x16xf32>
    %194 = vector.shape_cast %193 : vector<16x16xf32> to vector<2x8x16xf32>
    %195 = vector.extract_strided_slice %168 {offsets = [0, 80], sizes = [16, 16], strides = [1, 1]} : vector<16x96xf32> to vector<16x16xf32>
    %196 = vector.shape_cast %195 : vector<16x16xf32> to vector<2x8x16xf32>
    "tpu.trace_start"() <{level = 10 : i32, message = "bqd,bkd->bqk"}> : () -> ()
    %cst_80 = arith.constant dense<0.000000e+00> : vector<2x8x8xf32>
    %197 = tpu.matmul %192, %194, %cst_80 {dimension_numbers = #tpu.dot_dimension_numbers<[2], [2], [1], [1], [0, 0, 0, 1, 1, 1], [0], [0]>} : vector<2x8x16xf32>, vector<2x8x16xf32>, vector<2x8x8xf32> -> vector<2x8x8xf32>
    "tpu.trace_stop"() : () -> ()
    %cst_81 = arith.constant 2.500000e-01 : f32
    %198 = vector.broadcast %cst_81 : f32 to vector<2x8x8xf32>
    %199 = arith.mulf %197, %198 : vector<2x8x8xf32>
    %200 = arith.addf %199, %12 : vector<2x8x8xf32>
    %cst_82 = arith.constant dense<0xFF800000> : vector<2x8xf32>
    %201 = vector.multi_reduction <maximumf>, %200, %cst_82 [2] : vector<2x8x8xf32> to vector<2x8xf32>
    %202 = vector.shape_cast %201 : vector<2x8xf32> to vector<2x8x1xf32>
    %203 = vector.broadcast %202 : vector<2x8x1xf32> to vector<2x8x8xf32>
    %204 = arith.subf %200, %203 : vector<2x8x8xf32>
    %205 = math.exp %204 : vector<2x8x8xf32>
    %cst_83 = arith.constant dense<0.000000e+00> : vector<2x8xf32>
    %206 = vector.multi_reduction <add>, %205, %cst_83 [2] : vector<2x8x8xf32> to vector<2x8xf32>
    %207 = vector.shape_cast %206 : vector<2x8xf32> to vector<2x8x1xf32>
    %208 = tpu.reciprocal %207 {approx = true} : vector<2x8x1xf32> -> vector<2x8x1xf32>
    %209 = vector.broadcast %208 : vector<2x8x1xf32> to vector<2x8x8xf32>
    %210 = arith.mulf %205, %209 : vector<2x8x8xf32>
    "tpu.trace_start"() <{level = 10 : i32, message = "bqk,bkd->bqd"}> : () -> ()
    %cst_84 = arith.constant dense<0.000000e+00> : vector<2x8x16xf32>
    %211 = tpu.matmul %210, %196, %cst_84 {dimension_numbers = #tpu.dot_dimension_numbers<[2], [1], [1], [2], [0, 0, 0, 1, 1, 2], [0], [0]>} : vector<2x8x8xf32>, vector<2x8x16xf32>, vector<2x8x16xf32> -> vector<2x8x16xf32>
    "tpu.trace_stop"() : () -> ()
    %212 = vector.shape_cast %211 : vector<2x8x16xf32> to vector<16x16xf32>
    %213 = tpu.concatenate %190, %212 in 1 : vector<16x16xf32>, vector<16x16xf32> -> vector<16x32xf32>
    %c1_85 = arith.constant 1 : index
    %c0_86 = arith.constant 0 : index
    %c0_87 = arith.constant 0 : index
    %214 = vector.load %arg7[%c1_85, %c0_86, %c0_87] : memref<2x32x32xf32, #tpu.memory_space<vmem>>, vector<1x32x32xf32>
    %215 = vector.shape_cast %214 : vector<1x32x32xf32> to vector<32x32xf32>
    %cst_88 = arith.constant dense<0.000000e+00> : vector<16x32xf32>
    %216 = tpu.matmul %213, %215, %cst_88 {dimension_numbers = #tpu.dot_dimension_numbers<[1], [0], [0], [1], [0, 0, 1, 1], [], []>} : vector<16x32xf32>, vector<32x32xf32>, vector<16x32xf32> -> vector<16x32xf32>
    %c1_89 = arith.constant 1 : index
    %c0_90 = arith.constant 0 : index
    %217 = vector.load %arg8[%c1_89, %c0_90] : memref<2x32xf32, #tpu.memory_space<vmem>>, vector<1x32xf32>
    %218 = vector.broadcast %217 : vector<1x32xf32> to vector<16x32xf32>
    %219 = arith.addf %216, %218 : vector<16x32xf32>
    %220 = arith.addf %140, %219 : vector<16x32xf32>
    %c1_91 = arith.constant 1 : index
    %c0_92 = arith.constant 0 : index
    %221 = vector.load %arg9[%c1_91, %c0_92] : memref<2x32xf32, #tpu.memory_space<vmem>>, vector<1x32xf32>
    %c1_93 = arith.constant 1 : index
    %c0_94 = arith.constant 0 : index
    %222 = vector.load %arg10[%c1_93, %c0_94] : memref<2x32xf32, #tpu.memory_space<vmem>>, vector<1x32xf32>
    %cst_95 = arith.constant dense<0.000000e+00> : vector<16xf32>
    %223 = vector.multi_reduction <add>, %220, %cst_95 [1] : vector<16x32xf32> to vector<16xf32>
    %224 = vector.shape_cast %223 : vector<16xf32> to vector<16x1xf32>
    %cst_96 = arith.constant 3.200000e+01 : f32
    %225 = vector.broadcast %cst_96 : f32 to vector<16x1xf32>
    %226 = arith.divf %224, %225 : vector<16x1xf32>
    %227 = vector.broadcast %226 : vector<16x1xf32> to vector<16x32xf32>
    %228 = arith.subf %220, %227 : vector<16x32xf32>
    %229 = arith.mulf %228, %228 : vector<16x32xf32>
    %cst_97 = arith.constant dense<0.000000e+00> : vector<16xf32>
    %230 = vector.multi_reduction <add>, %229, %cst_97 [1] : vector<16x32xf32> to vector<16xf32>
    %231 = vector.shape_cast %230 : vector<16xf32> to vector<16x1xf32>
    %cst_98 = arith.constant 3.200000e+01 : f32
    %232 = vector.broadcast %cst_98 : f32 to vector<16x1xf32>
    %233 = arith.divf %231, %232 : vector<16x1xf32>
    %cst_99 = arith.constant 9.99999974E-6 : f32
    %234 = vector.broadcast %cst_99 : f32 to vector<16x1xf32>
    %235 = arith.addf %233, %234 : vector<16x1xf32>
    %236 = math.rsqrt %235 : vector<16x1xf32>
    %237 = vector.broadcast %236 : vector<16x1xf32> to vector<16x32xf32>
    %238 = arith.mulf %228, %237 : vector<16x32xf32>
    %239 = vector.broadcast %221 : vector<1x32xf32> to vector<16x32xf32>
    %240 = arith.mulf %238, %239 : vector<16x32xf32>
    %241 = vector.broadcast %222 : vector<1x32xf32> to vector<16x32xf32>
    %242 = arith.addf %240, %241 : vector<16x32xf32>
    %c1_100 = arith.constant 1 : index
    %c0_101 = arith.constant 0 : index
    %c0_102 = arith.constant 0 : index
    %243 = vector.load %arg11[%c1_100, %c0_101, %c0_102] : memref<2x32x128xf32, #tpu.memory_space<vmem>>, vector<1x32x128xf32>
    %244 = vector.shape_cast %243 : vector<1x32x128xf32> to vector<32x128xf32>
    %cst_103 = arith.constant dense<0.000000e+00> : vector<16x128xf32>
    %245 = tpu.matmul %242, %244, %cst_103 {dimension_numbers = #tpu.dot_dimension_numbers<[1], [0], [0], [1], [0, 0, 1, 1], [], []>} : vector<16x32xf32>, vector<32x128xf32>, vector<16x128xf32> -> vector<16x128xf32>
    %c1_104 = arith.constant 1 : index
    %c0_105 = arith.constant 0 : index
    %246 = vector.load %arg12[%c1_104, %c0_105] : memref<2x128xf32, #tpu.memory_space<vmem>>, vector<1x128xf32>
    %247 = vector.broadcast %246 : vector<1x128xf32> to vector<16x128xf32>
    %248 = arith.addf %245, %247 : vector<16x128xf32>
    %cst_106 = arith.constant 5.000000e-01 : f32
    %249 = vector.broadcast %cst_106 : f32 to vector<16x128xf32>
    %250 = arith.mulf %249, %248 : vector<16x128xf32>
    %cst_107 = arith.constant 4.471500e-02 : f32
    %251 = vector.broadcast %cst_107 : f32 to vector<16x128xf32>
    %252 = arith.mulf %251, %248 : vector<16x128xf32>
    %253 = arith.mulf %252, %248 : vector<16x128xf32>
    %254 = arith.mulf %253, %248 : vector<16x128xf32>
    %255 = arith.addf %248, %254 : vector<16x128xf32>
    %cst_108 = arith.constant 0.797884583 : f32
    %256 = vector.broadcast %cst_108 : f32 to vector<16x128xf32>
    %257 = arith.mulf %256, %255 : vector<16x128xf32>
    %258 = math.tanh %257 : vector<16x128xf32>
    %cst_109 = arith.constant 1.000000e+00 : f32
    %259 = vector.broadcast %cst_109 : f32 to vector<16x128xf32>
    %260 = arith.addf %259, %258 : vector<16x128xf32>
    %261 = arith.mulf %250, %260 : vector<16x128xf32>
    %c1_110 = arith.constant 1 : index
    %c0_111 = arith.constant 0 : index
    %c0_112 = arith.constant 0 : index
    %262 = vector.load %arg13[%c1_110, %c0_111, %c0_112] : memref<2x128x32xf32, #tpu.memory_space<vmem>>, vector<1x128x32xf32>
    %263 = vector.shape_cast %262 : vector<1x128x32xf32> to vector<128x32xf32>
    %cst_113 = arith.constant dense<0.000000e+00> : vector<16x32xf32>
    %264 = tpu.matmul %261, %263, %cst_113 {dimension_numbers = #tpu.dot_dimension_numbers<[1], [0], [0], [1], [0, 0, 1, 1], [], []>} : vector<16x128xf32>, vector<128x32xf32>, vector<16x32xf32> -> vector<16x32xf32>
    %c1_114 = arith.constant 1 : index
    %c0_115 = arith.constant 0 : index
    %265 = vector.load %arg14[%c1_114, %c0_115] : memref<2x32xf32, #tpu.memory_space<vmem>>, vector<1x32xf32>
    %266 = vector.broadcast %265 : vector<1x32xf32> to vector<16x32xf32>
    %267 = arith.addf %264, %266 : vector<16x32xf32>
    %268 = arith.addf %220, %267 : vector<16x32xf32>
    %c0_116 = arith.constant 0 : index
    %c0_117 = arith.constant 0 : index
    %269 = vector.load %arg15[%c0_116, %c0_117] : memref<1x32xf32, #tpu.memory_space<vmem>>, vector<1x32xf32>
    %c0_118 = arith.constant 0 : index
    %c0_119 = arith.constant 0 : index
    %270 = vector.load %arg16[%c0_118, %c0_119] : memref<1x32xf32, #tpu.memory_space<vmem>>, vector<1x32xf32>
    %cst_120 = arith.constant dense<0.000000e+00> : vector<16xf32>
    %271 = vector.multi_reduction <add>, %268, %cst_120 [1] : vector<16x32xf32> to vector<16xf32>
    %272 = vector.shape_cast %271 : vector<16xf32> to vector<16x1xf32>
    %cst_121 = arith.constant 3.200000e+01 : f32
    %273 = vector.broadcast %cst_121 : f32 to vector<16x1xf32>
    %274 = arith.divf %272, %273 : vector<16x1xf32>
    %275 = vector.broadcast %274 : vector<16x1xf32> to vector<16x32xf32>
    %276 = arith.subf %268, %275 : vector<16x32xf32>
    %277 = arith.mulf %276, %276 : vector<16x32xf32>
    %cst_122 = arith.constant dense<0.000000e+00> : vector<16xf32>
    %278 = vector.multi_reduction <add>, %277, %cst_122 [1] : vector<16x32xf32> to vector<16xf32>
    %279 = vector.shape_cast %278 : vector<16xf32> to vector<16x1xf32>
    %cst_123 = arith.constant 3.200000e+01 : f32
    %280 = vector.broadcast %cst_123 : f32 to vector<16x1xf32>
    %281 = arith.divf %279, %280 : vector<16x1xf32>
    %cst_124 = arith.constant 9.99999974E-6 : f32
    %282 = vector.broadcast %cst_124 : f32 to vector<16x1xf32>
    %283 = arith.addf %281, %282 : vector<16x1xf32>
    %284 = math.rsqrt %283 : vector<16x1xf32>
    %285 = vector.broadcast %284 : vector<16x1xf32> to vector<16x32xf32>
    %286 = arith.mulf %276, %285 : vector<16x32xf32>
    %287 = vector.broadcast %269 : vector<1x32xf32> to vector<16x32xf32>
    %288 = arith.mulf %286, %287 : vector<16x32xf32>
    %289 = vector.broadcast %270 : vector<1x32xf32> to vector<16x32xf32>
    %290 = arith.addf %288, %289 : vector<16x32xf32>
    %c0_125 = arith.constant 0 : index
    %c0_126 = arith.constant 0 : index
    %291 = vector.load %arg2[%c0_125, %c0_126] : memref<128x32xf32, #tpu.memory_space<vmem>>, vector<128x32xf32>
    %cst_127 = arith.constant dense<0.000000e+00> : vector<16x128xf32>
    %292 = tpu.matmul %290, %291, %cst_127 {dimension_numbers = #tpu.dot_dimension_numbers<[1], [1], [0], [0], [0, 0, 1, 0], [], []>} : vector<16x32xf32>, vector<128x32xf32>, vector<16x128xf32> -> vector<16x128xf32>
    %c0_128 = arith.constant 0 : index
    %c0_129 = arith.constant 0 : index
    %293 = vector.load %arg17[%c0_128, %c0_129] : memref<16x128xf32, #tpu.memory_space<vmem>>, vector<16x128xf32>
    tpu.vector_store %arg17[%c0_128, %c0_129], %292 {strides = array<i32>} : memref<16x128xf32, #tpu.memory_space<vmem>>, vector<16x128xf32>,
    return
  }
}

</mosaic_0001>

<llo_original>
// kernel: gpt2_forward.1
$region0: #{gpt2_forward.1}
  #allocation0 [shape = 'u32[]', space=smem, size = 0x4, offset = 0x4, fixed_abs, tag = 'smem constant byte address 0x4 - core index']
  #allocation1 [shape = 'u32[144,128]{1,0:T(1,128)}', space=vmem, size = 0x12000, scoped, tag = 'internal scratch']
  %s0 = inlined_call_operand.vmem [shape: f32[16,32], index: 0, kind: input, shape index: {}]
  %s1 = inlined_call_operand.vmem [shape: f32[2,8], index: 1, kind: input, shape index: {}]
  %s2 = inlined_call_operand.vmem [shape: f32[128,32], index: 2, kind: input, shape index: {}]
  %s3 = inlined_call_operand.vmem [shape: f32[2,32], index: 3, kind: input, shape index: {}]
  %s4 = inlined_call_operand.vmem [shape: f32[2,32], index: 4, kind: input, shape index: {}]
  %s5 = inlined_call_operand.vmem [shape: f32[2,32,96], index: 5, kind: input, shape index: {}]
  %s6 = inlined_call_operand.vmem [shape: f32[2,96], index: 6, kind: input, shape index: {}]
  %s7 = inlined_call_operand.vmem [shape: f32[2,32,32], index: 7, kind: input, shape index: {}]
  %s8 = inlined_call_operand.vmem [shape: f32[2,32], index: 8, kind: input, shape index: {}]
  %s9 = inlined_call_operand.vmem [shape: f32[2,32], index: 9, kind: input, shape index: {}]
  %s10 = inlined_call_operand.vmem [shape: f32[2,32], index: 10, kind: input, shape index: {}]
  %s11 = inlined_call_operand.vmem [shape: f32[2,32,128], index: 11, kind: input, shape index: {}]
  %s12 = inlined_call_operand.vmem [shape: f32[2,128], index: 12, kind: input, shape index: {}]
  %s13 = inlined_call_operand.vmem [shape: f32[2,128,32], index: 13, kind: input, shape index: {}]
  %s14 = inlined_call_operand.vmem [shape: f32[2,32], index: 14, kind: input, shape index: {}]
  %s15 = inlined_call_operand.vmem [shape: f32[1,32], index: 15, kind: input, shape index: {}]
  %s16 = inlined_call_operand.vmem [shape: f32[1,32], index: 16, kind: input, shape index: {}]
  %s17 = inlined_call_operand.hbm [shape: f32[16,128], index: 17, kind: output, shape index: {}]
  %s18 = sld [smem:[#allocation0]]
  $region78: #{gpt2_forward.1} parent=0
    _
  %s20 = ssub.s32 1, %s18
  %s21 = scalar_select 0, %s20, %s18
  $region1: #{gpt2_forward.1} parent=0
    #allocation2 [shape = 'u8[8192]{0}', space=vmem, size = 0x2000, scoped, tag = 'output window, operand 0, single buffered']
    #allocation3 [shape = 's32[1]{0}', space=sflag, size = 0x4, scoped, tag = 'scoped memory for gpt2_forward.1']
    %22 = vsyncpa [#allocation3], 0
    // Predicated region
    $region2: #{gpt2_forward.1} parent=1 // pred_check
      _
    $region3: #{gpt2_forward.1} parent=1 // pred_check_branch
      %24 = sbr.rel (0) target = $region5
    $region4: #{gpt2_forward.1} parent=1 // pred_region
      _
    $region5: #{gpt2_forward.1} parent=1 // pred_fallthru
      _
    // Predicated region
    $region6: #{gpt2_forward.1} parent=1 // pred_check
      _
    $region7: #{gpt2_forward.1} parent=1 // pred_check_branch
      %26 = sbr.rel (0) target = $region9
    $region8: #{gpt2_forward.1} parent=1 // pred_region
      _
    $region9: #{gpt2_forward.1} parent=1 // pred_fallthru
      _
    // Predicated region
    $region10: #{gpt2_forward.1} parent=1 // pred_check
      _
    $region11: #{gpt2_forward.1} parent=1 // pred_check_branch
      %28 = sbr.rel (0) target = $region13
    $region12: #{gpt2_forward.1} parent=1 // pred_region
      _
    $region13: #{gpt2_forward.1} parent=1 // pred_fallthru
      _
    // Predicated region
    $region14: #{gpt2_forward.1} parent=1 // pred_check
      _
    $region15: #{gpt2_forward.1} parent=1 // pred_check_branch
      %30 = sbr.rel (0) target = $region17
    $region16: #{gpt2_forward.1} parent=1 // pred_region
      _
    $region17: #{gpt2_forward.1} parent=1 // pred_fallthru
      _
    // Predicated region
    $region18: #{gpt2_forward.1} parent=1 // pred_check
      _
    $region19: #{gpt2_forward.1} parent=1 // pred_check_branch
      %32 = sbr.rel (0) target = $region21
    $region20: #{gpt2_forward.1} parent=1 // pred_region
      _
    $region21: #{gpt2_forward.1} parent=1 // pred_fallthru
      _
    // Predicated region
    $region22: #{gpt2_forward.1} parent=1 // pred_check
      _
    $region23: #{gpt2_forward.1} parent=1 // pred_check_branch
      %34 = sbr.rel (0) target = $region25
    $region24: #{gpt2_forward.1} parent=1 // pred_region
      _
    $region25: #{gpt2_forward.1} parent=1 // pred_fallthru
      _
    // Predicated region
    $region26: #{gpt2_forward.1} parent=1 // pred_check
      _
    $region27: #{gpt2_forward.1} parent=1 // pred_check_branch
      %36 = sbr.rel (0) target = $region29
    $region28: #{gpt2_forward.1} parent=1 // pred_region
      _
    $region29: #{gpt2_forward.1} parent=1 // pred_fallthru
      _
    // Predicated region
    $region30: #{gpt2_forward.1} parent=1 // pred_check
      _
    $region31: #{gpt2_forward.1} parent=1 // pred_check_branch
      %38 = sbr.rel (0) target = $region33
    $region32: #{gpt2_forward.1} parent=1 // pred_region
      _
    $region33: #{gpt2_forward.1} parent=1 // pred_fallthru
      _
    // Predicated region
    $region34: #{gpt2_forward.1} parent=1 // pred_check
      _
    $region35: #{gpt2_forward.1} parent=1 // pred_check_branch
      %40 = sbr.rel (0) target = $region37
    $region36: #{gpt2_forward.1} parent=1 // pred_region
      _
    $region37: #{gpt2_forward.1} parent=1 // pred_fallthru
      _
    // Predicated region
    $region38: #{gpt2_forward.1} parent=1 // pred_check
      _
    $region39: #{gpt2_forward.1} parent=1 // pred_check_branch
      %42 = sbr.rel (0) target = $region41
    $region40: #{gpt2_forward.1} parent=1 // pred_region
      _
    $region41: #{gpt2_forward.1} parent=1 // pred_fallthru
      _
    // Predicated region
    $region42: #{gpt2_forward.1} parent=1 // pred_check
      _
    $region43: #{gpt2_forward.1} parent=1 // pred_check_branch
      %44 = sbr.rel (0) target = $region45
    $region44: #{gpt2_forward.1} parent=1 // pred_region
      _
    $region45: #{gpt2_forward.1} parent=1 // pred_fallthru
      _
    // Predicated region
    $region46: #{gpt2_forward.1} parent=1 // pred_check
      _
    $region47: #{gpt2_forward.1} parent=1 // pred_check_branch
      %46 = sbr.rel (0) target = $region49
    $region48: #{gpt2_forward.1} parent=1 // pred_region
      _
    $region49: #{gpt2_forward.1} parent=1 // pred_fallthru
      _
    // Predicated region
    $region50: #{gpt2_forward.1} parent=1 // pred_check
      _
    $region51: #{gpt2_forward.1} parent=1 // pred_check_branch
      %48 = sbr.rel (0) target = $region53
    $region52: #{gpt2_forward.1} parent=1 // pred_region
      _
    $region53: #{gpt2_forward.1} parent=1 // pred_fallthru
      _
    // Predicated region
    $region54: #{gpt2_forward.1} parent=1 // pred_check
      _
    $region55: #{gpt2_forward.1} parent=1 // pred_check_branch
      %50 = sbr.rel (0) target = $region57
    $region56: #{gpt2_forward.1} parent=1 // pred_region
      _
    $region57: #{gpt2_forward.1} parent=1 // pred_fallthru
      _
    // Predicated region
    $region58: #{gpt2_forward.1} parent=1 // pred_check
      _
    $region59: #{gpt2_forward.1} parent=1 // pred_check_branch
      %52 = sbr.rel (0) target = $region61
    $region60: #{gpt2_forward.1} parent=1 // pred_region
      _
    $region61: #{gpt2_forward.1} parent=1 // pred_fallthru
      _
    // Predicated region
    $region62: #{gpt2_forward.1} parent=1 // pred_check
      _
    $region63: #{gpt2_forward.1} parent=1 // pred_check_branch
      %54 = sbr.rel (0) target = $region65
    $region64: #{gpt2_forward.1} parent=1 // pred_region
      _
    $region65: #{gpt2_forward.1} parent=1 // pred_fallthru
      _
    // Predicated region
    $region66: #{gpt2_forward.1} parent=1 // pred_check
      _
    $region67: #{gpt2_forward.1} parent=1 // pred_check_branch
      %56 = sbr.rel (0) target = $region69
    $region68: #{gpt2_forward.1} parent=1 // pred_region
      _
    $region69: #{gpt2_forward.1} parent=1 // pred_fallthru
      _
    %v57 = vld [vmem:[%s0] sm:$0xff]
    %v58 = vld [vmem:[%s0 + $0x8] sm:$0xff]
    %v59 = vlaneseq
    %v60 = vshrl.u32 %v59, 7
    %v61 = vlaneseq
    %v62 = vand.u32 %v61, 127
    %v63 = vld [vmem:[%s1] sm:$0x3]
    %vm64 = vcmp.gt.f32.partialorder %v63, 0.5
    %v65 = vsel %vm64, 1, 0
    %v67 = vunpack.c.l.s4 1966171168
    %v68 = vunpack.c.0.s8 %v67
    %v69 = vlaneseq
    %v70 = vshrl.u32 %v69, 7
    %v71 = vsub.s32 %v68, %v70
    %v72 = vrot.slane %v65, %v71
    %v73 = vcombine.high %v72, %v72
    %v75 = vunpack.c.l.s4 1966171168
    %v76 = vunpack.c.0.s8 %v75
    %v77 = vlaneseq
    %v78 = vshrl.u32 %v77, 7
    %v79 = vsub.s32 %v76, %v78
    %v80 = vrot.slane %v72, %v79
    %v82 = vunpack.c.l.s4 1966171168
    %v83 = vunpack.c.0.s8 %v82
    %v84 = vlaneseq
    %v85 = vshrl.u32 %v84, 7
    %v86 = vsub.s32 %v83, %v85
    %v87 = vrot.slane %v73, %v86
    %vm88 = vcmp.ne.s32.totalorder %v80, 0
    %vm89 = vcmp.ne.s32.totalorder %v87, 0
    %v90 = vsel %vm88, 1, 0
    %v91 = vsel %vm89, 1, 0
    %v92 = vlaneseq
    %v93 = vshrl.u32 %v92, 7
    %v94 = vsub.s32 0, %v93
    %v95 = vrot.slane %v90, %v94
    %v96 = vlaneseq
    %v97 = vshrl.u32 %v96, 7
    %v98 = vsub.s32 0, %v97
    %v99 = vrot.slane %v91, %v98
    %vm100 = vcmp.eq.s32.totalorder %v95, 1
    %vm101 = vcmp.eq.s32.totalorder %v99, 1
    %vm102 = vcmp.ge.s32.totalorder %v60, %v62
    %vm103 = vmand %vm102, %vm100
    %vm104 = vmand %vm102, %vm101
    %v105 = vsel %vm103, 0.0, -1e+09
    %v106 = vsel %vm104, 0.0, -1e+09
    %v107 = vld [vmem:[%s3] sm:$0x1]
    %v108 = vld [vmem:[%s4] sm:$0x1]
    %vm109 = vcmask 261120
    %v110 = vsel %vm109, %v57, 0.0
    %111 = vadd.xlane.f32.xlu0 %v110
    %v112 = vpop.xlane.xlu0 %111
    %v113 = vsel %vm109, %v58, 0.0
    %114 = vadd.xlane.f32.xlu0 %v113
    %v115 = vpop.xlane.xlu0 %114
    %v116 = vrcp.pop 32.0
    %v117 = vmul.f32 %v112, %v116
    %v118 = vmul.f32 %v115, %v116
    %v119 = vsub.f32 %v57, %v117
    %v120 = vsub.f32 %v58, %v118
    %v121 = vmul.f32 %v119, %v119
    %v122 = vmul.f32 %v120, %v120
    %v123 = vsel %vm109, %v121, 0.0
    %124 = vadd.xlane.f32.xlu0 %v123
    %v125 = vpop.xlane.xlu0 %124
    %v126 = vsel %vm109, %v122, 0.0
    %127 = vadd.xlane.f32.xlu0 %v126
    %v128 = vpop.xlane.xlu0 %127
    %v129 = vmul.f32 %v125, %v116
    %v130 = vmul.f32 %v128, %v116
    %v131 = vadd.f32 %v129, 1e-05
    %v132 = vadd.f32 %v130, 1e-05
    %v133 = vrsqrt.pop %v131
    %v134 = vrsqrt.pop %v132
    %v135 = vmul.f32 %v119, %v133
    %v136 = vmul.f32 %v120, %v134
    %v137 = vlaneseq
    %v138 = vshrl.u32 %v137, 7
    %v139 = vsub.s32 0, %v138
    %v140 = vrot.slane %v107, %v139
    %v141 = vmul.f32 %v135, %v140
    %v142 = vmul.f32 %v136, %v140
    %v143 = vlaneseq
    %v144 = vshrl.u32 %v143, 7
    %v145 = vsub.s32 0, %v144
    %v146 = vrot.slane %v108, %v145
    %v147 = vadd.f32 %v141, %v146
    %v148 = vadd.f32 %v142, %v146
    %v149 = vld [vmem:[%s5] sm:$0xff]
    %v150 = vld [vmem:[%s5 + $0x8] sm:$0xff]
    %v151 = vld [vmem:[%s5 + $0x10] sm:$0xff]
    %v152 = vld [vmem:[%s5 + $0x18] sm:$0xff]
    %v153 = vld [vmem:[%s6] sm:$0x1]
    %v154 = vlaneseq
    %v155 = vshrl.u32 %v154, 7
    %v156 = vsub.s32 0, %v155
    %v157 = vrot.slane %v153, %v156
    %v159 = vsel %vm109, %v147, 0
    %v162 = vsel %vm109, %v148, 0
    %164 = vmatprep.subr.mxu0 0.0
    %165 = vmatpush1.msra.mxu0 %v149
    %166 = vmatprep.subr.mxu0 0.0
    %167 = vmatpush1.msra.mxu0 %v150
    %168 = vmatprep.subr.mxu0 0.0
    %169 = vmatpush1.msra.mxu0 %v151
    %170 = vmatprep.subr.mxu0 0.0
    %171 = vmatpush1.msra.mxu0 %v152
    %172 = vmatprep.subr.mxu0 0.0
    %173 = vmatpush1.msra.mxu0 0.0
    %174 = vmatprep.subr.mxu0 0.0
    %175 = vmatpush1.msra.mxu0 0.0
    %176 = vmatprep.subr.mxu0 0.0
    %177 = vmatpush1.msra.mxu0 0.0
    %178 = vmatprep.subr.mxu0 0.0
    %179 = vmatpush1.msra.mxu0 0.0
    %180 = vmatprep.subr.mxu0 0.0
    %181 = vmatpush1.msra.mxu0 0.0
    %182 = vmatprep.subr.mxu0 0.0
    %183 = vmatpush1.msra.mxu0 0.0
    %184 = vmatprep.subr.mxu0 0.0
    %185 = vmatpush1.msra.mxu0 0.0
    %186 = vmatprep.subr.mxu0 0.0
    %187 = vmatpush1.msra.mxu0 0.0
    %188 = vmatprep.subr.mxu0 0.0
    %189 = vmatpush1.msra.mxu0 0.0
    %190 = vmatprep.subr.mxu0 0.0
    %191 = vmatpush1.msra.mxu0 0.0
    %192 = vmatprep.subr.mxu0 0.0
    %193 = vmatpush1.msra.mxu0 0.0
    %194 = vmatprep.subr.mxu0 0.0
    %195 = vmatpush1.msra.mxu0 0.0
    %196 = vmatprep.subr.mxu0 0.0
    %197 = vmatpush1.msra.mxu0 0.0
    %198 = vmatprep.subr.mxu0 0.0
    %199 = vmatpush1.msra.mxu0 0.0
    %200 = vmatprep.subr.mxu0 0.0
    %201 = vmatpush1.msra.mxu0 0.0
    %202 = vmatprep.subr.mxu0 0.0
    %203 = vmatpush1.msra.mxu0 0.0
    %204 = vmatprep.subr.mxu0 0.0
    %205 = vmatpush1.msra.mxu0 0.0
    %206 = vmatprep.subr.mxu0 0.0
    %207 = vmatpush1.msra.mxu0 0.0
    %208 = vmatprep.subr.mxu0 0.0
    %209 = vmatpush1.msra.mxu0 0.0
    %210 = vmatprep.subr.mxu0 0.0
    %211 = vmatpush1.msra.mxu0 0.0
    %212 = vmatprep.subr.mxu0 0.0
    %213 = vmatpush1.msra.mxu0 0.0
    %214 = vmatprep.subr.mxu0 0.0
    %215 = vmatpush1.msra.mxu0 0.0
    %216 = vmatprep.subr.mxu0 0.0
    %217 = vmatpush1.msra.mxu0 0.0
    %218 = vmatprep.subr.mxu0 0.0
    %219 = vmatpush1.msra.mxu0 0.0
    %220 = vmatprep.subr.mxu0 0.0
    %221 = vmatpush1.msra.mxu0 0.0
    %222 = vmatprep.subr.mxu0 0.0
    %223 = vmatpush1.msra.mxu0 0.0
    %224 = vmatprep.subr.mxu0 0.0
    %225 = vmatpush1.msra.mxu0 0.0
    %226 = vmatprep.subr.mxu0 0.0
    %227 = vmatpush1.msra.mxu0 0.0
    %228 = vmatprep.mubr.f32.mxu0 0.0
    %229 = vmatmul.mubr.f32.gmra.mrb[0].mxu0 %v159
    %v230 = vpop.f32.mrb[0].mxu0
    %v231 = vadd.f32 %v157, %v230
    %v232 = vpop.f32.mrb[0].mxu0
    %233 = vmatprep.mubr.f32.mxu0 0.0
    %234 = vmatmul.mubr.f32.gmra.mrb[0].mxu0 %v162
    %v235 = vpop.f32.mrb[0].mxu0
    %v236 = vadd.f32 %v157, %v235
    %v237 = vpop.f32.mrb[0].mxu0
    %238 = vdwg.mxu0
    %240 = vrot.lane.b32.xlu0 %v231, 96
    %v241 = vpop.permute.xlu0 %240
    %vm242 = vcmask 130048
    %v243 = vsel %vm242, %v231, 0
    %v245 = vsel %vm242, %v241, 0
    %247 = vmatprep.subr.mxu0 0.0
    %248 = vmatpush1.xpose.msra.mxu0 %v245
    %249 = vmatprep.subr.mxu0 0.0
    %250 = vmatpush1.xpose.msra.mxu0 0.0
    %251 = vmatprep.subr.mxu0 0.0
    %252 = vmatpush1.xpose.msra.mxu0 0.0
    %253 = vmatprep.subr.mxu0 0.0
    %254 = vmatpush1.xpose.msra.mxu0 0.0
    %255 = vmatprep.subr.mxu0 0.0
    %256 = vmatpush1.xpose.msra.mxu0 0.0
    %257 = vmatprep.subr.mxu0 0.0
    %258 = vmatpush1.xpose.msra.mxu0 0.0
    %259 = vmatprep.subr.mxu0 0.0
    %260 = vmatpush1.xpose.msra.mxu0 0.0
    %261 = vmatprep.subr.mxu0 0.0
    %262 = vmatpush1.xpose.msra.mxu0 0.0
    %263 = vmatprep.subr.mxu0 0.0
    %264 = vmatpush1.xpose.msra.mxu0 0.0
    %265 = vmatprep.subr.mxu0 0.0
    %266 = vmatpush1.xpose.msra.mxu0 0.0
    %267 = vmatprep.subr.mxu0 0.0
    %268 = vmatpush1.xpose.msra.mxu0 0.0
    %269 = vmatprep.subr.mxu0 0.0
    %270 = vmatpush1.xpose.msra.mxu0 0.0
    %271 = vmatprep.subr.mxu0 0.0
    %272 = vmatpush1.xpose.msra.mxu0 0.0
    %273 = vmatprep.subr.mxu0 0.0
    %274 = vmatpush1.xpose.msra.mxu0 0.0
    %275 = vmatprep.subr.mxu0 0.0
    %276 = vmatpush1.xpose.msra.mxu0 0.0
    %277 = vmatprep.subr.mxu0 0.0
    %278 = vmatpush1.xpose.msra.mxu0 0.0
    %279 = vmatprep.subr.mxu0 0.0
    %280 = vmatpush1.xpose.msra.mxu0 0.0
    %281 = vmatprep.subr.mxu0 0.0
    %282 = vmatpush1.xpose.msra.mxu0 0.0
    %283 = vmatprep.subr.mxu0 0.0
    %284 = vmatpush1.xpose.msra.mxu0 0.0
    %285 = vmatprep.subr.mxu0 0.0
    %286 = vmatpush1.xpose.msra.mxu0 0.0
    %287 = vmatprep.subr.mxu0 0.0
    %288 = vmatpush1.xpose.msra.mxu0 0.0
    %289 = vmatprep.subr.mxu0 0.0
    %290 = vmatpush1.xpose.msra.mxu0 0.0
    %291 = vmatprep.subr.mxu0 0.0
    %292 = vmatpush1.xpose.msra.mxu0 0.0
    %293 = vmatprep.subr.mxu0 0.0
    %294 = vmatpush1.xpose.msra.mxu0 0.0
    %295 = vmatprep.subr.mxu0 0.0
    %296 = vmatpush1.xpose.msra.mxu0 0.0
    %297 = vmatprep.subr.mxu0 0.0
    %298 = vmatpush1.xpose.msra.mxu0 0.0
    %299 = vmatprep.subr.mxu0 0.0
    %300 = vmatpush1.xpose.msra.mxu0 0.0
    %301 = vmatprep.subr.mxu0 0.0
    %302 = vmatpush1.xpose.msra.mxu0 0.0
    %303 = vmatprep.subr.mxu0 0.0
    %304 = vmatpush1.xpose.msra.mxu0 0.0
    %305 = vmatprep.subr.mxu0 0.0
    %306 = vmatpush1.xpose.msra.mxu0 0.0
    %307 = vmatprep.subr.mxu0 0.0
    %308 = vmatpush1.xpose.msra.mxu0 0.0
    %309 = vmatprep.subr.mxu0 0.0
    %310 = vmatpush1.xpose.msra.mxu0 0.0
    %311 = vmatprep.mubr.f32.mxu0 0.0
    %312 = vmatmul.mubr.f32.gmra.mrb[0].mxu0 %v243
    %v313 = vpop.f32.mrb[0].mxu0
    %v314 = vadd.f32 0.0, %v313
    %v315 = vpop.f32.mrb[0].mxu0
    %316 = vdwg.mxu0
    %318 = vrot.lane.b32.xlu0 %v236, 96
    %v319 = vpop.permute.xlu0 %318
    %v320 = vsel %vm242, %v236, 0
    %v322 = vsel %vm242, %v319, 0
    %324 = vmatprep.subr.mxu0 0.0
    %325 = vmatpush1.xpose.msra.mxu0 %v322
    %326 = vmatprep.subr.mxu0 0.0
    %327 = vmatpush1.xpose.msra.mxu0 0.0
    %328 = vmatprep.subr.mxu0 0.0
    %329 = vmatpush1.xpose.msra.mxu0 0.0
    %330 = vmatprep.subr.mxu0 0.0
    %331 = vmatpush1.xpose.msra.mxu0 0.0
    %332 = vmatprep.subr.mxu0 0.0
    %333 = vmatpush1.xpose.msra.mxu0 0.0
    %334 = vmatprep.subr.mxu0 0.0
    %335 = vmatpush1.xpose.msra.mxu0 0.0
    %336 = vmatprep.subr.mxu0 0.0
    %337 = vmatpush1.xpose.msra.mxu0 0.0
    %338 = vmatprep.subr.mxu0 0.0
    %339 = vmatpush1.xpose.msra.mxu0 0.0
    %340 = vmatprep.subr.mxu0 0.0
    %341 = vmatpush1.xpose.msra.mxu0 0.0
    %342 = vmatprep.subr.mxu0 0.0
    %343 = vmatpush1.xpose.msra.mxu0 0.0
    %344 = vmatprep.subr.mxu0 0.0
    %345 = vmatpush1.xpose.msra.mxu0 0.0
    %346 = vmatprep.subr.mxu0 0.0
    %347 = vmatpush1.xpose.msra.mxu0 0.0
    %348 = vmatprep.subr.mxu0 0.0
    %349 = vmatpush1.xpose.msra.mxu0 0.0
    %350 = vmatprep.subr.mxu0 0.0
    %351 = vmatpush1.xpose.msra.mxu0 0.0
    %352 = vmatprep.subr.mxu0 0.0
    %353 = vmatpush1.xpose.msra.mxu0 0.0
    %354 = vmatprep.subr.mxu0 0.0
    %355 = vmatpush1.xpose.msra.mxu0 0.0
    %356 = vmatprep.subr.mxu0 0.0
    %357 = vmatpush1.xpose.msra.mxu0 0.0
    %358 = vmatprep.subr.mxu0 0.0
    %359 = vmatpush1.xpose.msra.mxu0 0.0
    %360 = vmatprep.subr.mxu0 0.0
    %361 = vmatpush1.xpose.msra.mxu0 0.0
    %362 = vmatprep.subr.mxu0 0.0
    %363 = vmatpush1.xpose.msra.mxu0 0.0
    %364 = vmatprep.subr.mxu0 0.0
    %365 = vmatpush1.xpose.msra.mxu0 0.0
    %366 = vmatprep.subr.mxu0 0.0
    %367 = vmatpush1.xpose.msra.mxu0 0.0
    %368 = vmatprep.subr.mxu0 0.0
    %369 = vmatpush1.xpose.msra.mxu0 0.0
    %370 = vmatprep.subr.mxu0 0.0
    %371 = vmatpush1.xpose.msra.mxu0 0.0
    %372 = vmatprep.subr.mxu0 0.0
    %373 = vmatpush1.xpose.msra.mxu0 0.0
    %374 = vmatprep.subr.mxu0 0.0
    %375 = vmatpush1.xpose.msra.mxu0 0.0
    %376 = vmatprep.subr.mxu0 0.0
    %377 = vmatpush1.xpose.msra.mxu0 0.0
    %378 = vmatprep.subr.mxu0 0.0
    %379 = vmatpush1.xpose.msra.mxu0 0.0
    %380 = vmatprep.subr.mxu0 0.0
    %381 = vmatpush1.xpose.msra.mxu0 0.0
    %382 = vmatprep.subr.mxu0 0.0
    %383 = vmatpush1.xpose.msra.mxu0 0.0
    %384 = vmatprep.subr.mxu0 0.0
    %385 = vmatpush1.xpose.msra.mxu0 0.0
    %386 = vmatprep.subr.mxu0 0.0
    %387 = vmatpush1.xpose.msra.mxu0 0.0
    %388 = vmatprep.mubr.f32.mxu0 0.0
    %389 = vmatmul.mubr.f32.gmra.mrb[0].mxu0 %v320
    %v390 = vpop.f32.mrb[0].mxu0
    %v391 = vadd.f32 0.0, %v390
    %v392 = vpop.f32.mrb[0].mxu0
    %393 = vdwg.mxu0
    %v394 = vmul.f32 %v314, 0.25
    %v395 = vmul.f32 %v391, 0.25
    %v396 = vadd.f32 %v394, %v105
    %v397 = vadd.f32 %v395, %v106
    %vm398 = vcmask 64512
    %v399 = vsel %vm398, %v396, -inf
    %400 = vmax.xlane.f32.xlu0 %v399
    %v401 = vpop.xlane.xlu0 %400
    %v402 = vsel %vm398, %v397, -inf
    %403 = vmax.xlane.f32.xlu0 %v402
    %v404 = vpop.xlane.xlu0 %403
    %v405 = vsub.f32 %v396, %v401
    %v406 = vsub.f32 %v397, %v404
    %v407 = vmul.f32 %v405, 1.442695
    %v408 = vpow.pop %v407
    %v409 = vmul.f32 %v406, 1.442695
    %v410 = vpow.pop %v409
    %v411 = vsel %vm398, %v408, 0.0
    %412 = vadd.xlane.f32.xlu0 %v411
    %v413 = vpop.xlane.xlu0 %412
    %v414 = vsel %vm398, %v410, 0.0
    %415 = vadd.xlane.f32.xlu0 %v414
    %v416 = vpop.xlane.xlu0 %415
    %v417 = vrcp.pop %v413
    %v418 = vrcp.pop %v416
    %v419 = vmul.f32 %v408, %v417
    %v420 = vmul.f32 %v410, %v418
    %421 = vrot.lane.b32.xlu0 %v231, 64
    %v422 = vpop.permute.xlu0 %421
    %v425 = vsel %vm398, %v419, 0
    %427 = vmatprep.subr.mxu0 0.0
    %428 = vmatpush1.msra.mxu0 %v422
    %429 = vmatprep.subr.mxu0 0.0
    %430 = vmatpush1.msra.mxu0 0.0
    %431 = vmatprep.subr.mxu0 0.0
    %432 = vmatpush1.msra.mxu0 0.0
    %433 = vmatprep.subr.mxu0 0.0
    %434 = vmatpush1.msra.mxu0 0.0
    %435 = vmatprep.subr.mxu0 0.0
    %436 = vmatpush1.msra.mxu0 0.0
    %437 = vmatprep.subr.mxu0 0.0
    %438 = vmatpush1.msra.mxu0 0.0
    %439 = vmatprep.subr.mxu0 0.0
    %440 = vmatpush1.msra.mxu0 0.0
    %441 = vmatprep.subr.mxu0 0.0
    %442 = vmatpush1.msra.mxu0 0.0
    %443 = vmatprep.subr.mxu0 0.0
    %444 = vmatpush1.msra.mxu0 0.0
    %445 = vmatprep.subr.mxu0 0.0
    %446 = vmatpush1.msra.mxu0 0.0
    %447 = vmatprep.subr.mxu0 0.0
    %448 = vmatpush1.msra.mxu0 0.0
    %449 = vmatprep.subr.mxu0 0.0
    %450 = vmatpush1.msra.mxu0 0.0
    %451 = vmatprep.subr.mxu0 0.0
    %452 = vmatpush1.msra.mxu0 0.0
    %453 = vmatprep.subr.mxu0 0.0
    %454 = vmatpush1.msra.mxu0 0.0
    %455 = vmatprep.subr.mxu0 0.0
    %456 = vmatpush1.msra.mxu0 0.0
    %457 = vmatprep.subr.mxu0 0.0
    %458 = vmatpush1.msra.mxu0 0.0
    %459 = vmatprep.subr.mxu0 0.0
    %460 = vmatpush1.msra.mxu0 0.0
    %461 = vmatprep.subr.mxu0 0.0
    %462 = vmatpush1.msra.mxu0 0.0
    %463 = vmatprep.subr.mxu0 0.0
    %464 = vmatpush1.msra.mxu0 0.0
    %465 = vmatprep.subr.mxu0 0.0
    %466 = vmatpush1.msra.mxu0 0.0
    %467 = vmatprep.subr.mxu0 0.0
    %468 = vmatpush1.msra.mxu0 0.0
    %469 = vmatprep.subr.mxu0 0.0
    %470 = vmatpush1.msra.mxu0 0.0
    %471 = vmatprep.subr.mxu0 0.0
    %472 = vmatpush1.msra.mxu0 0.0
    %473 = vmatprep.subr.mxu0 0.0
    %474 = vmatpush1.msra.mxu0 0.0
    %475 = vmatprep.subr.mxu0 0.0
    %476 = vmatpush1.msra.mxu0 0.0
    %477 = vmatprep.subr.mxu0 0.0
    %478 = vmatpush1.msra.mxu0 0.0
    %479 = vmatprep.subr.mxu0 0.0
    %480 = vmatpush1.msra.mxu0 0.0
    %481 = vmatprep.subr.mxu0 0.0
    %482 = vmatpush1.msra.mxu0 0.0
    %483 = vmatprep.subr.mxu0 0.0
    %484 = vmatpush1.msra.mxu0 0.0
    %485 = vmatprep.subr.mxu0 0.0
    %486 = vmatpush1.msra.mxu0 0.0
    %487 = vmatprep.subr.mxu0 0.0
    %488 = vmatpush1.msra.mxu0 0.0
    %489 = vmatprep.subr.mxu0 0.0
    %490 = vmatpush1.msra.mxu0 0.0
    %491 = vmatprep.mubr.f32.mxu0 0.0
    %492 = vmatmul.mubr.f32.gmra.mrb[0].mxu0 %v425
    %v493 = vpop.f32.mrb[0].mxu0
    %v494 = vadd.f32 0.0, %v493
    %v495 = vpop.f32.mrb[0].mxu0
    %496 = vdwg.mxu0
    %497 = vrot.lane.b32.xlu0 %v236, 64
    %v498 = vpop.permute.xlu0 %497
    %v501 = vsel %vm398, %v420, 0
    %503 = vmatprep.subr.mxu0 0.0
    %504 = vmatpush1.msra.mxu0 %v498
    %505 = vmatprep.subr.mxu0 0.0
    %506 = vmatpush1.msra.mxu0 0.0
    %507 = vmatprep.subr.mxu0 0.0
    %508 = vmatpush1.msra.mxu0 0.0
    %509 = vmatprep.subr.mxu0 0.0
    %510 = vmatpush1.msra.mxu0 0.0
    %511 = vmatprep.subr.mxu0 0.0
    %512 = vmatpush1.msra.mxu0 0.0
    %513 = vmatprep.subr.mxu0 0.0
    %514 = vmatpush1.msra.mxu0 0.0
    %515 = vmatprep.subr.mxu0 0.0
    %516 = vmatpush1.msra.mxu0 0.0
    %517 = vmatprep.subr.mxu0 0.0
    %518 = vmatpush1.msra.mxu0 0.0
    %519 = vmatprep.subr.mxu0 0.0
    %520 = vmatpush1.msra.mxu0 0.0
    %521 = vmatprep.subr.mxu0 0.0
    %522 = vmatpush1.msra.mxu0 0.0
    %523 = vmatprep.subr.mxu0 0.0
    %524 = vmatpush1.msra.mxu0 0.0
    %525 = vmatprep.subr.mxu0 0.0
    %526 = vmatpush1.msra.mxu0 0.0
    %527 = vmatprep.subr.mxu0 0.0
    %528 = vmatpush1.msra.mxu0 0.0
    %529 = vmatprep.subr.mxu0 0.0
    %530 = vmatpush1.msra.mxu0 0.0
    %531 = vmatprep.subr.mxu0 0.0
    %532 = vmatpush1.msra.mxu0 0.0
    %533 = vmatprep.subr.mxu0 0.0
    %534 = vmatpush1.msra.mxu0 0.0
    %535 = vmatprep.subr.mxu0 0.0
    %536 = vmatpush1.msra.mxu0 0.0
    %537 = vmatprep.subr.mxu0 0.0
    %538 = vmatpush1.msra.mxu0 0.0
    %539 = vmatprep.subr.mxu0 0.0
    %540 = vmatpush1.msra.mxu0 0.0
    %541 = vmatprep.subr.mxu0 0.0
    %542 = vmatpush1.msra.mxu0 0.0
    %543 = vmatprep.subr.mxu0 0.0
    %544 = vmatpush1.msra.mxu0 0.0
    %545 = vmatprep.subr.mxu0 0.0
    %546 = vmatpush1.msra.mxu0 0.0
    %547 = vmatprep.subr.mxu0 0.0
    %548 = vmatpush1.msra.mxu0 0.0
    %549 = vmatprep.subr.mxu0 0.0
    %550 = vmatpush1.msra.mxu0 0.0
    %551 = vmatprep.subr.mxu0 0.0
    %552 = vmatpush1.msra.mxu0 0.0
    %553 = vmatprep.subr.mxu0 0.0
    %554 = vmatpush1.msra.mxu0 0.0
    %555 = vmatprep.subr.mxu0 0.0
    %556 = vmatpush1.msra.mxu0 0.0
    %557 = vmatprep.subr.mxu0 0.0
    %558 = vmatpush1.msra.mxu0 0.0
    %559 = vmatprep.subr.mxu0 0.0
    %560 = vmatpush1.msra.mxu0 0.0
    %561 = vmatprep.subr.mxu0 0.0
    %562 = vmatpush1.msra.mxu0 0.0
    %563 = vmatprep.subr.mxu0 0.0
    %564 = vmatpush1.msra.mxu0 0.0
    %565 = vmatprep.subr.mxu0 0.0
    %566 = vmatpush1.msra.mxu0 0.0
    %567 = vmatprep.mubr.f32.mxu0 0.0
    %568 = vmatmul.mubr.f32.gmra.mrb[0].mxu0 %v501
    %v569 = vpop.f32.mrb[0].mxu0
    %v570 = vadd.f32 0.0, %v569
    %v571 = vpop.f32.mrb[0].mxu0
    %572 = vdwg.mxu0
    %573 = vrot.lane.b32.xlu0 %v231, 112
    %v574 = vpop.permute.xlu0 %573
    %575 = vrot.lane.b32.xlu0 %v231, 80
    %v576 = vpop.permute.xlu0 %575
    %v577 = vsel %vm242, %v574, 0
    %v579 = vsel %vm242, %v576, 0
    %581 = vmatprep.subr.mxu0 0.0
    %582 = vmatpush1.xpose.msra.mxu0 %v579
    %583 = vmatprep.subr.mxu0 0.0
    %584 = vmatpush1.xpose.msra.mxu0 0.0
    %585 = vmatprep.subr.mxu0 0.0
    %586 = vmatpush1.xpose.msra.mxu0 0.0
    %587 = vmatprep.subr.mxu0 0.0
    %588 = vmatpush1.xpose.msra.mxu0 0.0
    %589 = vmatprep.subr.mxu0 0.0
    %590 = vmatpush1.xpose.msra.mxu0 0.0
    %591 = vmatprep.subr.mxu0 0.0
    %592 = vmatpush1.xpose.msra.mxu0 0.0
    %593 = vmatprep.subr.mxu0 0.0
    %594 = vmatpush1.xpose.msra.mxu0 0.0
    %595 = vmatprep.subr.mxu0 0.0
    %596 = vmatpush1.xpose.msra.mxu0 0.0
    %597 = vmatprep.subr.mxu0 0.0
    %598 = vmatpush1.xpose.msra.mxu0 0.0
    %599 = vmatprep.subr.mxu0 0.0
    %600 = vmatpush1.xpose.msra.mxu0 0.0
    %601 = vmatprep.subr.mxu0 0.0
    %602 = vmatpush1.xpose.msra.mxu0 0.0
    %603 = vmatprep.subr.mxu0 0.0
    %604 = vmatpush1.xpose.msra.mxu0 0.0
    %605 = vmatprep.subr.mxu0 0.0
    %606 = vmatpush1.xpose.msra.mxu0 0.0
    %607 = vmatprep.subr.mxu0 0.0
    %608 = vmatpush1.xpose.msra.mxu0 0.0
    %609 = vmatprep.subr.mxu0 0.0
    %610 = vmatpush1.xpose.msra.mxu0 0.0
    %611 = vmatprep.subr.mxu0 0.0
    %612 = vmatpush1.xpose.msra.mxu0 0.0
    %613 = vmatprep.subr.mxu0 0.0
    %614 = vmatpush1.xpose.msra.mxu0 0.0
    %615 = vmatprep.subr.mxu0 0.0
    %616 = vmatpush1.xpose.msra.mxu0 0.0
    %617 = vmatprep.subr.mxu0 0.0
    %618 = vmatpush1.xpose.msra.mxu0 0.0
    %619 = vmatprep.subr.mxu0 0.0
    %620 = vmatpush1.xpose.msra.mxu0 0.0
    %621 = vmatprep.subr.mxu0 0.0
    %622 = vmatpush1.xpose.msra.mxu0 0.0
    %623 = vmatprep.subr.mxu0 0.0
    %624 = vmatpush1.xpose.msra.mxu0 0.0
    %625 = vmatprep.subr.mxu0 0.0
    %626 = vmatpush1.xpose.msra.mxu0 0.0
    %627 = vmatprep.subr.mxu0 0.0
    %628 = vmatpush1.xpose.msra.mxu0 0.0
    %629 = vmatprep.subr.mxu0 0.0
    %630 = vmatpush1.xpose.msra.mxu0 0.0
    %631 = vmatprep.subr.mxu0 0.0
    %632 = vmatpush1.xpose.msra.mxu0 0.0
    %633 = vmatprep.subr.mxu0 0.0
    %634 = vmatpush1.xpose.msra.mxu0 0.0
    %635 = vmatprep.subr.mxu0 0.0
    %636 = vmatpush1.xpose.msra.mxu0 0.0
    %637 = vmatprep.subr.mxu0 0.0
    %638 = vmatpush1.xpose.msra.mxu0 0.0
    %639 = vmatprep.subr.mxu0 0.0
    %640 = vmatpush1.xpose.msra.mxu0 0.0
    %641 = vmatprep.subr.mxu0 0.0
    %642 = vmatpush1.xpose.msra.mxu0 0.0
    %643 = vmatprep.subr.mxu0 0.0
    %644 = vmatpush1.xpose.msra.mxu0 0.0
    %645 = vmatprep.mubr.f32.mxu0 0.0
    %646 = vmatmul.mubr.f32.gmra.mrb[0].mxu0 %v577
    %v647 = vpop.f32.mrb[0].mxu0
    %v648 = vadd.f32 0.0, %v647
    %v649 = vpop.f32.mrb[0].mxu0
    %650 = vdwg.mxu0
    %651 = vrot.lane.b32.xlu0 %v236, 112
    %v652 = vpop.permute.xlu0 %651
    %653 = vrot.lane.b32.xlu0 %v236, 80
    %v654 = vpop.permute.xlu0 %653
    %v655 = vsel %vm242, %v652, 0
    %v657 = vsel %vm242, %v654, 0
    %659 = vmatprep.subr.mxu0 0.0
    %660 = vmatpush1.xpose.msra.mxu0 %v657
    %661 = vmatprep.subr.mxu0 0.0
    %662 = vmatpush1.xpose.msra.mxu0 0.0
    %663 = vmatprep.subr.mxu0 0.0
    %664 = vmatpush1.xpose.msra.mxu0 0.0
    %665 = vmatprep.subr.mxu0 0.0
    %666 = vmatpush1.xpose.msra.mxu0 0.0
    %667 = vmatprep.subr.mxu0 0.0
    %668 = vmatpush1.xpose.msra.mxu0 0.0
    %669 = vmatprep.subr.mxu0 0.0
    %670 = vmatpush1.xpose.msra.mxu0 0.0
    %671 = vmatprep.subr.mxu0 0.0
    %672 = vmatpush1.xpose.msra.mxu0 0.0
    %673 = vmatprep.subr.mxu0 0.0
    %674 = vmatpush1.xpose.msra.mxu0 0.0
    %675 = vmatprep.subr.mxu0 0.0
    %676 = vmatpush1.xpose.msra.mxu0 0.0
    %677 = vmatprep.subr.mxu0 0.0
    %678 = vmatpush1.xpose.msra.mxu0 0.0
    %679 = vmatprep.subr.mxu0 0.0
    %680 = vmatpush1.xpose.msra.mxu0 0.0
    %681 = vmatprep.subr.mxu0 0.0
    %682 = vmatpush1.xpose.msra.mxu0 0.0
    %683 = vmatprep.subr.mxu0 0.0
    %684 = vmatpush1.xpose.msra.mxu0 0.0
    %685 = vmatprep.subr.mxu0 0.0
    %686 = vmatpush1.xpose.msra.mxu0 0.0
    %687 = vmatprep.subr.mxu0 0.0
    %688 = vmatpush1.xpose.msra.mxu0 0.0
    %689 = vmatprep.subr.mxu0 0.0
    %690 = vmatpush1.xpose.msra.mxu0 0.0
    %691 = vmatprep.subr.mxu0 0.0
    %692 = vmatpush1.xpose.msra.mxu0 0.0
    %693 = vmatprep.subr.mxu0 0.0
    %694 = vmatpush1.xpose.msra.mxu0 0.0
    %695 = vmatprep.subr.mxu0 0.0
    %696 = vmatpush1.xpose.msra.mxu0 0.0
    %697 = vmatprep.subr.mxu0 0.0
    %698 = vmatpush1.xpose.msra.mxu0 0.0
    %699 = vmatprep.subr.mxu0 0.0
    %700 = vmatpush1.xpose.msra.mxu0 0.0
    %701 = vmatprep.subr.mxu0 0.0
    %702 = vmatpush1.xpose.msra.mxu0 0.0
    %703 = vmatprep.subr.mxu0 0.0
    %704 = vmatpush1.xpose.msra.mxu0 0.0
    %705 = vmatprep.subr.mxu0 0.0
    %706 = vmatpush1.xpose.msra.mxu0 0.0
    %707 = vmatprep.subr.mxu0 0.0
    %708 = vmatpush1.xpose.msra.mxu0 0.0
    %709 = vmatprep.subr.mxu0 0.0
    %710 = vmatpush1.xpose.msra.mxu0 0.0
    %711 = vmatprep.subr.mxu0 0.0
    %712 = vmatpush1.xpose.msra.mxu0 0.0
    %713 = vmatprep.subr.mxu0 0.0
    %714 = vmatpush1.xpose.msra.mxu0 0.0
    %715 = vmatprep.subr.mxu0 0.0
    %716 = vmatpush1.xpose.msra.mxu0 0.0
    %717 = vmatprep.subr.mxu0 0.0
    %718 = vmatpush1.xpose.msra.mxu0 0.0
    %719 = vmatprep.subr.mxu0 0.0
    %720 = vmatpush1.xpose.msra.mxu0 0.0
    %721 = vmatprep.subr.mxu0 0.0
    %722 = vmatpush1.xpose.msra.mxu0 0.0
    %723 = vmatprep.mubr.f32.mxu0 0.0
    %724 = vmatmul.mubr.f32.gmra.mrb[0].mxu0 %v655
    %v725 = vpop.f32.mrb[0].mxu0
    %v726 = vadd.f32 0.0, %v725
    %v727 = vpop.f32.mrb[0].mxu0
    %728 = vdwg.mxu0
    %v729 = vmul.f32 %v648, 0.25
    %v730 = vmul.f32 %v726, 0.25
    %v731 = vadd.f32 %v729, %v105
    %v732 = vadd.f32 %v730, %v106
    %v733 = vsel %vm398, %v731, -inf
    %734 = vmax.xlane.f32.xlu0 %v733
    %v735 = vpop.xlane.xlu0 %734
    %v736 = vsel %vm398, %v732, -inf
    %737 = vmax.xlane.f32.xlu0 %v736
    %v738 = vpop.xlane.xlu0 %737
    %v739 = vsub.f32 %v731, %v735
    %v740 = vsub.f32 %v732, %v738
    %v741 = vmul.f32 %v739, 1.442695
    %v742 = vpow.pop %v741
    %v743 = vmul.f32 %v740, 1.442695
    %v744 = vpow.pop %v743
    %v745 = vsel %vm398, %v742, 0.0
    %746 = vadd.xlane.f32.xlu0 %v745
    %v747 = vpop.xlane.xlu0 %746
    %v748 = vsel %vm398, %v744, 0.0
    %749 = vadd.xlane.f32.xlu0 %v748
    %v750 = vpop.xlane.xlu0 %749
    %v751 = vrcp.pop %v747
    %v752 = vrcp.pop %v750
    %v753 = vmul.f32 %v742, %v751
    %v754 = vmul.f32 %v744, %v752
    %755 = vrot.lane.b32.xlu0 %v231, 48
    %v756 = vpop.permute.xlu0 %755
    %v759 = vsel %vm398, %v753, 0
    %761 = vmatprep.subr.mxu0 0.0
    %762 = vmatpush1.msra.mxu0 %v756
    %763 = vmatprep.subr.mxu0 0.0
    %764 = vmatpush1.msra.mxu0 0.0
    %765 = vmatprep.subr.mxu0 0.0
    %766 = vmatpush1.msra.mxu0 0.0
    %767 = vmatprep.subr.mxu0 0.0
    %768 = vmatpush1.msra.mxu0 0.0
    %769 = vmatprep.subr.mxu0 0.0
    %770 = vmatpush1.msra.mxu0 0.0
    %771 = vmatprep.subr.mxu0 0.0
    %772 = vmatpush1.msra.mxu0 0.0
    %773 = vmatprep.subr.mxu0 0.0
    %774 = vmatpush1.msra.mxu0 0.0
    %775 = vmatprep.subr.mxu0 0.0
    %776 = vmatpush1.msra.mxu0 0.0
    %777 = vmatprep.subr.mxu0 0.0
    %778 = vmatpush1.msra.mxu0 0.0
    %779 = vmatprep.subr.mxu0 0.0
    %780 = vmatpush1.msra.mxu0 0.0
    %781 = vmatprep.subr.mxu0 0.0
    %782 = vmatpush1.msra.mxu0 0.0
    %783 = vmatprep.subr.mxu0 0.0
    %784 = vmatpush1.msra.mxu0 0.0
    %785 = vmatprep.subr.mxu0 0.0
    %786 = vmatpush1.msra.mxu0 0.0
    %787 = vmatprep.subr.mxu0 0.0
    %788 = vmatpush1.msra.mxu0 0.0
    %789 = vmatprep.subr.mxu0 0.0
    %790 = vmatpush1.msra.mxu0 0.0
    %791 = vmatprep.subr.mxu0 0.0
    %792 = vmatpush1.msra.mxu0 0.0
    %793 = vmatprep.subr.mxu0 0.0
    %794 = vmatpush1.msra.mxu0 0.0
    %795 = vmatprep.subr.mxu0 0.0
    %796 = vmatpush1.msra.mxu0 0.0
    %797 = vmatprep.subr.mxu0 0.0
    %798 = vmatpush1.msra.mxu0 0.0
    %799 = vmatprep.subr.mxu0 0.0
    %800 = vmatpush1.msra.mxu0 0.0
    %801 = vmatprep.subr.mxu0 0.0
    %802 = vmatpush1.msra.mxu0 0.0
    %803 = vmatprep.subr.mxu0 0.0
    %804 = vmatpush1.msra.mxu0 0.0
    %805 = vmatprep.subr.mxu0 0.0
    %806 = vmatpush1.msra.mxu0 0.0
    %807 = vmatprep.subr.mxu0 0.0
    %808 = vmatpush1.msra.mxu0 0.0
    %809 = vmatprep.subr.mxu0 0.0
    %810 = vmatpush1.msra.mxu0 0.0
    %811 = vmatprep.subr.mxu0 0.0
    %812 = vmatpush1.msra.mxu0 0.0
    %813 = vmatprep.subr.mxu0 0.0
    %814 = vmatpush1.msra.mxu0 0.0
    %815 = vmatprep.subr.mxu0 0.0
    %816 = vmatpush1.msra.mxu0 0.0
    %817 = vmatprep.subr.mxu0 0.0
    %818 = vmatpush1.msra.mxu0 0.0
    %819 = vmatprep.subr.mxu0 0.0
    %820 = vmatpush1.msra.mxu0 0.0
    %821 = vmatprep.subr.mxu0 0.0
    %822 = vmatpush1.msra.mxu0 0.0
    %823 = vmatprep.subr.mxu0 0.0
    %824 = vmatpush1.msra.mxu0 0.0
    %825 = vmatprep.mubr.f32.mxu0 0.0
    %826 = vmatmul.mubr.f32.gmra.mrb[0].mxu0 %v759
    %v827 = vpop.f32.mrb[0].mxu0
    %v828 = vadd.f32 0.0, %v827
    %v829 = vpop.f32.mrb[0].mxu0
    %830 = vdwg.mxu0
    %831 = vrot.lane.b32.xlu0 %v236, 48
    %v832 = vpop.permute.xlu0 %831
    %v835 = vsel %vm398, %v754, 0
    %837 = vmatprep.subr.mxu0 0.0
    %838 = vmatpush1.msra.mxu0 %v832
    %839 = vmatprep.subr.mxu0 0.0
    %840 = vmatpush1.msra.mxu0 0.0
    %841 = vmatprep.subr.mxu0 0.0
    %842 = vmatpush1.msra.mxu0 0.0
    %843 = vmatprep.subr.mxu0 0.0
    %844 = vmatpush1.msra.mxu0 0.0
    %845 = vmatprep.subr.mxu0 0.0
    %846 = vmatpush1.msra.mxu0 0.0
    %847 = vmatprep.subr.mxu0 0.0
    %848 = vmatpush1.msra.mxu0 0.0
    %849 = vmatprep.subr.mxu0 0.0
    %850 = vmatpush1.msra.mxu0 0.0
    %851 = vmatprep.subr.mxu0 0.0
    %852 = vmatpush1.msra.mxu0 0.0
    %853 = vmatprep.subr.mxu0 0.0
    %854 = vmatpush1.msra.mxu0 0.0
    %855 = vmatprep.subr.mxu0 0.0
    %856 = vmatpush1.msra.mxu0 0.0
    %857 = vmatprep.subr.mxu0 0.0
    %858 = vmatpush1.msra.mxu0 0.0
    %859 = vmatprep.subr.mxu0 0.0
    %860 = vmatpush1.msra.mxu0 0.0
    %861 = vmatprep.subr.mxu0 0.0
    %862 = vmatpush1.msra.mxu0 0.0
    %863 = vmatprep.subr.mxu0 0.0
    %864 = vmatpush1.msra.mxu0 0.0
    %865 = vmatprep.subr.mxu0 0.0
    %866 = vmatpush1.msra.mxu0 0.0
    %867 = vmatprep.subr.mxu0 0.0
    %868 = vmatpush1.msra.mxu0 0.0
    %869 = vmatprep.subr.mxu0 0.0
    %870 = vmatpush1.msra.mxu0 0.0
    %871 = vmatprep.subr.mxu0 0.0
    %872 = vmatpush1.msra.mxu0 0.0
    %873 = vmatprep.subr.mxu0 0.0
    %874 = vmatpush1.msra.mxu0 0.0
    %875 = vmatprep.subr.mxu0 0.0
    %876 = vmatpush1.msra.mxu0 0.0
    %877 = vmatprep.subr.mxu0 0.0
    %878 = vmatpush1.msra.mxu0 0.0
    %879 = vmatprep.subr.mxu0 0.0
    %880 = vmatpush1.msra.mxu0 0.0
    %881 = vmatprep.subr.mxu0 0.0
    %882 = vmatpush1.msra.mxu0 0.0
    %883 = vmatprep.subr.mxu0 0.0
    %884 = vmatpush1.msra.mxu0 0.0
    %885 = vmatprep.subr.mxu0 0.0
    %886 = vmatpush1.msra.mxu0 0.0
    %887 = vmatprep.subr.mxu0 0.0
    %888 = vmatpush1.msra.mxu0 0.0
    %889 = vmatprep.subr.mxu0 0.0
    %890 = vmatpush1.msra.mxu0 0.0
    %891 = vmatprep.subr.mxu0 0.0
    %892 = vmatpush1.msra.mxu0 0.0
    %893 = vmatprep.subr.mxu0 0.0
    %894 = vmatpush1.msra.mxu0 0.0
    %895 = vmatprep.subr.mxu0 0.0
    %896 = vmatpush1.msra.mxu0 0.0
    %897 = vmatprep.subr.mxu0 0.0
    %898 = vmatpush1.msra.mxu0 0.0
    %899 = vmatprep.subr.mxu0 0.0
    %900 = vmatpush1.msra.mxu0 0.0
    %901 = vmatprep.mubr.f32.mxu0 0.0
    %902 = vmatmul.mubr.f32.gmra.mrb[0].mxu0 %v835
    %v903 = vpop.f32.mrb[0].mxu0
    %v904 = vadd.f32 0.0, %v903
    %v905 = vpop.f32.mrb[0].mxu0
    %906 = vdwg.mxu0
    %909 = vrot.lane.b32.xlu0 %v828, 16
    %v910 = vpop.permute.xlu0 %909
    %911 = vrot.lane.b32.xlu0 %v904, 16
    %v912 = vpop.permute.xlu0 %911
    %v915 = vsel %vm242, %v494, %v910
    %v916 = vsel %vm242, %v570, %v912
    %v917 = vld [vmem:[%s7] sm:$0xff]
    %v918 = vld [vmem:[%s7 + $0x8] sm:$0xff]
    %v919 = vld [vmem:[%s7 + $0x10] sm:$0xff]
    %v920 = vld [vmem:[%s7 + $0x18] sm:$0xff]
    %v921 = vld [vmem:[%s8] sm:$0x1]
    %v922 = vlaneseq
    %v923 = vshrl.u32 %v922, 7
    %v924 = vsub.s32 0, %v923
    %v925 = vrot.slane %v921, %v924
    %v927 = vsel %vm109, %v915, 0
    %v930 = vsel %vm109, %v916, 0
    %932 = vmatprep.subr.mxu0 0.0
    %933 = vmatpush1.msra.mxu0 %v917
    %934 = vmatprep.subr.mxu0 0.0
    %935 = vmatpush1.msra.mxu0 %v918
    %936 = vmatprep.subr.mxu0 0.0
    %937 = vmatpush1.msra.mxu0 %v919
    %938 = vmatprep.subr.mxu0 0.0
    %939 = vmatpush1.msra.mxu0 %v920
    %940 = vmatprep.subr.mxu0 0.0
    %941 = vmatpush1.msra.mxu0 0.0
    %942 = vmatprep.subr.mxu0 0.0
    %943 = vmatpush1.msra.mxu0 0.0
    %944 = vmatprep.subr.mxu0 0.0
    %945 = vmatpush1.msra.mxu0 0.0
    %946 = vmatprep.subr.mxu0 0.0
    %947 = vmatpush1.msra.mxu0 0.0
    %948 = vmatprep.subr.mxu0 0.0
    %949 = vmatpush1.msra.mxu0 0.0
    %950 = vmatprep.subr.mxu0 0.0
    %951 = vmatpush1.msra.mxu0 0.0
    %952 = vmatprep.subr.mxu0 0.0
    %953 = vmatpush1.msra.mxu0 0.0
    %954 = vmatprep.subr.mxu0 0.0
    %955 = vmatpush1.msra.mxu0 0.0
    %956 = vmatprep.subr.mxu0 0.0
    %957 = vmatpush1.msra.mxu0 0.0
    %958 = vmatprep.subr.mxu0 0.0
    %959 = vmatpush1.msra.mxu0 0.0
    %960 = vmatprep.subr.mxu0 0.0
    %961 = vmatpush1.msra.mxu0 0.0
    %962 = vmatprep.subr.mxu0 0.0
    %963 = vmatpush1.msra.mxu0 0.0
    %964 = vmatprep.subr.mxu0 0.0
    %965 = vmatpush1.msra.mxu0 0.0
    %966 = vmatprep.subr.mxu0 0.0
    %967 = vmatpush1.msra.mxu0 0.0
    %968 = vmatprep.subr.mxu0 0.0
    %969 = vmatpush1.msra.mxu0 0.0
    %970 = vmatprep.subr.mxu0 0.0
    %971 = vmatpush1.msra.mxu0 0.0
    %972 = vmatprep.subr.mxu0 0.0
    %973 = vmatpush1.msra.mxu0 0.0
    %974 = vmatprep.subr.mxu0 0.0
    %975 = vmatpush1.msra.mxu0 0.0
    %976 = vmatprep.subr.mxu0 0.0
    %977 = vmatpush1.msra.mxu0 0.0
    %978 = vmatprep.subr.mxu0 0.0
    %979 = vmatpush1.msra.mxu0 0.0
    %980 = vmatprep.subr.mxu0 0.0
    %981 = vmatpush1.msra.mxu0 0.0
    %982 = vmatprep.subr.mxu0 0.0
    %983 = vmatpush1.msra.mxu0 0.0
    %984 = vmatprep.subr.mxu0 0.0
    %985 = vmatpush1.msra.mxu0 0.0
    %986 = vmatprep.subr.mxu0 0.0
    %987 = vmatpush1.msra.mxu0 0.0
    %988 = vmatprep.subr.mxu0 0.0
    %989 = vmatpush1.msra.mxu0 0.0
    %990 = vmatprep.subr.mxu0 0.0
    %991 = vmatpush1.msra.mxu0 0.0
    %992 = vmatprep.subr.mxu0 0.0
    %993 = vmatpush1.msra.mxu0 0.0
    %994 = vmatprep.subr.mxu0 0.0
    %995 = vmatpush1.msra.mxu0 0.0
    %996 = vmatprep.mubr.f32.mxu0 0.0
    %997 = vmatmul.mubr.f32.gmra.mrb[0].mxu0 %v927
    %v998 = vpop.f32.mrb[0].mxu0
    %v999 = vadd.f32 %v925, %v998
    %v1000 = vpop.f32.mrb[0].mxu0
    %1001 = vmatprep.mubr.f32.mxu0 0.0
    %1002 = vmatmul.mubr.f32.gmra.mrb[0].mxu0 %v930
    %v1003 = vpop.f32.mrb[0].mxu0
    %v1004 = vadd.f32 %v925, %v1003
    %v1005 = vpop.f32.mrb[0].mxu0
    %1006 = vdwg.mxu0
    %v1007 = vadd.f32 %v57, %v999
    %v1008 = vadd.f32 %v58, %v1004
    %v1009 = vld [vmem:[%s9] sm:$0x1]
    %v1010 = vld [vmem:[%s10] sm:$0x1]
    %v1011 = vsel %vm109, %v1007, 0.0
    %1012 = vadd.xlane.f32.xlu0 %v1011
    %v1013 = vpop.xlane.xlu0 %1012
    %v1014 = vsel %vm109, %v1008, 0.0
    %1015 = vadd.xlane.f32.xlu0 %v1014
    %v1016 = vpop.xlane.xlu0 %1015
    %v1017 = vmul.f32 %v1013, %v116
    %v1018 = vmul.f32 %v1016, %v116
    %v1019 = vsub.f32 %v1007, %v1017
    %v1020 = vsub.f32 %v1008, %v1018
    %v1021 = vmul.f32 %v1019, %v1019
    %v1022 = vmul.f32 %v1020, %v1020
    %v1023 = vsel %vm109, %v1021, 0.0
    %1024 = vadd.xlane.f32.xlu0 %v1023
    %v1025 = vpop.xlane.xlu0 %1024
    %v1026 = vsel %vm109, %v1022, 0.0
    %1027 = vadd.xlane.f32.xlu0 %v1026
    %v1028 = vpop.xlane.xlu0 %1027
    %v1029 = vmul.f32 %v1025, %v116
    %v1030 = vmul.f32 %v1028, %v116
    %v1031 = vadd.f32 %v1029, 1e-05
    %v1032 = vadd.f32 %v1030, 1e-05
    %v1033 = vrsqrt.pop %v1031
    %v1034 = vrsqrt.pop %v1032
    %v1035 = vmul.f32 %v1019, %v1033
    %v1036 = vmul.f32 %v1020, %v1034
    %v1037 = vlaneseq
    %v1038 = vshrl.u32 %v1037, 7
    %v1039 = vsub.s32 0, %v1038
    %v1040 = vrot.slane %v1009, %v1039
    %v1041 = vmul.f32 %v1035, %v1040
    %v1042 = vmul.f32 %v1036, %v1040
    %v1043 = vlaneseq
    %v1044 = vshrl.u32 %v1043, 7
    %v1045 = vsub.s32 0, %v1044
    %v1046 = vrot.slane %v1010, %v1045
    %v1047 = vadd.f32 %v1041, %v1046
    %v1048 = vadd.f32 %v1042, %v1046
    %v1049 = vld [vmem:[%s11] sm:$0xff]
    %v1050 = vld [vmem:[%s11 + $0x8] sm:$0xff]
    %v1051 = vld [vmem:[%s11 + $0x10] sm:$0xff]
    %v1052 = vld [vmem:[%s11 + $0x18] sm:$0xff]
    %v1053 = vld [vmem:[%s12] sm:$0x1]
    %v1054 = vlaneseq
    %v1055 = vshrl.u32 %v1054, 7
    %v1056 = vsub.s32 0, %v1055
    %v1057 = vrot.slane %v1053, %v1056
    %v1059 = vsel %vm109, %v1047, 0
    %v1062 = vsel %vm109, %v1048, 0
    %1064 = vmatprep.subr.mxu0 0.0
    %1065 = vmatpush1.msra.mxu0 %v1049
    %1066 = vmatprep.subr.mxu0 0.0
    %1067 = vmatpush1.msra.mxu0 %v1050
    %1068 = vmatprep.subr.mxu0 0.0
    %1069 = vmatpush1.msra.mxu0 %v1051
    %1070 = vmatprep.subr.mxu0 0.0
    %1071 = vmatpush1.msra.mxu0 %v1052
    %1072 = vmatprep.subr.mxu0 0.0
    %1073 = vmatpush1.msra.mxu0 0.0
    %1074 = vmatprep.subr.mxu0 0.0
    %1075 = vmatpush1.msra.mxu0 0.0
    %1076 = vmatprep.subr.mxu0 0.0
    %1077 = vmatpush1.msra.mxu0 0.0
    %1078 = vmatprep.subr.mxu0 0.0
    %1079 = vmatpush1.msra.mxu0 0.0
    %1080 = vmatprep.subr.mxu0 0.0
    %1081 = vmatpush1.msra.mxu0 0.0
    %1082 = vmatprep.subr.mxu0 0.0
    %1083 = vmatpush1.msra.mxu0 0.0
    %1084 = vmatprep.subr.mxu0 0.0
    %1085 = vmatpush1.msra.mxu0 0.0
    %1086 = vmatprep.subr.mxu0 0.0
    %1087 = vmatpush1.msra.mxu0 0.0
    %1088 = vmatprep.subr.mxu0 0.0
    %1089 = vmatpush1.msra.mxu0 0.0
    %1090 = vmatprep.subr.mxu0 0.0
    %1091 = vmatpush1.msra.mxu0 0.0
    %1092 = vmatprep.subr.mxu0 0.0
    %1093 = vmatpush1.msra.mxu0 0.0
    %1094 = vmatprep.subr.mxu0 0.0
    %1095 = vmatpush1.msra.mxu0 0.0
    %1096 = vmatprep.subr.mxu0 0.0
    %1097 = vmatpush1.msra.mxu0 0.0
    %1098 = vmatprep.subr.mxu0 0.0
    %1099 = vmatpush1.msra.mxu0 0.0
    %1100 = vmatprep.subr.mxu0 0.0
    %1101 = vmatpush1.msra.mxu0 0.0
    %1102 = vmatprep.subr.mxu0 0.0
    %1103 = vmatpush1.msra.mxu0 0.0
    %1104 = vmatprep.subr.mxu0 0.0
    %1105 = vmatpush1.msra.mxu0 0.0
    %1106 = vmatprep.subr.mxu0 0.0
    %1107 = vmatpush1.msra.mxu0 0.0
    %1108 = vmatprep.subr.mxu0 0.0
    %1109 = vmatpush1.msra.mxu0 0.0
    %1110 = vmatprep.subr.mxu0 0.0
    %1111 = vmatpush1.msra.mxu0 0.0
    %1112 = vmatprep.subr.mxu0 0.0
    %1113 = vmatpush1.msra.mxu0 0.0
    %1114 = vmatprep.subr.mxu0 0.0
    %1115 = vmatpush1.msra.mxu0 0.0
    %1116 = vmatprep.subr.mxu0 0.0
    %1117 = vmatpush1.msra.mxu0 0.0
    %1118 = vmatprep.subr.mxu0 0.0
    %1119 = vmatpush1.msra.mxu0 0.0
    %1120 = vmatprep.subr.mxu0 0.0
    %1121 = vmatpush1.msra.mxu0 0.0
    %1122 = vmatprep.subr.mxu0 0.0
    %1123 = vmatpush1.msra.mxu0 0.0
    %1124 = vmatprep.subr.mxu0 0.0
    %1125 = vmatpush1.msra.mxu0 0.0
    %1126 = vmatprep.subr.mxu0 0.0
    %1127 = vmatpush1.msra.mxu0 0.0
    %1128 = vmatprep.mubr.f32.mxu0 0.0
    %1129 = vmatmul.mubr.f32.gmra.mrb[0].mxu0 %v1059
    %v1130 = vpop.f32.mrb[0].mxu0
    %v1131 = vadd.f32 %v1057, %v1130
    %v1132 = vpop.f32.mrb[0].mxu0
    %1133 = vmatprep.mubr.f32.mxu0 0.0
    %1134 = vmatmul.mubr.f32.gmra.mrb[0].mxu0 %v1062
    %v1135 = vpop.f32.mrb[0].mxu0
    %v1136 = vadd.f32 %v1057, %v1135
    %v1137 = vpop.f32.mrb[0].mxu0
    %1138 = vdwg.mxu0
    %v1139 = vmul.f32 %v1131, 0.5
    %v1140 = vmul.f32 %v1136, 0.5
    %v1141 = vmul.f32 %v1131, 0.044715
    %v1142 = vmul.f32 %v1136, 0.044715
    %v1143 = vmul.f32 %v1141, %v1131
    %v1144 = vmul.f32 %v1142, %v1136
    %v1145 = vmul.f32 %v1143, %v1131
    %v1146 = vmul.f32 %v1144, %v1136
    %v1147 = vadd.f32 %v1131, %v1145
    %v1148 = vadd.f32 %v1136, %v1146
    %v1149 = vmul.f32 %v1147, 0.7978846
    %v1150 = vmul.f32 %v1148, 0.7978846
    %v1151 = vtanh.pop %v1149
    %v1152 = vtanh.pop %v1150
    %v1153 = vadd.f32 %v1151, 1.0
    %v1154 = vadd.f32 %v1152, 1.0
    %v1155 = vmul.f32 %v1139, %v1153
    %v1156 = vmul.f32 %v1140, %v1154
    %v1157 = vld [vmem:[%s13] sm:$0xff]
    %v1158 = vld [vmem:[%s13 + $0x8] sm:$0xff]
    %v1159 = vld [vmem:[%s13 + $0x10] sm:$0xff]
    %v1160 = vld [vmem:[%s13 + $0x18] sm:$0xff]
    %v1161 = vld [vmem:[%s13 + $0x20] sm:$0xff]
    %v1162 = vld [vmem:[%s13 + $0x28] sm:$0xff]
    %v1163 = vld [vmem:[%s13 + $0x30] sm:$0xff]
    %v1164 = vld [vmem:[%s13 + $0x38] sm:$0xff]
    %v1165 = vld [vmem:[%s13 + $0x40] sm:$0xff]
    %v1166 = vld [vmem:[%s13 + $0x48] sm:$0xff]
    %v1167 = vld [vmem:[%s13 + $0x50] sm:$0xff]
    %v1168 = vld [vmem:[%s13 + $0x58] sm:$0xff]
    %v1169 = vld [vmem:[%s13 + $0x60] sm:$0xff]
    %v1170 = vld [vmem:[%s13 + $0x68] sm:$0xff]
    %v1171 = vld [vmem:[%s13 + $0x70] sm:$0xff]
    %v1172 = vld [vmem:[%s13 + $0x78] sm:$0xff]
    %v1173 = vld [vmem:[%s14] sm:$0x1]
    %v1174 = vlaneseq
    %v1175 = vshrl.u32 %v1174, 7
    %v1176 = vsub.s32 0, %v1175
    %v1177 = vrot.slane %v1173, %v1176
    %1178 = vmatprep.subr.mxu0 0.0
    %1179 = vmatpush1.msra.mxu0 %v1157
    %1180 = vmatprep.subr.mxu0 0.0
    %1181 = vmatpush1.msra.mxu0 %v1158
    %1182 = vmatprep.subr.mxu0 0.0
    %1183 = vmatpush1.msra.mxu0 %v1159
    %1184 = vmatprep.subr.mxu0 0.0
    %1185 = vmatpush1.msra.mxu0 %v1160
    %1186 = vmatprep.subr.mxu0 0.0
    %1187 = vmatpush1.msra.mxu0 %v1161
    %1188 = vmatprep.subr.mxu0 0.0
    %1189 = vmatpush1.msra.mxu0 %v1162
    %1190 = vmatprep.subr.mxu0 0.0
    %1191 = vmatpush1.msra.mxu0 %v1163
    %1192 = vmatprep.subr.mxu0 0.0
    %1193 = vmatpush1.msra.mxu0 %v1164
    %1194 = vmatprep.subr.mxu0 0.0
    %1195 = vmatpush1.msra.mxu0 %v1165
    %1196 = vmatprep.subr.mxu0 0.0
    %1197 = vmatpush1.msra.mxu0 %v1166
    %1198 = vmatprep.subr.mxu0 0.0
    %1199 = vmatpush1.msra.mxu0 %v1167
    %1200 = vmatprep.subr.mxu0 0.0
    %1201 = vmatpush1.msra.mxu0 %v1168
    %1202 = vmatprep.subr.mxu0 0.0
    %1203 = vmatpush1.msra.mxu0 %v1169
    %1204 = vmatprep.subr.mxu0 0.0
    %1205 = vmatpush1.msra.mxu0 %v1170
    %1206 = vmatprep.subr.mxu0 0.0
    %1207 = vmatpush1.msra.mxu0 %v1171
    %1208 = vmatprep.subr.mxu0 0.0
    %1209 = vmatpush1.msra.mxu0 %v1172
    %1210 = vmatprep.subr.mxu0 0.0
    %1211 = vmatpush1.msra.mxu0 0.0
    %1212 = vmatprep.subr.mxu0 0.0
    %1213 = vmatpush1.msra.mxu0 0.0
    %1214 = vmatprep.subr.mxu0 0.0
    %1215 = vmatpush1.msra.mxu0 0.0
    %1216 = vmatprep.subr.mxu0 0.0
    %1217 = vmatpush1.msra.mxu0 0.0
    %1218 = vmatprep.subr.mxu0 0.0
    %1219 = vmatpush1.msra.mxu0 0.0
    %1220 = vmatprep.subr.mxu0 0.0
    %1221 = vmatpush1.msra.mxu0 0.0
    %1222 = vmatprep.subr.mxu0 0.0
    %1223 = vmatpush1.msra.mxu0 0.0
    %1224 = vmatprep.subr.mxu0 0.0
    %1225 = vmatpush1.msra.mxu0 0.0
    %1226 = vmatprep.subr.mxu0 0.0
    %1227 = vmatpush1.msra.mxu0 0.0
    %1228 = vmatprep.subr.mxu0 0.0
    %1229 = vmatpush1.msra.mxu0 0.0
    %1230 = vmatprep.subr.mxu0 0.0
    %1231 = vmatpush1.msra.mxu0 0.0
    %1232 = vmatprep.subr.mxu0 0.0
    %1233 = vmatpush1.msra.mxu0 0.0
    %1234 = vmatprep.subr.mxu0 0.0
    %1235 = vmatpush1.msra.mxu0 0.0
    %1236 = vmatprep.subr.mxu0 0.0
    %1237 = vmatpush1.msra.mxu0 0.0
    %1238 = vmatprep.subr.mxu0 0.0
    %1239 = vmatpush1.msra.mxu0 0.0
    %1240 = vmatprep.subr.mxu0 0.0
    %1241 = vmatpush1.msra.mxu0 0.0
    %1242 = vmatprep.mubr.f32.mxu0 0.0
    %1243 = vmatmul.mubr.f32.gmra.mrb[0].mxu0 %v1155
    %v1244 = vpop.f32.mrb[0].mxu0
    %v1245 = vadd.f32 %v1177, %v1244
    %v1246 = vpop.f32.mrb[0].mxu0
    %1247 = vmatprep.mubr.f32.mxu0 0.0
    %1248 = vmatmul.mubr.f32.gmra.mrb[0].mxu0 %v1156
    %v1249 = vpop.f32.mrb[0].mxu0
    %v1250 = vadd.f32 %v1177, %v1249
    %v1251 = vpop.f32.mrb[0].mxu0
    %1252 = vdwg.mxu0
    %v1253 = vadd.f32 %v1007, %v1245
    %v1254 = vadd.f32 %v1008, %v1250
    %v1255 = vld [vmem:[%s3 + $0x1] sm:$0x1]
    %v1256 = vld [vmem:[%s4 + $0x1] sm:$0x1]
    %v1257 = vsel %vm109, %v1253, 0.0
    %1258 = vadd.xlane.f32.xlu0 %v1257
    %v1259 = vpop.xlane.xlu0 %1258
    %v1260 = vsel %vm109, %v1254, 0.0
    %1261 = vadd.xlane.f32.xlu0 %v1260
    %v1262 = vpop.xlane.xlu0 %1261
    %v1263 = vmul.f32 %v1259, %v116
    %v1264 = vmul.f32 %v1262, %v116
    %v1265 = vsub.f32 %v1253, %v1263
    %v1266 = vsub.f32 %v1254, %v1264
    %v1267 = vmul.f32 %v1265, %v1265
    %v1268 = vmul.f32 %v1266, %v1266
    %v1269 = vsel %vm109, %v1267, 0.0
    %1270 = vadd.xlane.f32.xlu0 %v1269
    %v1271 = vpop.xlane.xlu0 %1270
    %v1272 = vsel %vm109, %v1268, 0.0
    %1273 = vadd.xlane.f32.xlu0 %v1272
    %v1274 = vpop.xlane.xlu0 %1273
    %v1275 = vmul.f32 %v1271, %v116
    %v1276 = vmul.f32 %v1274, %v116
    %v1277 = vadd.f32 %v1275, 1e-05
    %v1278 = vadd.f32 %v1276, 1e-05
    %v1279 = vrsqrt.pop %v1277
    %v1280 = vrsqrt.pop %v1278
    %v1281 = vmul.f32 %v1265, %v1279
    %v1282 = vmul.f32 %v1266, %v1280
    %v1283 = vlaneseq
    %v1284 = vshrl.u32 %v1283, 7
    %v1285 = vsub.s32 0, %v1284
    %v1286 = vrot.slane %v1255, %v1285
    %v1287 = vmul.f32 %v1281, %v1286
    %v1288 = vmul.f32 %v1282, %v1286
    %v1289 = vlaneseq
    %v1290 = vshrl.u32 %v1289, 7
    %v1291 = vsub.s32 0, %v1290
    %v1292 = vrot.slane %v1256, %v1291
    %v1293 = vadd.f32 %v1287, %v1292
    %v1294 = vadd.f32 %v1288, %v1292
    %s1295 = scalar_lea.vmem %s5, 32
    %v1296 = vld [vmem:[%s1295] sm:$0xff]
    %v1297 = vld [vmem:[%s1295 + $0x8] sm:$0xff]
    %v1298 = vld [vmem:[%s1295 + $0x10] sm:$0xff]
    %v1299 = vld [vmem:[%s1295 + $0x18] sm:$0xff]
    %v1300 = vld [vmem:[%s6 + $0x1] sm:$0x1]
    %v1301 = vlaneseq
    %v1302 = vshrl.u32 %v1301, 7
    %v1303 = vsub.s32 0, %v1302
    %v1304 = vrot.slane %v1300, %v1303
    %v1306 = vsel %vm109, %v1293, 0
    %v1309 = vsel %vm109, %v1294, 0
    %1311 = vmatprep.subr.mxu0 0.0
    %1312 = vmatpush1.msra.mxu0 %v1296
    %1313 = vmatprep.subr.mxu0 0.0
    %1314 = vmatpush1.msra.mxu0 %v1297
    %1315 = vmatprep.subr.mxu0 0.0
    %1316 = vmatpush1.msra.mxu0 %v1298
    %1317 = vmatprep.subr.mxu0 0.0
    %1318 = vmatpush1.msra.mxu0 %v1299
    %1319 = vmatprep.subr.mxu0 0.0
    %1320 = vmatpush1.msra.mxu0 0.0
    %1321 = vmatprep.subr.mxu0 0.0
    %1322 = vmatpush1.msra.mxu0 0.0
    %1323 = vmatprep.subr.mxu0 0.0
    %1324 = vmatpush1.msra.mxu0 0.0
    %1325 = vmatprep.subr.mxu0 0.0
    %1326 = vmatpush1.msra.mxu0 0.0
    %1327 = vmatprep.subr.mxu0 0.0
    %1328 = vmatpush1.msra.mxu0 0.0
    %1329 = vmatprep.subr.mxu0 0.0
    %1330 = vmatpush1.msra.mxu0 0.0
    %1331 = vmatprep.subr.mxu0 0.0
    %1332 = vmatpush1.msra.mxu0 0.0
    %1333 = vmatprep.subr.mxu0 0.0
    %1334 = vmatpush1.msra.mxu0 0.0
    %1335 = vmatprep.subr.mxu0 0.0
    %1336 = vmatpush1.msra.mxu0 0.0
    %1337 = vmatprep.subr.mxu0 0.0
    %1338 = vmatpush1.msra.mxu0 0.0
    %1339 = vmatprep.subr.mxu0 0.0
    %1340 = vmatpush1.msra.mxu0 0.0
    %1341 = vmatprep.subr.mxu0 0.0
    %1342 = vmatpush1.msra.mxu0 0.0
    %1343 = vmatprep.subr.mxu0 0.0
    %1344 = vmatpush1.msra.mxu0 0.0
    %1345 = vmatprep.subr.mxu0 0.0
    %1346 = vmatpush1.msra.mxu0 0.0
    %1347 = vmatprep.subr.mxu0 0.0
    %1348 = vmatpush1.msra.mxu0 0.0
    %1349 = vmatprep.subr.mxu0 0.0
    %1350 = vmatpush1.msra.mxu0 0.0
    %1351 = vmatprep.subr.mxu0 0.0
    %1352 = vmatpush1.msra.mxu0 0.0
    %1353 = vmatprep.subr.mxu0 0.0
    %1354 = vmatpush1.msra.mxu0 0.0
    %1355 = vmatprep.subr.mxu0 0.0
    %1356 = vmatpush1.msra.mxu0 0.0
    %1357 = vmatprep.subr.mxu0 0.0
    %1358 = vmatpush1.msra.mxu0 0.0
    %1359 = vmatprep.subr.mxu0 0.0
    %1360 = vmatpush1.msra.mxu0 0.0
    %1361 = vmatprep.subr.mxu0 0.0
    %1362 = vmatpush1.msra.mxu0 0.0
    %1363 = vmatprep.subr.mxu0 0.0
    %1364 = vmatpush1.msra.mxu0 0.0
    %1365 = vmatprep.subr.mxu0 0.0
    %1366 = vmatpush1.msra.mxu0 0.0
    %1367 = vmatprep.subr.mxu0 0.0
    %1368 = vmatpush1.msra.mxu0 0.0
    %1369 = vmatprep.subr.mxu0 0.0
    %1370 = vmatpush1.msra.mxu0 0.0
    %1371 = vmatprep.subr.mxu0 0.0
    %1372 = vmatpush1.msra.mxu0 0.0
    %1373 = vmatprep.subr.mxu0 0.0
    %1374 = vmatpush1.msra.mxu0 0.0
    %1375 = vmatprep.mubr.f32.mxu0 0.0
    %1376 = vmatmul.mubr.f32.gmra.mrb[0].mxu0 %v1306
    %v1377 = vpop.f32.mrb[0].mxu0
    %v1378 = vadd.f32 %v1304, %v1377
    %v1379 = vpop.f32.mrb[0].mxu0
    %1380 = vmatprep.mubr.f32.mxu0 0.0
    %1381 = vmatmul.mubr.f32.gmra.mrb[0].mxu0 %v1309
    %v1382 = vpop.f32.mrb[0].mxu0
    %v1383 = vadd.f32 %v1304, %v1382
    %v1384 = vpop.f32.mrb[0].mxu0
    %1385 = vdwg.mxu0
    %1387 = vrot.lane.b32.xlu0 %v1378, 96
    %v1388 = vpop.permute.xlu0 %1387
    %v1389 = vsel %vm242, %v1378, 0
    %v1391 = vsel %vm242, %v1388, 0
    %1393 = vmatprep.subr.mxu0 0.0
    %1394 = vmatpush1.xpose.msra.mxu0 %v1391
    %1395 = vmatprep.subr.mxu0 0.0
    %1396 = vmatpush1.xpose.msra.mxu0 0.0
    %1397 = vmatprep.subr.mxu0 0.0
    %1398 = vmatpush1.xpose.msra.mxu0 0.0
    %1399 = vmatprep.subr.mxu0 0.0
    %1400 = vmatpush1.xpose.msra.mxu0 0.0
    %1401 = vmatprep.subr.mxu0 0.0
    %1402 = vmatpush1.xpose.msra.mxu0 0.0
    %1403 = vmatprep.subr.mxu0 0.0
    %1404 = vmatpush1.xpose.msra.mxu0 0.0
    %1405 = vmatprep.subr.mxu0 0.0
    %1406 = vmatpush1.xpose.msra.mxu0 0.0
    %1407 = vmatprep.subr.mxu0 0.0
    %1408 = vmatpush1.xpose.msra.mxu0 0.0
    %1409 = vmatprep.subr.mxu0 0.0
    %1410 = vmatpush1.xpose.msra.mxu0 0.0
    %1411 = vmatprep.subr.mxu0 0.0
    %1412 = vmatpush1.xpose.msra.mxu0 0.0
    %1413 = vmatprep.subr.mxu0 0.0
    %1414 = vmatpush1.xpose.msra.mxu0 0.0
    %1415 = vmatprep.subr.mxu0 0.0
    %1416 = vmatpush1.xpose.msra.mxu0 0.0
    %1417 = vmatprep.subr.mxu0 0.0
    %1418 = vmatpush1.xpose.msra.mxu0 0.0
    %1419 = vmatprep.subr.mxu0 0.0
    %1420 = vmatpush1.xpose.msra.mxu0 0.0
    %1421 = vmatprep.subr.mxu0 0.0
    %1422 = vmatpush1.xpose.msra.mxu0 0.0
    %1423 = vmatprep.subr.mxu0 0.0
    %1424 = vmatpush1.xpose.msra.mxu0 0.0
    %1425 = vmatprep.subr.mxu0 0.0
    %1426 = vmatpush1.xpose.msra.mxu0 0.0
    %1427 = vmatprep.subr.mxu0 0.0
    %1428 = vmatpush1.xpose.msra.mxu0 0.0
    %1429 = vmatprep.subr.mxu0 0.0
    %1430 = vmatpush1.xpose.msra.mxu0 0.0
    %1431 = vmatprep.subr.mxu0 0.0
    %1432 = vmatpush1.xpose.msra.mxu0 0.0
    %1433 = vmatprep.subr.mxu0 0.0
    %1434 = vmatpush1.xpose.msra.mxu0 0.0
    %1435 = vmatprep.subr.mxu0 0.0
    %1436 = vmatpush1.xpose.msra.mxu0 0.0
    %1437 = vmatprep.subr.mxu0 0.0
    %1438 = vmatpush1.xpose.msra.mxu0 0.0
    %1439 = vmatprep.subr.mxu0 0.0
    %1440 = vmatpush1.xpose.msra.mxu0 0.0
    %1441 = vmatprep.subr.mxu0 0.0
    %1442 = vmatpush1.xpose.msra.mxu0 0.0
    %1443 = vmatprep.subr.mxu0 0.0
    %1444 = vmatpush1.xpose.msra.mxu0 0.0
    %1445 = vmatprep.subr.mxu0 0.0
    %1446 = vmatpush1.xpose.msra.mxu0 0.0
    %1447 = vmatprep.subr.mxu0 0.0
    %1448 = vmatpush1.xpose.msra.mxu0 0.0
    %1449 = vmatprep.subr.mxu0 0.0
    %1450 = vmatpush1.xpose.msra.mxu0 0.0
    %1451 = vmatprep.subr.mxu0 0.0
    %1452 = vmatpush1.xpose.msra.mxu0 0.0
    %1453 = vmatprep.subr.mxu0 0.0
    %1454 = vmatpush1.xpose.msra.mxu0 0.0
    %1455 = vmatprep.subr.mxu0 0.0
    %1456 = vmatpush1.xpose.msra.mxu0 0.0
    %1457 = vmatprep.mubr.f32.mxu0 0.0
    %1458 = vmatmul.mubr.f32.gmra.mrb[0].mxu0 %v1389
    %v1459 = vpop.f32.mrb[0].mxu0
    %v1460 = vadd.f32 0.0, %v1459
    %v1461 = vpop.f32.mrb[0].mxu0
    %1462 = vdwg.mxu0
    %1464 = vrot.lane.b32.xlu0 %v1383, 96
    %v1465 = vpop.permute.xlu0 %1464
    %v1466 = vsel %vm242, %v1383, 0
    %v1468 = vsel %vm242, %v1465, 0
    %1470 = vmatprep.subr.mxu0 0.0
    %1471 = vmatpush1.xpose.msra.mxu0 %v1468
    %1472 = vmatprep.subr.mxu0 0.0
    %1473 = vmatpush1.xpose.msra.mxu0 0.0
    %1474 = vmatprep.subr.mxu0 0.0
    %1475 = vmatpush1.xpose.msra.mxu0 0.0
    %1476 = vmatprep.subr.mxu0 0.0
    %1477 = vmatpush1.xpose.msra.mxu0 0.0
    %1478 = vmatprep.subr.mxu0 0.0
    %1479 = vmatpush1.xpose.msra.mxu0 0.0
    %1480 = vmatprep.subr.mxu0 0.0
    %1481 = vmatpush1.xpose.msra.mxu0 0.0
    %1482 = vmatprep.subr.mxu0 0.0
    %1483 = vmatpush1.xpose.msra.mxu0 0.0
    %1484 = vmatprep.subr.mxu0 0.0
    %1485 = vmatpush1.xpose.msra.mxu0 0.0
    %1486 = vmatprep.subr.mxu0 0.0
    %1487 = vmatpush1.xpose.msra.mxu0 0.0
    %1488 = vmatprep.subr.mxu0 0.0
    %1489 = vmatpush1.xpose.msra.mxu0 0.0
    %1490 = vmatprep.subr.mxu0 0.0
    %1491 = vmatpush1.xpose.msra.mxu0 0.0
    %1492 = vmatprep.subr.mxu0 0.0
    %1493 = vmatpush1.xpose.msra.mxu0 0.0
    %1494 = vmatprep.subr.mxu0 0.0
    %1495 = vmatpush1.xpose.msra.mxu0 0.0
    %1496 = vmatprep.subr.mxu0 0.0
    %1497 = vmatpush1.xpose.msra.mxu0 0.0
    %1498 = vmatprep.subr.mxu0 0.0
    %1499 = vmatpush1.xpose.msra.mxu0 0.0
    %1500 = vmatprep.subr.mxu0 0.0
    %1501 = vmatpush1.xpose.msra.mxu0 0.0
    %1502 = vmatprep.subr.mxu0 0.0
    %1503 = vmatpush1.xpose.msra.mxu0 0.0
    %1504 = vmatprep.subr.mxu0 0.0
    %1505 = vmatpush1.xpose.msra.mxu0 0.0
    %1506 = vmatprep.subr.mxu0 0.0
    %1507 = vmatpush1.xpose.msra.mxu0 0.0
    %1508 = vmatprep.subr.mxu0 0.0
    %1509 = vmatpush1.xpose.msra.mxu0 0.0
    %1510 = vmatprep.subr.mxu0 0.0
    %1511 = vmatpush1.xpose.msra.mxu0 0.0
    %1512 = vmatprep.subr.mxu0 0.0
    %1513 = vmatpush1.xpose.msra.mxu0 0.0
    %1514 = vmatprep.subr.mxu0 0.0
    %1515 = vmatpush1.xpose.msra.mxu0 0.0
    %1516 = vmatprep.subr.mxu0 0.0
    %1517 = vmatpush1.xpose.msra.mxu0 0.0
    %1518 = vmatprep.subr.mxu0 0.0
    %1519 = vmatpush1.xpose.msra.mxu0 0.0
    %1520 = vmatprep.subr.mxu0 0.0
    %1521 = vmatpush1.xpose.msra.mxu0 0.0
    %1522 = vmatprep.subr.mxu0 0.0
    %1523 = vmatpush1.xpose.msra.mxu0 0.0
    %1524 = vmatprep.subr.mxu0 0.0
    %1525 = vmatpush1.xpose.msra.mxu0 0.0
    %1526 = vmatprep.subr.mxu0 0.0
    %1527 = vmatpush1.xpose.msra.mxu0 0.0
    %1528 = vmatprep.subr.mxu0 0.0
    %1529 = vmatpush1.xpose.msra.mxu0 0.0
    %1530 = vmatprep.subr.mxu0 0.0
    %1531 = vmatpush1.xpose.msra.mxu0 0.0
    %1532 = vmatprep.subr.mxu0 0.0
    %1533 = vmatpush1.xpose.msra.mxu0 0.0
    %1534 = vmatprep.mubr.f32.mxu0 0.0
    %1535 = vmatmul.mubr.f32.gmra.mrb[0].mxu0 %v1466
    %v1536 = vpop.f32.mrb[0].mxu0
    %v1537 = vadd.f32 0.0, %v1536
    %v1538 = vpop.f32.mrb[0].mxu0
    %1539 = vdwg.mxu0
    %v1540 = vmul.f32 %v1460, 0.25
    %v1541 = vmul.f32 %v1537, 0.25
    %v1542 = vadd.f32 %v1540, %v105
    %v1543 = vadd.f32 %v1541, %v106
    %v1544 = vsel %vm398, %v1542, -inf
    %1545 = vmax.xlane.f32.xlu0 %v1544
    %v1546 = vpop.xlane.xlu0 %1545
    %v1547 = vsel %vm398, %v1543, -inf
    %1548 = vmax.xlane.f32.xlu0 %v1547
    %v1549 = vpop.xlane.xlu0 %1548
    %v1550 = vsub.f32 %v1542, %v1546
    %v1551 = vsub.f32 %v1543, %v1549
    %v1552 = vmul.f32 %v1550, 1.442695
    %v1553 = vpow.pop %v1552
    %v1554 = vmul.f32 %v1551, 1.442695
    %v1555 = vpow.pop %v1554
    %v1556 = vsel %vm398, %v1553, 0.0
    %1557 = vadd.xlane.f32.xlu0 %v1556
    %v1558 = vpop.xlane.xlu0 %1557
    %v1559 = vsel %vm398, %v1555, 0.0
    %1560 = vadd.xlane.f32.xlu0 %v1559
    %v1561 = vpop.xlane.xlu0 %1560
    %v1562 = vrcp.pop %v1558
    %v1563 = vrcp.pop %v1561
    %v1564 = vmul.f32 %v1553, %v1562
    %v1565 = vmul.f32 %v1555, %v1563
    %1566 = vrot.lane.b32.xlu0 %v1378, 64
    %v1567 = vpop.permute.xlu0 %1566
    %v1570 = vsel %vm398, %v1564, 0
    %1572 = vmatprep.subr.mxu0 0.0
    %1573 = vmatpush1.msra.mxu0 %v1567
    %1574 = vmatprep.subr.mxu0 0.0
    %1575 = vmatpush1.msra.mxu0 0.0
    %1576 = vmatprep.subr.mxu0 0.0
    %1577 = vmatpush1.msra.mxu0 0.0
    %1578 = vmatprep.subr.mxu0 0.0
    %1579 = vmatpush1.msra.mxu0 0.0
    %1580 = vmatprep.subr.mxu0 0.0
    %1581 = vmatpush1.msra.mxu0 0.0
    %1582 = vmatprep.subr.mxu0 0.0
    %1583 = vmatpush1.msra.mxu0 0.0
    %1584 = vmatprep.subr.mxu0 0.0
    %1585 = vmatpush1.msra.mxu0 0.0
    %1586 = vmatprep.subr.mxu0 0.0
    %1587 = vmatpush1.msra.mxu0 0.0
    %1588 = vmatprep.subr.mxu0 0.0
    %1589 = vmatpush1.msra.mxu0 0.0
    %1590 = vmatprep.subr.mxu0 0.0
    %1591 = vmatpush1.msra.mxu0 0.0
    %1592 = vmatprep.subr.mxu0 0.0
    %1593 = vmatpush1.msra.mxu0 0.0
    %1594 = vmatprep.subr.mxu0 0.0
    %1595 = vmatpush1.msra.mxu0 0.0
    %1596 = vmatprep.subr.mxu0 0.0
    %1597 = vmatpush1.msra.mxu0 0.0
    %1598 = vmatprep.subr.mxu0 0.0
    %1599 = vmatpush1.msra.mxu0 0.0
    %1600 = vmatprep.subr.mxu0 0.0
    %1601 = vmatpush1.msra.mxu0 0.0
    %1602 = vmatprep.subr.mxu0 0.0
    %1603 = vmatpush1.msra.mxu0 0.0
    %1604 = vmatprep.subr.mxu0 0.0
    %1605 = vmatpush1.msra.mxu0 0.0
    %1606 = vmatprep.subr.mxu0 0.0
    %1607 = vmatpush1.msra.mxu0 0.0
    %1608 = vmatprep.subr.mxu0 0.0
    %1609 = vmatpush1.msra.mxu0 0.0
    %1610 = vmatprep.subr.mxu0 0.0
    %1611 = vmatpush1.msra.mxu0 0.0
    %1612 = vmatprep.subr.mxu0 0.0
    %1613 = vmatpush1.msra.mxu0 0.0
    %1614 = vmatprep.subr.mxu0 0.0
    %1615 = vmatpush1.msra.mxu0 0.0
    %1616 = vmatprep.subr.mxu0 0.0
    %1617 = vmatpush1.msra.mxu0 0.0
    %1618 = vmatprep.subr.mxu0 0.0
    %1619 = vmatpush1.msra.mxu0 0.0
    %1620 = vmatprep.subr.mxu0 0.0
    %1621 = vmatpush1.msra.mxu0 0.0
    %1622 = vmatprep.subr.mxu0 0.0
    %1623 = vmatpush1.msra.mxu0 0.0
    %1624 = vmatprep.subr.mxu0 0.0
    %1625 = vmatpush1.msra.mxu0 0.0
    %1626 = vmatprep.subr.mxu0 0.0
    %1627 = vmatpush1.msra.mxu0 0.0
    %1628 = vmatprep.subr.mxu0 0.0
    %1629 = vmatpush1.msra.mxu0 0.0
    %1630 = vmatprep.subr.mxu0 0.0
    %1631 = vmatpush1.msra.mxu0 0.0
    %1632 = vmatprep.subr.mxu0 0.0
    %1633 = vmatpush1.msra.mxu0 0.0
    %1634 = vmatprep.subr.mxu0 0.0
    %1635 = vmatpush1.msra.mxu0 0.0
    %1636 = vmatprep.mubr.f32.mxu0 0.0
    %1637 = vmatmul.mubr.f32.gmra.mrb[0].mxu0 %v1570
    %v1638 = vpop.f32.mrb[0].mxu0
    %v1639 = vadd.f32 0.0, %v1638
    %v1640 = vpop.f32.mrb[0].mxu0
    %1641 = vdwg.mxu0
    %1642 = vrot.lane.b32.xlu0 %v1383, 64
    %v1643 = vpop.permute.xlu0 %1642
    %v1646 = vsel %vm398, %v1565, 0
    %1648 = vmatprep.subr.mxu0 0.0
    %1649 = vmatpush1.msra.mxu0 %v1643
    %1650 = vmatprep.subr.mxu0 0.0
    %1651 = vmatpush1.msra.mxu0 0.0
    %1652 = vmatprep.subr.mxu0 0.0
    %1653 = vmatpush1.msra.mxu0 0.0
    %1654 = vmatprep.subr.mxu0 0.0
    %1655 = vmatpush1.msra.mxu0 0.0
    %1656 = vmatprep.subr.mxu0 0.0
    %1657 = vmatpush1.msra.mxu0 0.0
    %1658 = vmatprep.subr.mxu0 0.0
    %1659 = vmatpush1.msra.mxu0 0.0
    %1660 = vmatprep.subr.mxu0 0.0
    %1661 = vmatpush1.msra.mxu0 0.0
    %1662 = vmatprep.subr.mxu0 0.0
    %1663 = vmatpush1.msra.mxu0 0.0
    %1664 = vmatprep.subr.mxu0 0.0
    %1665 = vmatpush1.msra.mxu0 0.0
    %1666 = vmatprep.subr.mxu0 0.0
    %1667 = vmatpush1.msra.mxu0 0.0
    %1668 = vmatprep.subr.mxu0 0.0
    %1669 = vmatpush1.msra.mxu0 0.0
    %1670 = vmatprep.subr.mxu0 0.0
    %1671 = vmatpush1.msra.mxu0 0.0
    %1672 = vmatprep.subr.mxu0 0.0
    %1673 = vmatpush1.msra.mxu0 0.0
    %1674 = vmatprep.subr.mxu0 0.0
    %1675 = vmatpush1.msra.mxu0 0.0
    %1676 = vmatprep.subr.mxu0 0.0
    %1677 = vmatpush1.msra.mxu0 0.0
    %1678 = vmatprep.subr.mxu0 0.0
    %1679 = vmatpush1.msra.mxu0 0.0
    %1680 = vmatprep.subr.mxu0 0.0
    %1681 = vmatpush1.msra.mxu0 0.0
    %1682 = vmatprep.subr.mxu0 0.0
    %1683 = vmatpush1.msra.mxu0 0.0
    %1684 = vmatprep.subr.mxu0 0.0
    %1685 = vmatpush1.msra.mxu0 0.0
    %1686 = vmatprep.subr.mxu0 0.0
    %1687 = vmatpush1.msra.mxu0 0.0
    %1688 = vmatprep.subr.mxu0 0.0
    %1689 = vmatpush1.msra.mxu0 0.0
    %1690 = vmatprep.subr.mxu0 0.0
    %1691 = vmatpush1.msra.mxu0 0.0
    %1692 = vmatprep.subr.mxu0 0.0
    %1693 = vmatpush1.msra.mxu0 0.0
    %1694 = vmatprep.subr.mxu0 0.0
    %1695 = vmatpush1.msra.mxu0 0.0
    %1696 = vmatprep.subr.mxu0 0.0
    %1697 = vmatpush1.msra.mxu0 0.0
    %1698 = vmatprep.subr.mxu0 0.0
    %1699 = vmatpush1.msra.mxu0 0.0
    %1700 = vmatprep.subr.mxu0 0.0
    %1701 = vmatpush1.msra.mxu0 0.0
    %1702 = vmatprep.subr.mxu0 0.0
    %1703 = vmatpush1.msra.mxu0 0.0
    %1704 = vmatprep.subr.mxu0 0.0
    %1705 = vmatpush1.msra.mxu0 0.0
    %1706 = vmatprep.subr.mxu0 0.0
    %1707 = vmatpush1.msra.mxu0 0.0
    %1708 = vmatprep.subr.mxu0 0.0
    %1709 = vmatpush1.msra.mxu0 0.0
    %1710 = vmatprep.subr.mxu0 0.0
    %1711 = vmatpush1.msra.mxu0 0.0
    %1712 = vmatprep.mubr.f32.mxu0 0.0
    %1713 = vmatmul.mubr.f32.gmra.mrb[0].mxu0 %v1646
    %v1714 = vpop.f32.mrb[0].mxu0
    %v1715 = vadd.f32 0.0, %v1714
    %v1716 = vpop.f32.mrb[0].mxu0
    %1717 = vdwg.mxu0
    %1718 = vrot.lane.b32.xlu0 %v1378, 112
    %v1719 = vpop.permute.xlu0 %1718
    %1720 = vrot.lane.b32.xlu0 %v1378, 80
    %v1721 = vpop.permute.xlu0 %1720
    %v1722 = vsel %vm242, %v1719, 0
    %v1724 = vsel %vm242, %v1721, 0
    %1726 = vmatprep.subr.mxu0 0.0
    %1727 = vmatpush1.xpose.msra.mxu0 %v1724
    %1728 = vmatprep.subr.mxu0 0.0
    %1729 = vmatpush1.xpose.msra.mxu0 0.0
    %1730 = vmatprep.subr.mxu0 0.0
    %1731 = vmatpush1.xpose.msra.mxu0 0.0
    %1732 = vmatprep.subr.mxu0 0.0
    %1733 = vmatpush1.xpose.msra.mxu0 0.0
    %1734 = vmatprep.subr.mxu0 0.0
    %1735 = vmatpush1.xpose.msra.mxu0 0.0
    %1736 = vmatprep.subr.mxu0 0.0
    %1737 = vmatpush1.xpose.msra.mxu0 0.0
    %1738 = vmatprep.subr.mxu0 0.0
    %1739 = vmatpush1.xpose.msra.mxu0 0.0
    %1740 = vmatprep.subr.mxu0 0.0
    %1741 = vmatpush1.xpose.msra.mxu0 0.0
    %1742 = vmatprep.subr.mxu0 0.0
    %1743 = vmatpush1.xpose.msra.mxu0 0.0
    %1744 = vmatprep.subr.mxu0 0.0
    %1745 = vmatpush1.xpose.msra.mxu0 0.0
    %1746 = vmatprep.subr.mxu0 0.0
    %1747 = vmatpush1.xpose.msra.mxu0 0.0
    %1748 = vmatprep.subr.mxu0 0.0
    %1749 = vmatpush1.xpose.msra.mxu0 0.0
    %1750 = vmatprep.subr.mxu0 0.0
    %1751 = vmatpush1.xpose.msra.mxu0 0.0
    %1752 = vmatprep.subr.mxu0 0.0
    %1753 = vmatpush1.xpose.msra.mxu0 0.0
    %1754 = vmatprep.subr.mxu0 0.0
    %1755 = vmatpush1.xpose.msra.mxu0 0.0
    %1756 = vmatprep.subr.mxu0 0.0
    %1757 = vmatpush1.xpose.msra.mxu0 0.0
    %1758 = vmatprep.subr.mxu0 0.0
    %1759 = vmatpush1.xpose.msra.mxu0 0.0
    %1760 = vmatprep.subr.mxu0 0.0
    %1761 = vmatpush1.xpose.msra.mxu0 0.0
    %1762 = vmatprep.subr.mxu0 0.0
    %1763 = vmatpush1.xpose.msra.mxu0 0.0
    %1764 = vmatprep.subr.mxu0 0.0
    %1765 = vmatpush1.xpose.msra.mxu0 0.0
    %1766 = vmatprep.subr.mxu0 0.0
    %1767 = vmatpush1.xpose.msra.mxu0 0.0
    %1768 = vmatprep.subr.mxu0 0.0
    %1769 = vmatpush1.xpose.msra.mxu0 0.0
    %1770 = vmatprep.subr.mxu0 0.0
    %1771 = vmatpush1.xpose.msra.mxu0 0.0
    %1772 = vmatprep.subr.mxu0 0.0
    %1773 = vmatpush1.xpose.msra.mxu0 0.0
    %1774 = vmatprep.subr.mxu0 0.0
    %1775 = vmatpush1.xpose.msra.mxu0 0.0
    %1776 = vmatprep.subr.mxu0 0.0
    %1777 = vmatpush1.xpose.msra.mxu0 0.0
    %1778 = vmatprep.subr.mxu0 0.0
    %1779 = vmatpush1.xpose.msra.mxu0 0.0
    %1780 = vmatprep.subr.mxu0 0.0
    %1781 = vmatpush1.xpose.msra.mxu0 0.0
    %1782 = vmatprep.subr.mxu0 0.0
    %1783 = vmatpush1.xpose.msra.mxu0 0.0
    %1784 = vmatprep.subr.mxu0 0.0
    %1785 = vmatpush1.xpose.msra.mxu0 0.0
    %1786 = vmatprep.subr.mxu0 0.0
    %1787 = vmatpush1.xpose.msra.mxu0 0.0
    %1788 = vmatprep.subr.mxu0 0.0
    %1789 = vmatpush1.xpose.msra.mxu0 0.0
    %1790 = vmatprep.mubr.f32.mxu0 0.0
    %1791 = vmatmul.mubr.f32.gmra.mrb[0].mxu0 %v1722
    %v1792 = vpop.f32.mrb[0].mxu0
    %v1793 = vadd.f32 0.0, %v1792
    %v1794 = vpop.f32.mrb[0].mxu0
    %1795 = vdwg.mxu0
    %1796 = vrot.lane.b32.xlu0 %v1383, 112
    %v1797 = vpop.permute.xlu0 %1796
    %1798 = vrot.lane.b32.xlu0 %v1383, 80
    %v1799 = vpop.permute.xlu0 %1798
    %v1800 = vsel %vm242, %v1797, 0
    %v1802 = vsel %vm242, %v1799, 0
    %1804 = vmatprep.subr.mxu0 0.0
    %1805 = vmatpush1.xpose.msra.mxu0 %v1802
    %1806 = vmatprep.subr.mxu0 0.0
    %1807 = vmatpush1.xpose.msra.mxu0 0.0
    %1808 = vmatprep.subr.mxu0 0.0
    %1809 = vmatpush1.xpose.msra.mxu0 0.0
    %1810 = vmatprep.subr.mxu0 0.0
    %1811 = vmatpush1.xpose.msra.mxu0 0.0
    %1812 = vmatprep.subr.mxu0 0.0
    %1813 = vmatpush1.xpose.msra.mxu0 0.0
    %1814 = vmatprep.subr.mxu0 0.0
    %1815 = vmatpush1.xpose.msra.mxu0 0.0
    %1816 = vmatprep.subr.mxu0 0.0
    %1817 = vmatpush1.xpose.msra.mxu0 0.0
    %1818 = vmatprep.subr.mxu0 0.0
    %1819 = vmatpush1.xpose.msra.mxu0 0.0
    %1820 = vmatprep.subr.mxu0 0.0
    %1821 = vmatpush1.xpose.msra.mxu0 0.0
    %1822 = vmatprep.subr.mxu0 0.0
    %1823 = vmatpush1.xpose.msra.mxu0 0.0
    %1824 = vmatprep.subr.mxu0 0.0
    %1825 = vmatpush1.xpose.msra.mxu0 0.0
    %1826 = vmatprep.subr.mxu0 0.0
    %1827 = vmatpush1.xpose.msra.mxu0 0.0
    %1828 = vmatprep.subr.mxu0 0.0
    %1829 = vmatpush1.xpose.msra.mxu0 0.0
    %1830 = vmatprep.subr.mxu0 0.0
    %1831 = vmatpush1.xpose.msra.mxu0 0.0
    %1832 = vmatprep.subr.mxu0 0.0
    %1833 = vmatpush1.xpose.msra.mxu0 0.0
    %1834 = vmatprep.subr.mxu0 0.0
    %1835 = vmatpush1.xpose.msra.mxu0 0.0
    %1836 = vmatprep.subr.mxu0 0.0
    %1837 = vmatpush1.xpose.msra.mxu0 0.0
    %1838 = vmatprep.subr.mxu0 0.0
    %1839 = vmatpush1.xpose.msra.mxu0 0.0
    %1840 = vmatprep.subr.mxu0 0.0
    %1841 = vmatpush1.xpose.msra.mxu0 0.0
    %1842 = vmatprep.subr.mxu0 0.0
    %1843 = vmatpush1.xpose.msra.mxu0 0.0
    %1844 = vmatprep.subr.mxu0 0.0
    %1845 = vmatpush1.xpose.msra.mxu0 0.0
    %1846 = vmatprep.subr.mxu0 0.0
    %1847 = vmatpush1.xpose.msra.mxu0 0.0
    %1848 = vmatprep.subr.mxu0 0.0
    %1849 = vmatpush1.xpose.msra.mxu0 0.0
    %1850 = vmatprep.subr.mxu0 0.0
    %1851 = vmatpush1.xpose.msra.mxu0 0.0
    %1852 = vmatprep.subr.mxu0 0.0
    %1853 = vmatpush1.xpose.msra.mxu0 0.0
    %1854 = vmatprep.subr.mxu0 0.0
    %1855 = vmatpush1.xpose.msra.mxu0 0.0
    %1856 = vmatprep.subr.mxu0 0.0
    %1857 = vmatpush1.xpose.msra.mxu0 0.0
    %1858 = vmatprep.subr.mxu0 0.0
    %1859 = vmatpush1.xpose.msra.mxu0 0.0
    %1860 = vmatprep.subr.mxu0 0.0
    %1861 = vmatpush1.xpose.msra.mxu0 0.0
    %1862 = vmatprep.subr.mxu0 0.0
    %1863 = vmatpush1.xpose.msra.mxu0 0.0
    %1864 = vmatprep.subr.mxu0 0.0
    %1865 = vmatpush1.xpose.msra.mxu0 0.0
    %1866 = vmatprep.subr.mxu0 0.0
    %1867 = vmatpush1.xpose.msra.mxu0 0.0
    %1868 = vmatprep.mubr.f32.mxu0 0.0
    %1869 = vmatmul.mubr.f32.gmra.mrb[0].mxu0 %v1800
    %v1870 = vpop.f32.mrb[0].mxu0
    %v1871 = vadd.f32 0.0, %v1870
    %v1872 = vpop.f32.mrb[0].mxu0
    %1873 = vdwg.mxu0
    %v1874 = vmul.f32 %v1793, 0.25
    %v1875 = vmul.f32 %v1871, 0.25
    %v1876 = vadd.f32 %v1874, %v105
    %v1877 = vadd.f32 %v1875, %v106
    %v1878 = vsel %vm398, %v1876, -inf
    %1879 = vmax.xlane.f32.xlu0 %v1878
    %v1880 = vpop.xlane.xlu0 %1879
    %v1881 = vsel %vm398, %v1877, -inf
    %1882 = vmax.xlane.f32.xlu0 %v1881
    %v1883 = vpop.xlane.xlu0 %1882
    %v1884 = vsub.f32 %v1876, %v1880
    %v1885 = vsub.f32 %v1877, %v1883
    %v1886 = vmul.f32 %v1884, 1.442695
    %v1887 = vpow.pop %v1886
    %v1888 = vmul.f32 %v1885, 1.442695
    %v1889 = vpow.pop %v1888
    %v1890 = vsel %vm398, %v1887, 0.0
    %1891 = vadd.xlane.f32.xlu0 %v1890
    %v1892 = vpop.xlane.xlu0 %1891
    %v1893 = vsel %vm398, %v1889, 0.0
    %1894 = vadd.xlane.f32.xlu0 %v1893
    %v1895 = vpop.xlane.xlu0 %1894
    %v1896 = vrcp.pop %v1892
    %v1897 = vrcp.pop %v1895
    %v1898 = vmul.f32 %v1887, %v1896
    %v1899 = vmul.f32 %v1889, %v1897
    %1900 = vrot.lane.b32.xlu0 %v1378, 48
    %v1901 = vpop.permute.xlu0 %1900
    %v1904 = vsel %vm398, %v1898, 0
    %1906 = vmatprep.subr.mxu0 0.0
    %1907 = vmatpush1.msra.mxu0 %v1901
    %1908 = vmatprep.subr.mxu0 0.0
    %1909 = vmatpush1.msra.mxu0 0.0
    %1910 = vmatprep.subr.mxu0 0.0
    %1911 = vmatpush1.msra.mxu0 0.0
    %1912 = vmatprep.subr.mxu0 0.0
    %1913 = vmatpush1.msra.mxu0 0.0
    %1914 = vmatprep.subr.mxu0 0.0
    %1915 = vmatpush1.msra.mxu0 0.0
    %1916 = vmatprep.subr.mxu0 0.0
    %1917 = vmatpush1.msra.mxu0 0.0
    %1918 = vmatprep.subr.mxu0 0.0
    %1919 = vmatpush1.msra.mxu0 0.0
    %1920 = vmatprep.subr.mxu0 0.0
    %1921 = vmatpush1.msra.mxu0 0.0
    %1922 = vmatprep.subr.mxu0 0.0
    %1923 = vmatpush1.msra.mxu0 0.0
    %1924 = vmatprep.subr.mxu0 0.0
    %1925 = vmatpush1.msra.mxu0 0.0
    %1926 = vmatprep.subr.mxu0 0.0
    %1927 = vmatpush1.msra.mxu0 0.0
    %1928 = vmatprep.subr.mxu0 0.0
    %1929 = vmatpush1.msra.mxu0 0.0
    %1930 = vmatprep.subr.mxu0 0.0
    %1931 = vmatpush1.msra.mxu0 0.0
    %1932 = vmatprep.subr.mxu0 0.0
    %1933 = vmatpush1.msra.mxu0 0.0
    %1934 = vmatprep.subr.mxu0 0.0
    %1935 = vmatpush1.msra.mxu0 0.0
    %1936 = vmatprep.subr.mxu0 0.0
    %1937 = vmatpush1.msra.mxu0 0.0
    %1938 = vmatprep.subr.mxu0 0.0
    %1939 = vmatpush1.msra.mxu0 0.0
    %1940 = vmatprep.subr.mxu0 0.0
    %1941 = vmatpush1.msra.mxu0 0.0
    %1942 = vmatprep.subr.mxu0 0.0
    %1943 = vmatpush1.msra.mxu0 0.0
    %1944 = vmatprep.subr.mxu0 0.0
    %1945 = vmatpush1.msra.mxu0 0.0
    %1946 = vmatprep.subr.mxu0 0.0
    %1947 = vmatpush1.msra.mxu0 0.0
    %1948 = vmatprep.subr.mxu0 0.0
    %1949 = vmatpush1.msra.mxu0 0.0
    %1950 = vmatprep.subr.mxu0 0.0
    %1951 = vmatpush1.msra.mxu0 0.0
    %1952 = vmatprep.subr.mxu0 0.0
    %1953 = vmatpush1.msra.mxu0 0.0
    %1954 = vmatprep.subr.mxu0 0.0
    %1955 = vmatpush1.msra.mxu0 0.0
    %1956 = vmatprep.subr.mxu0 0.0
    %1957 = vmatpush1.msra.mxu0 0.0
    %1958 = vmatprep.subr.mxu0 0.0
    %1959 = vmatpush1.msra.mxu0 0.0
    %1960 = vmatprep.subr.mxu0 0.0
    %1961 = vmatpush1.msra.mxu0 0.0
    %1962 = vmatprep.subr.mxu0 0.0
    %1963 = vmatpush1.msra.mxu0 0.0
    %1964 = vmatprep.subr.mxu0 0.0
    %1965 = vmatpush1.msra.mxu0 0.0
    %1966 = vmatprep.subr.mxu0 0.0
    %1967 = vmatpush1.msra.mxu0 0.0
    %1968 = vmatprep.subr.mxu0 0.0
    %1969 = vmatpush1.msra.mxu0 0.0
    %1970 = vmatprep.mubr.f32.mxu0 0.0
    %1971 = vmatmul.mubr.f32.gmra.mrb[0].mxu0 %v1904
    %v1972 = vpop.f32.mrb[0].mxu0
    %v1973 = vadd.f32 0.0, %v1972
    %v1974 = vpop.f32.mrb[0].mxu0
    %1975 = vdwg.mxu0
    %1976 = vrot.lane.b32.xlu0 %v1383, 48
    %v1977 = vpop.permute.xlu0 %1976
    %v1980 = vsel %vm398, %v1899, 0
    %1982 = vmatprep.subr.mxu0 0.0
    %1983 = vmatpush1.msra.mxu0 %v1977
    %1984 = vmatprep.subr.mxu0 0.0
    %1985 = vmatpush1.msra.mxu0 0.0
    %1986 = vmatprep.subr.mxu0 0.0
    %1987 = vmatpush1.msra.mxu0 0.0
    %1988 = vmatprep.subr.mxu0 0.0
    %1989 = vmatpush1.msra.mxu0 0.0
    %1990 = vmatprep.subr.mxu0 0.0
    %1991 = vmatpush1.msra.mxu0 0.0
    %1992 = vmatprep.subr.mxu0 0.0
    %1993 = vmatpush1.msra.mxu0 0.0
    %1994 = vmatprep.subr.mxu0 0.0
    %1995 = vmatpush1.msra.mxu0 0.0
    %1996 = vmatprep.subr.mxu0 0.0
    %1997 = vmatpush1.msra.mxu0 0.0
    %1998 = vmatprep.subr.mxu0 0.0
    %1999 = vmatpush1.msra.mxu0 0.0
    %2000 = vmatprep.subr.mxu0 0.0
    %2001 = vmatpush1.msra.mxu0 0.0
    %2002 = vmatprep.subr.mxu0 0.0
    %2003 = vmatpush1.msra.mxu0 0.0
    %2004 = vmatprep.subr.mxu0 0.0
    %2005 = vmatpush1.msra.mxu0 0.0
    %2006 = vmatprep.subr.mxu0 0.0
    %2007 = vmatpush1.msra.mxu0 0.0
    %2008 = vmatprep.subr.mxu0 0.0
    %2009 = vmatpush1.msra.mxu0 0.0
    %2010 = vmatprep.subr.mxu0 0.0
    %2011 = vmatpush1.msra.mxu0 0.0
    %2012 = vmatprep.subr.mxu0 0.0
    %2013 = vmatpush1.msra.mxu0 0.0
    %2014 = vmatprep.subr.mxu0 0.0
    %2015 = vmatpush1.msra.mxu0 0.0
    %2016 = vmatprep.subr.mxu0 0.0
    %2017 = vmatpush1.msra.mxu0 0.0
    %2018 = vmatprep.subr.mxu0 0.0
    %2019 = vmatpush1.msra.mxu0 0.0
    %2020 = vmatprep.subr.mxu0 0.0
    %2021 = vmatpush1.msra.mxu0 0.0
    %2022 = vmatprep.subr.mxu0 0.0
    %2023 = vmatpush1.msra.mxu0 0.0
    %2024 = vmatprep.subr.mxu0 0.0
    %2025 = vmatpush1.msra.mxu0 0.0
    %2026 = vmatprep.subr.mxu0 0.0
    %2027 = vmatpush1.msra.mxu0 0.0
    %2028 = vmatprep.subr.mxu0 0.0
    %2029 = vmatpush1.msra.mxu0 0.0
    %2030 = vmatprep.subr.mxu0 0.0
    %2031 = vmatpush1.msra.mxu0 0.0
    %2032 = vmatprep.subr.mxu0 0.0
    %2033 = vmatpush1.msra.mxu0 0.0
    %2034 = vmatprep.subr.mxu0 0.0
    %2035 = vmatpush1.msra.mxu0 0.0
    %2036 = vmatprep.subr.mxu0 0.0
    %2037 = vmatpush1.msra.mxu0 0.0
    %2038 = vmatprep.subr.mxu0 0.0
    %2039 = vmatpush1.msra.mxu0 0.0
    %2040 = vmatprep.subr.mxu0 0.0
    %2041 = vmatpush1.msra.mxu0 0.0
    %2042 = vmatprep.subr.mxu0 0.0
    %2043 = vmatpush1.msra.mxu0 0.0
    %2044 = vmatprep.subr.mxu0 0.0
    %2045 = vmatpush1.msra.mxu0 0.0
    %2046 = vmatprep.mubr.f32.mxu0 0.0
    %2047 = vmatmul.mubr.f32.gmra.mrb[0].mxu0 %v1980
    %v2048 = vpop.f32.mrb[0].mxu0
    %v2049 = vadd.f32 0.0, %v2048
    %v2050 = vpop.f32.mrb[0].mxu0
    %2051 = vdwg.mxu0
    %2054 = vrot.lane.b32.xlu0 %v1973, 16
    %v2055 = vpop.permute.xlu0 %2054
    %2056 = vrot.lane.b32.xlu0 %v2049, 16
    %v2057 = vpop.permute.xlu0 %2056
    %v2060 = vsel %vm242, %v1639, %v2055
    %v2061 = vsel %vm242, %v1715, %v2057
    %s2062 = scalar_lea.vmem %s7, 32
    %v2063 = vld [vmem:[%s2062] sm:$0xff]
    %v2064 = vld [vmem:[%s2062 + $0x8] sm:$0xff]
    %v2065 = vld [vmem:[%s2062 + $0x10] sm:$0xff]
    %v2066 = vld [vmem:[%s2062 + $0x18] sm:$0xff]
    %v2067 = vld [vmem:[%s8 + $0x1] sm:$0x1]
    %v2068 = vlaneseq
    %v2069 = vshrl.u32 %v2068, 7
    %v2070 = vsub.s32 0, %v2069
    %v2071 = vrot.slane %v2067, %v2070
    %v2073 = vsel %vm109, %v2060, 0
    %v2076 = vsel %vm109, %v2061, 0
    %2078 = vmatprep.subr.mxu0 0.0
    %2079 = vmatpush1.msra.mxu0 %v2063
    %2080 = vmatprep.subr.mxu0 0.0
    %2081 = vmatpush1.msra.mxu0 %v2064
    %2082 = vmatprep.subr.mxu0 0.0
    %2083 = vmatpush1.msra.mxu0 %v2065
    %2084 = vmatprep.subr.mxu0 0.0
    %2085 = vmatpush1.msra.mxu0 %v2066
    %2086 = vmatprep.subr.mxu0 0.0
    %2087 = vmatpush1.msra.mxu0 0.0
    %2088 = vmatprep.subr.mxu0 0.0
    %2089 = vmatpush1.msra.mxu0 0.0
    %2090 = vmatprep.subr.mxu0 0.0
    %2091 = vmatpush1.msra.mxu0 0.0
    %2092 = vmatprep.subr.mxu0 0.0
    %2093 = vmatpush1.msra.mxu0 0.0
    %2094 = vmatprep.subr.mxu0 0.0
    %2095 = vmatpush1.msra.mxu0 0.0
    %2096 = vmatprep.subr.mxu0 0.0
    %2097 = vmatpush1.msra.mxu0 0.0
    %2098 = vmatprep.subr.mxu0 0.0
    %2099 = vmatpush1.msra.mxu0 0.0
    %2100 = vmatprep.subr.mxu0 0.0
    %2101 = vmatpush1.msra.mxu0 0.0
    %2102 = vmatprep.subr.mxu0 0.0
    %2103 = vmatpush1.msra.mxu0 0.0
    %2104 = vmatprep.subr.mxu0 0.0
    %2105 = vmatpush1.msra.mxu0 0.0
    %2106 = vmatprep.subr.mxu0 0.0
    %2107 = vmatpush1.msra.mxu0 0.0
    %2108 = vmatprep.subr.mxu0 0.0
    %2109 = vmatpush1.msra.mxu0 0.0
    %2110 = vmatprep.subr.mxu0 0.0
    %2111 = vmatpush1.msra.mxu0 0.0
    %2112 = vmatprep.subr.mxu0 0.0
    %2113 = vmatpush1.msra.mxu0 0.0
    %2114 = vmatprep.subr.mxu0 0.0
    %2115 = vmatpush1.msra.mxu0 0.0
    %2116 = vmatprep.subr.mxu0 0.0
    %2117 = vmatpush1.msra.mxu0 0.0
    %2118 = vmatprep.subr.mxu0 0.0
    %2119 = vmatpush1.msra.mxu0 0.0
    %2120 = vmatprep.subr.mxu0 0.0
    %2121 = vmatpush1.msra.mxu0 0.0
    %2122 = vmatprep.subr.mxu0 0.0
    %2123 = vmatpush1.msra.mxu0 0.0
    %2124 = vmatprep.subr.mxu0 0.0
    %2125 = vmatpush1.msra.mxu0 0.0
    %2126 = vmatprep.subr.mxu0 0.0
    %2127 = vmatpush1.msra.mxu0 0.0
    %2128 = vmatprep.subr.mxu0 0.0
    %2129 = vmatpush1.msra.mxu0 0.0
    %2130 = vmatprep.subr.mxu0 0.0
    %2131 = vmatpush1.msra.mxu0 0.0
    %2132 = vmatprep.subr.mxu0 0.0
    %2133 = vmatpush1.msra.mxu0 0.0
    %2134 = vmatprep.subr.mxu0 0.0
    %2135 = vmatpush1.msra.mxu0 0.0
    %2136 = vmatprep.subr.mxu0 0.0
    %2137 = vmatpush1.msra.mxu0 0.0
    %2138 = vmatprep.subr.mxu0 0.0
    %2139 = vmatpush1.msra.mxu0 0.0
    %2140 = vmatprep.subr.mxu0 0.0
    %2141 = vmatpush1.msra.mxu0 0.0
    %2142 = vmatprep.mubr.f32.mxu0 0.0
    %2143 = vmatmul.mubr.f32.gmra.mrb[0].mxu0 %v2073
    %v2144 = vpop.f32.mrb[0].mxu0
    %v2145 = vadd.f32 %v2071, %v2144
    %v2146 = vpop.f32.mrb[0].mxu0
    %2147 = vmatprep.mubr.f32.mxu0 0.0
    %2148 = vmatmul.mubr.f32.gmra.mrb[0].mxu0 %v2076
    %v2149 = vpop.f32.mrb[0].mxu0
    %v2150 = vadd.f32 %v2071, %v2149
    %v2151 = vpop.f32.mrb[0].mxu0
    %2152 = vdwg.mxu0
    %v2153 = vadd.f32 %v1253, %v2145
    %v2154 = vadd.f32 %v1254, %v2150
    %v2155 = vld [vmem:[%s9 + $0x1] sm:$0x1]
    %v2156 = vld [vmem:[%s10 + $0x1] sm:$0x1]
    %v2157 = vsel %vm109, %v2153, 0.0
    %2158 = vadd.xlane.f32.xlu0 %v2157
    %v2159 = vpop.xlane.xlu0 %2158
    %v2160 = vsel %vm109, %v2154, 0.0
    %2161 = vadd.xlane.f32.xlu0 %v2160
    %v2162 = vpop.xlane.xlu0 %2161
    %v2163 = vmul.f32 %v2159, %v116
    %v2164 = vmul.f32 %v2162, %v116
    %v2165 = vsub.f32 %v2153, %v2163
    %v2166 = vsub.f32 %v2154, %v2164
    %v2167 = vmul.f32 %v2165, %v2165
    %v2168 = vmul.f32 %v2166, %v2166
    %v2169 = vsel %vm109, %v2167, 0.0
    %2170 = vadd.xlane.f32.xlu0 %v2169
    %v2171 = vpop.xlane.xlu0 %2170
    %v2172 = vsel %vm109, %v2168, 0.0
    %2173 = vadd.xlane.f32.xlu0 %v2172
    %v2174 = vpop.xlane.xlu0 %2173
    %v2175 = vmul.f32 %v2171, %v116
    %v2176 = vmul.f32 %v2174, %v116
    %v2177 = vadd.f32 %v2175, 1e-05
    %v2178 = vadd.f32 %v2176, 1e-05
    %v2179 = vrsqrt.pop %v2177
    %v2180 = vrsqrt.pop %v2178
    %v2181 = vmul.f32 %v2165, %v2179
    %v2182 = vmul.f32 %v2166, %v2180
    %v2183 = vlaneseq
    %v2184 = vshrl.u32 %v2183, 7
    %v2185 = vsub.s32 0, %v2184
    %v2186 = vrot.slane %v2155, %v2185
    %v2187 = vmul.f32 %v2181, %v2186
    %v2188 = vmul.f32 %v2182, %v2186
    %v2189 = vlaneseq
    %v2190 = vshrl.u32 %v2189, 7
    %v2191 = vsub.s32 0, %v2190
    %v2192 = vrot.slane %v2156, %v2191
    %v2193 = vadd.f32 %v2187, %v2192
    %v2194 = vadd.f32 %v2188, %v2192
    %s2195 = scalar_lea.vmem %s11, 32
    %v2196 = vld [vmem:[%s2195] sm:$0xff]
    %v2197 = vld [vmem:[%s2195 + $0x8] sm:$0xff]
    %v2198 = vld [vmem:[%s2195 + $0x10] sm:$0xff]
    %v2199 = vld [vmem:[%s2195 + $0x18] sm:$0xff]
    %v2200 = vld [vmem:[%s12 + $0x1] sm:$0x1]
    %v2201 = vlaneseq
    %v2202 = vshrl.u32 %v2201, 7
    %v2203 = vsub.s32 0, %v2202
    %v2204 = vrot.slane %v2200, %v2203
    %v2206 = vsel %vm109, %v2193, 0
    %v2209 = vsel %vm109, %v2194, 0
    %2211 = vmatprep.subr.mxu0 0.0
    %2212 = vmatpush1.msra.mxu0 %v2196
    %2213 = vmatprep.subr.mxu0 0.0
    %2214 = vmatpush1.msra.mxu0 %v2197
    %2215 = vmatprep.subr.mxu0 0.0
    %2216 = vmatpush1.msra.mxu0 %v2198
    %2217 = vmatprep.subr.mxu0 0.0
    %2218 = vmatpush1.msra.mxu0 %v2199
    %2219 = vmatprep.subr.mxu0 0.0
    %2220 = vmatpush1.msra.mxu0 0.0
    %2221 = vmatprep.subr.mxu0 0.0
    %2222 = vmatpush1.msra.mxu0 0.0
    %2223 = vmatprep.subr.mxu0 0.0
    %2224 = vmatpush1.msra.mxu0 0.0
    %2225 = vmatprep.subr.mxu0 0.0
    %2226 = vmatpush1.msra.mxu0 0.0
    %2227 = vmatprep.subr.mxu0 0.0
    %2228 = vmatpush1.msra.mxu0 0.0
    %2229 = vmatprep.subr.mxu0 0.0
    %2230 = vmatpush1.msra.mxu0 0.0
    %2231 = vmatprep.subr.mxu0 0.0
    %2232 = vmatpush1.msra.mxu0 0.0
    %2233 = vmatprep.subr.mxu0 0.0
    %2234 = vmatpush1.msra.mxu0 0.0
    %2235 = vmatprep.subr.mxu0 0.0
    %2236 = vmatpush1.msra.mxu0 0.0
    %2237 = vmatprep.subr.mxu0 0.0
    %2238 = vmatpush1.msra.mxu0 0.0
    %2239 = vmatprep.subr.mxu0 0.0
    %2240 = vmatpush1.msra.mxu0 0.0
    %2241 = vmatprep.subr.mxu0 0.0
    %2242 = vmatpush1.msra.mxu0 0.0
    %2243 = vmatprep.subr.mxu0 0.0
    %2244 = vmatpush1.msra.mxu0 0.0
    %2245 = vmatprep.subr.mxu0 0.0
    %2246 = vmatpush1.msra.mxu0 0.0
    %2247 = vmatprep.subr.mxu0 0.0
    %2248 = vmatpush1.msra.mxu0 0.0
    %2249 = vmatprep.subr.mxu0 0.0
    %2250 = vmatpush1.msra.mxu0 0.0
    %2251 = vmatprep.subr.mxu0 0.0
    %2252 = vmatpush1.msra.mxu0 0.0
    %2253 = vmatprep.subr.mxu0 0.0
    %2254 = vmatpush1.msra.mxu0 0.0
    %2255 = vmatprep.subr.mxu0 0.0
    %2256 = vmatpush1.msra.mxu0 0.0
    %2257 = vmatprep.subr.mxu0 0.0
    %2258 = vmatpush1.msra.mxu0 0.0
    %2259 = vmatprep.subr.mxu0 0.0
    %2260 = vmatpush1.msra.mxu0 0.0
    %2261 = vmatprep.subr.mxu0 0.0
    %2262 = vmatpush1.msra.mxu0 0.0
    %2263 = vmatprep.subr.mxu0 0.0
    %2264 = vmatpush1.msra.mxu0 0.0
    %2265 = vmatprep.subr.mxu0 0.0
    %2266 = vmatpush1.msra.mxu0 0.0
    %2267 = vmatprep.subr.mxu0 0.0
    %2268 = vmatpush1.msra.mxu0 0.0
    %2269 = vmatprep.subr.mxu0 0.0
    %2270 = vmatpush1.msra.mxu0 0.0
    %2271 = vmatprep.subr.mxu0 0.0
    %2272 = vmatpush1.msra.mxu0 0.0
    %2273 = vmatprep.subr.mxu0 0.0
    %2274 = vmatpush1.msra.mxu0 0.0
    %2275 = vmatprep.mubr.f32.mxu0 0.0
    %2276 = vmatmul.mubr.f32.gmra.mrb[0].mxu0 %v2206
    %v2277 = vpop.f32.mrb[0].mxu0
    %v2278 = vadd.f32 %v2204, %v2277
    %v2279 = vpop.f32.mrb[0].mxu0
    %2280 = vmatprep.mubr.f32.mxu0 0.0
    %2281 = vmatmul.mubr.f32.gmra.mrb[0].mxu0 %v2209
    %v2282 = vpop.f32.mrb[0].mxu0
    %v2283 = vadd.f32 %v2204, %v2282
    %v2284 = vpop.f32.mrb[0].mxu0
    %2285 = vdwg.mxu0
    %v2286 = vmul.f32 %v2278, 0.5
    %v2287 = vmul.f32 %v2283, 0.5
    %v2288 = vmul.f32 %v2278, 0.044715
    %v2289 = vmul.f32 %v2283, 0.044715
    %v2290 = vmul.f32 %v2288, %v2278
    %v2291 = vmul.f32 %v2289, %v2283
    %v2292 = vmul.f32 %v2290, %v2278
    %v2293 = vmul.f32 %v2291, %v2283
    %v2294 = vadd.f32 %v2278, %v2292
    %v2295 = vadd.f32 %v2283, %v2293
    %v2296 = vmul.f32 %v2294, 0.7978846
    %v2297 = vmul.f32 %v2295, 0.7978846
    %v2298 = vtanh.pop %v2296
    %v2299 = vtanh.pop %v2297
    %v2300 = vadd.f32 %v2298, 1.0
    %v2301 = vadd.f32 %v2299, 1.0
    %v2302 = vmul.f32 %v2286, %v2300
    %v2303 = vmul.f32 %v2287, %v2301
    %s2304 = scalar_lea.vmem %s13, 128
    %v2305 = vld [vmem:[%s2304] sm:$0xff]
    %v2306 = vld [vmem:[%s2304 + $0x8] sm:$0xff]
    %v2307 = vld [vmem:[%s2304 + $0x10] sm:$0xff]
    %v2308 = vld [vmem:[%s2304 + $0x18] sm:$0xff]
    %v2309 = vld [vmem:[%s2304 + $0x20] sm:$0xff]
    %v2310 = vld [vmem:[%s2304 + $0x28] sm:$0xff]
    %v2311 = vld [vmem:[%s2304 + $0x30] sm:$0xff]
    %v2312 = vld [vmem:[%s2304 + $0x38] sm:$0xff]
    %v2313 = vld [vmem:[%s2304 + $0x40] sm:$0xff]
    %v2314 = vld [vmem:[%s2304 + $0x48] sm:$0xff]
    %v2315 = vld [vmem:[%s2304 + $0x50] sm:$0xff]
    %v2316 = vld [vmem:[%s2304 + $0x58] sm:$0xff]
    %v2317 = vld [vmem:[%s2304 + $0x60] sm:$0xff]
    %v2318 = vld [vmem:[%s2304 + $0x68] sm:$0xff]
    %v2319 = vld [vmem:[%s2304 + $0x70] sm:$0xff]
    %v2320 = vld [vmem:[%s2304 + $0x78] sm:$0xff]
    %v2321 = vld [vmem:[%s14 + $0x1] sm:$0x1]
    %v2322 = vlaneseq
    %v2323 = vshrl.u32 %v2322, 7
    %v2324 = vsub.s32 0, %v2323
    %v2325 = vrot.slane %v2321, %v2324
    %2326 = vmatprep.subr.mxu0 0.0
    %2327 = vmatpush1.msra.mxu0 %v2305
    %2328 = vmatprep.subr.mxu0 0.0
    %2329 = vmatpush1.msra.mxu0 %v2306
    %2330 = vmatprep.subr.mxu0 0.0
    %2331 = vmatpush1.msra.mxu0 %v2307
    %2332 = vmatprep.subr.mxu0 0.0
    %2333 = vmatpush1.msra.mxu0 %v2308
    %2334 = vmatprep.subr.mxu0 0.0
    %2335 = vmatpush1.msra.mxu0 %v2309
    %2336 = vmatprep.subr.mxu0 0.0
    %2337 = vmatpush1.msra.mxu0 %v2310
    %2338 = vmatprep.subr.mxu0 0.0
    %2339 = vmatpush1.msra.mxu0 %v2311
    %2340 = vmatprep.subr.mxu0 0.0
    %2341 = vmatpush1.msra.mxu0 %v2312
    %2342 = vmatprep.subr.mxu0 0.0
    %2343 = vmatpush1.msra.mxu0 %v2313
    %2344 = vmatprep.subr.mxu0 0.0
    %2345 = vmatpush1.msra.mxu0 %v2314
    %2346 = vmatprep.subr.mxu0 0.0
    %2347 = vmatpush1.msra.mxu0 %v2315
    %2348 = vmatprep.subr.mxu0 0.0
    %2349 = vmatpush1.msra.mxu0 %v2316
    %2350 = vmatprep.subr.mxu0 0.0
    %2351 = vmatpush1.msra.mxu0 %v2317
    %2352 = vmatprep.subr.mxu0 0.0
    %2353 = vmatpush1.msra.mxu0 %v2318
    %2354 = vmatprep.subr.mxu0 0.0
    %2355 = vmatpush1.msra.mxu0 %v2319
    %2356 = vmatprep.subr.mxu0 0.0
    %2357 = vmatpush1.msra.mxu0 %v2320
    %2358 = vmatprep.subr.mxu0 0.0
    %2359 = vmatpush1.msra.mxu0 0.0
    %2360 = vmatprep.subr.mxu0 0.0
    %2361 = vmatpush1.msra.mxu0 0.0
    %2362 = vmatprep.subr.mxu0 0.0
    %2363 = vmatpush1.msra.mxu0 0.0
    %2364 = vmatprep.subr.mxu0 0.0
    %2365 = vmatpush1.msra.mxu0 0.0
    %2366 = vmatprep.subr.mxu0 0.0
    %2367 = vmatpush1.msra.mxu0 0.0
    %2368 = vmatprep.subr.mxu0 0.0
    %2369 = vmatpush1.msra.mxu0 0.0
    %2370 = vmatprep.subr.mxu0 0.0
    %2371 = vmatpush1.msra.mxu0 0.0
    %2372 = vmatprep.subr.mxu0 0.0
    %2373 = vmatpush1.msra.mxu0 0.0
    %2374 = vmatprep.subr.mxu0 0.0
    %2375 = vmatpush1.msra.mxu0 0.0
    %2376 = vmatprep.subr.mxu0 0.0
    %2377 = vmatpush1.msra.mxu0 0.0
    %2378 = vmatprep.subr.mxu0 0.0
    %2379 = vmatpush1.msra.mxu0 0.0
    %2380 = vmatprep.subr.mxu0 0.0
    %2381 = vmatpush1.msra.mxu0 0.0
    %2382 = vmatprep.subr.mxu0 0.0
    %2383 = vmatpush1.msra.mxu0 0.0
    %2384 = vmatprep.subr.mxu0 0.0
    %2385 = vmatpush1.msra.mxu0 0.0
    %2386 = vmatprep.subr.mxu0 0.0
    %2387 = vmatpush1.msra.mxu0 0.0
    %2388 = vmatprep.subr.mxu0 0.0
    %2389 = vmatpush1.msra.mxu0 0.0
    %2390 = vmatprep.mubr.f32.mxu0 0.0
    %2391 = vmatmul.mubr.f32.gmra.mrb[0].mxu0 %v2302
    %v2392 = vpop.f32.mrb[0].mxu0
    %v2393 = vadd.f32 %v2325, %v2392
    %v2394 = vpop.f32.mrb[0].mxu0
    %2395 = vmatprep.mubr.f32.mxu0 0.0
    %2396 = vmatmul.mubr.f32.gmra.mrb[0].mxu0 %v2303
    %v2397 = vpop.f32.mrb[0].mxu0
    %v2398 = vadd.f32 %v2325, %v2397
    %v2399 = vpop.f32.mrb[0].mxu0
    %2400 = vdwg.mxu0
    %v2401 = vadd.f32 %v2153, %v2393
    %v2402 = vadd.f32 %v2154, %v2398
    %v2403 = vld [vmem:[%s15] sm:$0x1]
    %v2404 = vld [vmem:[%s16] sm:$0x1]
    %v2405 = vsel %vm109, %v2401, 0.0
    %2406 = vadd.xlane.f32.xlu0 %v2405
    %v2407 = vpop.xlane.xlu0 %2406
    %v2408 = vsel %vm109, %v2402, 0.0
    %2409 = vadd.xlane.f32.xlu0 %v2408
    %v2410 = vpop.xlane.xlu0 %2409
    %v2411 = vmul.f32 %v2407, %v116
    %v2412 = vmul.f32 %v2410, %v116
    %v2413 = vsub.f32 %v2401, %v2411
    %v2414 = vsub.f32 %v2402, %v2412
    %v2415 = vmul.f32 %v2413, %v2413
    %v2416 = vmul.f32 %v2414, %v2414
    %v2417 = vsel %vm109, %v2415, 0.0
    %2418 = vadd.xlane.f32.xlu0 %v2417
    %v2419 = vpop.xlane.xlu0 %2418
    %v2420 = vsel %vm109, %v2416, 0.0
    %2421 = vadd.xlane.f32.xlu0 %v2420
    %v2422 = vpop.xlane.xlu0 %2421
    %v2423 = vmul.f32 %v2419, %v116
    %v2424 = vmul.f32 %v2422, %v116
    %v2425 = vadd.f32 %v2423, 1e-05
    %v2426 = vadd.f32 %v2424, 1e-05
    %v2427 = vrsqrt.pop %v2425
    %v2428 = vrsqrt.pop %v2426
    %v2429 = vmul.f32 %v2413, %v2427
    %v2430 = vmul.f32 %v2414, %v2428
    %v2432 = vlaneseq
    %v2433 = vshrl.u32 %v2432, 7
    %v2434 = vsub.s32 0, %v2433
    %v2435 = vrot.slane %v2403, %v2434
    %v2437 = vmul.f32 %v2429, %v2435
    %v2438 = vmul.f32 %v2430, %v2435
    %v2440 = vlaneseq
    %v2441 = vshrl.u32 %v2440, 7
    %v2442 = vsub.s32 0, %v2441
    %v2443 = vrot.slane %v2404, %v2442
    %v2445 = vadd.f32 %v2437, %v2443
    %v2446 = vadd.f32 %v2438, %v2443
    %v2447 = vld [vmem:[%s2] sm:$0xff]
    %v2448 = vld [vmem:[%s2 + $0x8] sm:$0xff]
    %v2449 = vld [vmem:[%s2 + $0x10] sm:$0xff]
    %v2450 = vld [vmem:[%s2 + $0x18] sm:$0xff]
    %v2451 = vld [vmem:[%s2 + $0x20] sm:$0xff]
    %v2452 = vld [vmem:[%s2 + $0x28] sm:$0xff]
    %v2453 = vld [vmem:[%s2 + $0x30] sm:$0xff]
    %v2454 = vld [vmem:[%s2 + $0x38] sm:$0xff]
    %v2455 = vld [vmem:[%s2 + $0x40] sm:$0xff]
    %v2456 = vld [vmem:[%s2 + $0x48] sm:$0xff]
    %v2457 = vld [vmem:[%s2 + $0x50] sm:$0xff]
    %v2458 = vld [vmem:[%s2 + $0x58] sm:$0xff]
    %v2459 = vld [vmem:[%s2 + $0x60] sm:$0xff]
    %v2460 = vld [vmem:[%s2 + $0x68] sm:$0xff]
    %v2461 = vld [vmem:[%s2 + $0x70] sm:$0xff]
    %v2462 = vld [vmem:[%s2 + $0x78] sm:$0xff]
    %v2464 = vsel %vm109, %v2445, 0
    %v2467 = vsel %vm109, %v2446, 0
    %v2470 = vsel %vm109, %v2447, 0
    %v2473 = vsel %vm109, %v2448, 0
    %v2476 = vsel %vm109, %v2449, 0
    %v2479 = vsel %vm109, %v2450, 0
    %v2482 = vsel %vm109, %v2451, 0
    %v2485 = vsel %vm109, %v2452, 0
    %v2488 = vsel %vm109, %v2453, 0
    %v2491 = vsel %vm109, %v2454, 0
    %v2494 = vsel %vm109, %v2455, 0
    %v2497 = vsel %vm109, %v2456, 0
    %v2500 = vsel %vm109, %v2457, 0
    %v2503 = vsel %vm109, %v2458, 0
    %v2506 = vsel %vm109, %v2459, 0
    %v2509 = vsel %vm109, %v2460, 0
    %v2512 = vsel %vm109, %v2461, 0
    %v2515 = vsel %vm109, %v2462, 0
    %2517 = vmatprep.subr.mxu0 0.0
    %2518 = vmatpush1.xpose.msra.mxu0 %v2470
    %2519 = vmatprep.subr.mxu0 0.0
    %2520 = vmatpush1.xpose.msra.mxu0 %v2473
    %2521 = vmatprep.subr.mxu0 0.0
    %2522 = vmatpush1.xpose.msra.mxu0 %v2476
    %2523 = vmatprep.subr.mxu0 0.0
    %2524 = vmatpush1.xpose.msra.mxu0 %v2479
    %2525 = vmatprep.subr.mxu0 0.0
    %2526 = vmatpush1.xpose.msra.mxu0 %v2482
    %2527 = vmatprep.subr.mxu0 0.0
    %2528 = vmatpush1.xpose.msra.mxu0 %v2485
    %2529 = vmatprep.subr.mxu0 0.0
    %2530 = vmatpush1.xpose.msra.mxu0 %v2488
    %2531 = vmatprep.subr.mxu0 0.0
    %2532 = vmatpush1.xpose.msra.mxu0 %v2491
    %2533 = vmatprep.subr.mxu0 0.0
    %2534 = vmatpush1.xpose.msra.mxu0 %v2494
    %2535 = vmatprep.subr.mxu0 0.0
    %2536 = vmatpush1.xpose.msra.mxu0 %v2497
    %2537 = vmatprep.subr.mxu0 0.0
    %2538 = vmatpush1.xpose.msra.mxu0 %v2500
    %2539 = vmatprep.subr.mxu0 0.0
    %2540 = vmatpush1.xpose.msra.mxu0 %v2503
    %2541 = vmatprep.subr.mxu0 0.0
    %2542 = vmatpush1.xpose.msra.mxu0 %v2506
    %2543 = vmatprep.subr.mxu0 0.0
    %2544 = vmatpush1.xpose.msra.mxu0 %v2509
    %2545 = vmatprep.subr.mxu0 0.0
    %2546 = vmatpush1.xpose.msra.mxu0 %v2512
    %2547 = vmatprep.subr.mxu0 0.0
    %2548 = vmatpush1.xpose.msra.mxu0 %v2515
    %2549 = vmatprep.subr.mxu0 0.0
    %2550 = vmatpush1.xpose.msra.mxu0 0.0
    %2551 = vmatprep.subr.mxu0 0.0
    %2552 = vmatpush1.xpose.msra.mxu0 0.0
    %2553 = vmatprep.subr.mxu0 0.0
    %2554 = vmatpush1.xpose.msra.mxu0 0.0
    %2555 = vmatprep.subr.mxu0 0.0
    %2556 = vmatpush1.xpose.msra.mxu0 0.0
    %2557 = vmatprep.subr.mxu0 0.0
    %2558 = vmatpush1.xpose.msra.mxu0 0.0
    %2559 = vmatprep.subr.mxu0 0.0
    %2560 = vmatpush1.xpose.msra.mxu0 0.0
    %2561 = vmatprep.subr.mxu0 0.0
    %2562 = vmatpush1.xpose.msra.mxu0 0.0
    %2563 = vmatprep.subr.mxu0 0.0
    %2564 = vmatpush1.xpose.msra.mxu0 0.0
    %2565 = vmatprep.subr.mxu0 0.0
    %2566 = vmatpush1.xpose.msra.mxu0 0.0
    %2567 = vmatprep.subr.mxu0 0.0
    %2568 = vmatpush1.xpose.msra.mxu0 0.0
    %2569 = vmatprep.subr.mxu0 0.0
    %2570 = vmatpush1.xpose.msra.mxu0 0.0
    %2571 = vmatprep.subr.mxu0 0.0
    %2572 = vmatpush1.xpose.msra.mxu0 0.0
    %2573 = vmatprep.subr.mxu0 0.0
    %2574 = vmatpush1.xpose.msra.mxu0 0.0
    %2575 = vmatprep.subr.mxu0 0.0
    %2576 = vmatpush1.xpose.msra.mxu0 0.0
    %2577 = vmatprep.subr.mxu0 0.0
    %2578 = vmatpush1.xpose.msra.mxu0 0.0
    %2579 = vmatprep.subr.mxu0 0.0
    %2580 = vmatpush1.xpose.msra.mxu0 0.0
    %2581 = vmatprep.mubr.f32.mxu0 0.0
    %2582 = vmatmul.mubr.f32.gmra.mrb[0].mxu0 %v2464
    %v2583 = vpop.f32.mrb[0].mxu0
    %v2584 = vadd.f32 0.0, %v2583
    %v2585 = vpop.f32.mrb[0].mxu0
    %2586 = vmatprep.mubr.f32.mxu0 0.0
    %2587 = vmatmul.mubr.f32.gmra.mrb[0].mxu0 %v2467
    %v2588 = vpop.f32.mrb[0].mxu0
    %v2589 = vadd.f32 0.0, %v2588
    %v2590 = vpop.f32.mrb[0].mxu0
    %2591 = vdwg.mxu0
    %2592 = vst [vmem:[#allocation2] sm:$0xff] %v2584
    %2593 = vst [vmem:[#allocation2 + $0x8] sm:$0xff] %v2589
    // Predicated region
    $region70: #{gpt2_forward.1} parent=1 // pred_check
      _
    $region71: #{gpt2_forward.1} parent=1 // pred_check_branch
      %2595 = sbr.rel (0) target = $region73
    $region72: #{gpt2_forward.1} parent=1 // pred_region
      %s2597 = ssub.s32 256, 256
      %2598 = vsyncadd [#allocation3], %s2597
      %s2599 = sshll.u32 [#allocation2], 4
      %s2600 = int_to_ptr.vmem [resolvable:$true] %s2599
      %2605 = dma.vmem_to_hbm [thread:$0]  %s2600, 256, %s17, [#allocation3], 128, 128, 8
    $region73: #{gpt2_forward.1} parent=1 // pred_fallthru
      _
    // Predicated region
    $region74: #{gpt2_forward.1} parent=1 // pred_check
      _
    $region75: #{gpt2_forward.1} parent=1 // pred_check_branch
      %2607 = sbr.rel (0) target = $region77
    $region76: #{gpt2_forward.1} parent=1 // pred_region
      %2608 = dma.done [#allocation3], 256
    $region77: #{gpt2_forward.1} parent=1 // pred_fallthru
      _
    %2609 = vsyncpa [#allocation3], 1

</llo_original>
